<compile_context>
chip_gen: v7x
topology: tpu7x:2x2x1
jax: 0.10.0
libtpu: 0.0.40
codegen_flags: <defaults>
</compile_context>

<pallas_src>
import numpy as np
import jax
import jax.numpy as jnp
from jax.experimental import pallas as pl
from jax.experimental.pallas import tpu as pltpu

BN_EPS = 1e-5


# ---------------------------------------------------------------------------
# Fused forward kernel
# ---------------------------------------------------------------------------
def fused_forward_kernel(
        patches_ref,                    # (M, 9)   conv1 im2col patches (built in wrapper)
        w1_ref, s1_ref, b1_ref,         # (9, C1), (1, C1), (1, C1)
        w2_ref, s2_ref, b2_ref,         # (9*C1, C2), (1, C2), (1, C2)
        w3_ref, s3_ref, b3_ref,         # (C2, C3P), (1, C3P), (1, C3P)
        fcw_ref, fcb_ref,               # (F, O), (1, O)   F = HW*C3P, O = HW
        rep_ref, sel_ref,               # (C3P, F), (B, M) tiny constant 0/1 helpers
        out_ref,                        # (B, 2*O): [:, :O] logits, [:, O:] logprobs
        xp2_ref):                       # VMEM scratch (B, H+2, W+2, C1)
    M = patches_ref.shape[0]
    C1 = w1_ref.shape[1]
    C2 = w2_ref.shape[1]
    C3P = w3_ref.shape[1]
    F = rep_ref.shape[1]
    O = fcw_ref.shape[1]
    B = xp2_ref.shape[0]
    H = xp2_ref.shape[1] - 2
    W = xp2_ref.shape[2] - 2
    HW = H * W

    # ---- conv1 (3x3, Cin=1) + BN + ReLU: one K=9 MXU dot ---------------------
    h1 = jnp.dot(patches_ref[...], w1_ref[...],
                 preferred_element_type=jnp.float32)
    h1 = jnp.maximum(h1 * s1_ref[...] + b1_ref[...], 0.0)            # (M, C1)

    # ---- conv2 (3x3) + BN + ReLU: 9 accumulated K=C1 dots --------------------
    xp2_ref[...] = jnp.zeros(xp2_ref.shape, jnp.float32)             # zero halo
    xp2_ref[:, 1:H + 1, 1:W + 1, :] = h1.reshape(B, H, W, C1)
    h2 = jnp.zeros((M, C2), jnp.float32)
    for dy in range(3):
        for dx in range(3):
            t = dy * 3 + dx
            tap = xp2_ref[:, dy:dy + H, dx:dx + W, :].reshape(M, C1)
            h2 = h2 + jnp.dot(tap, w2_ref[t * C1:(t + 1) * C1, :],
                              preferred_element_type=jnp.float32)
    h2 = jnp.maximum(h2 * s2_ref[...] + b2_ref[...], 0.0)            # (M, C2)

    # ---- conv3 (1x1) + BN + ReLU (channels padded to C3P; pads stay exactly 0)
    h3 = jnp.dot(h2, w3_ref[...], preferred_element_type=jnp.float32)
    h3 = jnp.maximum(h3 * s3_ref[...] + b3_ref[...], 0.0)            # (M, C3P)

    # ---- flatten (B*HW, C3P) -> (B, F) fused with the FC, in 128-lane chunks -
    #   flat[b, hw*C3P + c] = h3[b*HW + hw, c]
    #   a1   = h3 @ rep       (replicate channels across the F axis, MXU)
    #   abd  = a1 masked to the block diagonal (iota compare, VPU; no HBM mask)
    #   flat = sel @ abd      (per-batch sum over the HW rows, MXU)
    #   logits += flat_chunk @ fcw_chunk
    sel = sel_ref[...]
    CH = 128 if F % 128 == 0 else F
    logits = jnp.zeros((B, O), jnp.float32)
    for f0 in range(0, F, CH):
        a1c = jnp.dot(h3, rep_ref[:, f0:f0 + CH],
                      preferred_element_type=jnp.float32)            # (M, CH)
        f_idx = jax.lax.broadcasted_iota(jnp.int32, (M, CH), 1) + f0
        lo = jax.lax.broadcasted_iota(
            jnp.int32, (B, HW, CH), 1).reshape(M, CH) * C3P          # (m % HW)*C3P
        keep = (f_idx >= lo) & (f_idx < lo + C3P)
        abdc = jnp.where(keep, a1c, 0.0)
        flatc = jnp.dot(sel, abdc, preferred_element_type=jnp.float32)   # (B, CH)
        logits = logits + jnp.dot(flatc, fcw_ref[f0:f0 + CH, :],
                                  preferred_element_type=jnp.float32)
    logits = logits + fcb_ref[...]

    # ---- log_softmax + single lane-dense store -------------------------------
    mx = jnp.max(logits, axis=-1, keepdims=True)
    lse = mx + jnp.log(jnp.sum(jnp.exp(logits - mx), axis=-1, keepdims=True))
    out_ref[...] = jnp.concatenate([logits, logits - lse], axis=-1)


# ---------------------------------------------------------------------------
# Forward wrapper (single pallas_call, no grid)
# ---------------------------------------------------------------------------
@jax.jit
def forward(x_nchw, kp):
    """Fused Pallas forward. x_nchw: (B, 1, dim, dim) float32 (PyTorch layout).
    Returns (logits, logprobs), each (B, dim*dim)."""
    B = x_nchw.shape[0]
    H = W = x_nchw.shape[-1]
    HW = H * W
    M = B * HW
    C1 = kp['w1'].shape[1]
    O = HW

    # conv1 im2col in the wrapper: x is tiny, and this lets the kernel do conv1
    # as a single MXU dot instead of 1-lane-wide VPU taps.
    xp = jnp.pad(x_nchw.reshape(B, H, W), ((0, 0), (1, 1), (1, 1)))
    patches = jnp.stack(
        [xp[:, dy:dy + H, dx:dx + W] for dy in range(3) for dx in range(3)],
        axis=-1).reshape(M, 9)

    out = pl.pallas_call(
        fused_forward_kernel,
        out_shape=jax.ShapeDtypeStruct((B, 2 * O), jnp.float32),
        scratch_shapes=[pltpu.VMEM((B, H + 2, W + 2, C1), jnp.float32)],
    )(patches,
      kp['w1'], kp['s1'], kp['b1'],
      kp['w2'], kp['s2'], kp['b2'],
      kp['w3'], kp['s3'], kp['b3'],
      kp['fcw'], kp['fcb'], kp['rep'], kp['sel'])
    return out[:, :O], out[:, O:]


# ---------------------------------------------------------------------------
# One-time parameter preparation (hoisted out of the steady-state path)
# ---------------------------------------------------------------------------
def prepare_params(p, dim, num_ships, batch):
    """Fold BN, convert conv weights to im2col layouts, pad the conv3/FC channel
    dim to a multiple of 8, permute FC columns to (H, W, C) order, and build the
    tiny constant helpers for the in-kernel flatten."""
    c3 = num_ships + 1
    C3P = ((c3 + 7) // 8) * 8          # lane-aligned channel count
    pad3 = C3P - c3
    HW = dim * dim
    F = HW * C3P
    M = batch * HW

    def fold(conv_b, bn):
        gamma, beta, mean, var = bn
        s = gamma / jnp.sqrt(var + BN_EPS)
        return s, (conv_b - mean) * s + beta

    s1, b1 = fold(p['conv1_b'], p['bn1'])
    s2, b2 = fold(p['conv2_b'], p['bn2'])
    s3, b3 = fold(p['conv3_b'], p['bn3'])
    # Padded conv3 channels get scale=0 / bias=0 -> their ReLU output is exactly 0.
    s3 = jnp.pad(s3, (0, pad3))
    b3 = jnp.pad(b3, (0, pad3))

    cin2 = p['conv2_w'].shape[1]
    # OIHW -> HWIO -> im2col rows ordered (dy, dx, cin)
    w1 = jnp.transpose(p['conv1_w'], (2, 3, 1, 0)).reshape(9, -1)          # (9, 32)
    w2 = jnp.transpose(p['conv2_w'], (2, 3, 1, 0)).reshape(9 * cin2, -1)   # (288, 64)
    w3 = jnp.transpose(p['conv3_w'][:, :, 0, 0], (1, 0))                   # (64, c3)
    w3 = jnp.pad(w3, ((0, 0), (0, pad3)))                                  # (64, C3P)

    # FC columns: PyTorch flattens NCHW (c, h, w); the kernel produces (h, w, c_pad).
    fcw = p['fc_w'].reshape(HW, c3, dim, dim)
    fcw = jnp.transpose(fcw, (0, 2, 3, 1))                                 # (O, H, W, c3)
    fcw = jnp.pad(fcw, ((0, 0), (0, 0), (0, 0), (0, pad3)))                # zero rows for pads
    fcw = jnp.transpose(fcw.reshape(HW, F), (1, 0))                        # (F, O)
    fcb = p['fc_b'].reshape(1, HW)

    # Tiny constant helpers for the in-kernel flatten (16 KB + 1 KB).
    j = np.arange(F)
    rep = (j[None, :] % C3P == np.arange(C3P)[:, None]).astype(np.float32)        # (C3P, F)
    m_idx = np.arange(M)
    sel = ((m_idx[None, :] // HW) == np.arange(batch)[:, None]).astype(np.float32)  # (B, M)

    return {
        'w1': w1, 's1': s1.reshape(1, -1), 'b1': b1.reshape(1, -1),
        'w2': w2, 's2': s2.reshape(1, -1), 'b2': b2.reshape(1, -1),
        'w3': w3, 's3': s3.reshape(1, -1), 'b3': b3.reshape(1, -1),
        'fcw': fcw, 'fcb': fcb,
        'rep': jnp.asarray(rep), 'sel': jnp.asarray(sel),
    }


# ---------------------------------------------------------------------------
# Synthetic parameters (deterministic) and pure-JAX reference
# ---------------------------------------------------------------------------
def init_params(key, dim, num_ships):
    c3 = num_ships + 1
    ks = iter(jax.random.split(key, 32))

    def rnd(shape, scale=0.1):
        return scale * jax.random.normal(next(ks), shape, dtype=jnp.float32)

    def make_bn(c):
        gamma = 1.0 + rnd((c,))
        beta = rnd((c,))
        mean = rnd((c,))
        var = 1.0 + 0.1 * jnp.abs(jax.random.normal(next(ks), (c,),
                                                    dtype=jnp.float32))
        return (gamma, beta, mean, var)

    p = {}
    p['conv1_w'] = rnd((32, 1, 3, 3))          # OIHW (PyTorch layout)
    p['conv1_b'] = rnd((32,))
    p['bn1'] = make_bn(32)
    p['conv2_w'] = rnd((64, 32, 3, 3))
    p['conv2_b'] = rnd((64,))
    p['bn2'] = make_bn(64)
    p['conv3_w'] = rnd((c3, 64, 1, 1))
    p['conv3_b'] = rnd((c3,))
    p['bn3'] = make_bn(c3)
    p['fc_w'] = rnd((dim * dim, dim * dim * c3))   # (out, in), NCHW flatten
    p['fc_b'] = rnd((dim * dim,))
    return p


def reference_forward(x, p):
    """Pure-JAX mirror of the PyTorch module (eval-mode BN) for checking."""
    def bn(y, params):
        g, be, m, v = params
        s = (g / jnp.sqrt(v + BN_EPS))[None, :, None, None]
        return (y - m[None, :, None, None]) * s + be[None, :, None, None]

    def conv(x, w, b, pad):
        y = jax.lax.conv_general_dilated(
            x, w, (1, 1), ((pad, pad), (pad, pad)),
            dimension_numbers=('NCHW', 'OIHW', 'NCHW'))
        return y + b[None, :, None, None]

    y = jnp.maximum(bn(conv(x, p['conv1_w'], p['conv1_b'], 1), p['bn1']), 0.0)
    y = jnp.maximum(bn(conv(y, p['conv2_w'], p['conv2_b'], 1), p['bn2']), 0.0)
    y = jnp.maximum(bn(conv(y, p['conv3_w'], p['conv3_b'], 0), p['bn3']), 0.0)
    flat = y.reshape(y.shape[0], -1)
    logits = flat @ p['fc_w'].T + p['fc_b']
    return logits, jax.nn.log_softmax(logits, axis=-1)


if __name__ == "__main__":
    dim, num_ships, batch = 8, 4, 2
    key = jax.random.PRNGKey(0)
    pkey, xkey = jax.random.split(key)
    params = init_params(pkey, dim, num_ships)
    x = jax.random.normal(xkey, (batch, 1, dim, dim), dtype=jnp.float32)

    kparams = prepare_params(params, dim, num_ships, batch)   # one-time prep
    logits, logprobs = jax.block_until_ready(forward(x, kparams))

    ref_logits, ref_logprobs = reference_forward(x, params)
    np.testing.assert_allclose(np.asarray(logits), np.asarray(ref_logits),
                               rtol=1e-4, atol=1e-4)
    np.testing.assert_allclose(np.asarray(logprobs), np.asarray(ref_logprobs),
                               rtol=1e-4, atol=1e-4)
    print("KERNEL_OK")
</pallas_src>

<mosaic_0001>
module attributes {stable_mosaic.version = 11 : i64} {
  func.func @fused_forward_kernel(%arg0: memref<128x9xf32, #tpu.memory_space<vmem>>, %arg1: memref<9x32xf32, #tpu.memory_space<vmem>>, %arg2: memref<1x32xf32, #tpu.memory_space<vmem>>, %arg3: memref<1x32xf32, #tpu.memory_space<vmem>>, %arg4: memref<288x64xf32, #tpu.memory_space<vmem>>, %arg5: memref<1x64xf32, #tpu.memory_space<vmem>>, %arg6: memref<1x64xf32, #tpu.memory_space<vmem>>, %arg7: memref<64x8xf32, #tpu.memory_space<vmem>>, %arg8: memref<1x8xf32, #tpu.memory_space<vmem>>, %arg9: memref<1x8xf32, #tpu.memory_space<vmem>>, %arg10: memref<512x64xf32, #tpu.memory_space<vmem>>, %arg11: memref<1x64xf32, #tpu.memory_space<vmem>>, %arg12: memref<8x512xf32, #tpu.memory_space<vmem>>, %arg13: memref<2x128xf32, #tpu.memory_space<vmem>>, %arg14: memref<2x128xf32, #tpu.memory_space<vmem>>, %arg15: memref<2x10x10x32xf32, #tpu.memory_space<vmem>>) attributes {dimension_semantics = [], scalar_prefetch = 0 : i64, scratch_operands = 1 : i64, tpu.core_type = #tpu.core_type<tc>} {
    %c0 = arith.constant 0 : index
    %c0_0 = arith.constant 0 : index
    %0 = vector.load %arg0[%c0, %c0_0] : memref<128x9xf32, #tpu.memory_space<vmem>>, vector<128x9xf32>
    %c0_1 = arith.constant 0 : index
    %c0_2 = arith.constant 0 : index
    %1 = vector.load %arg1[%c0_1, %c0_2] : memref<9x32xf32, #tpu.memory_space<vmem>>, vector<9x32xf32>
    %cst = arith.constant dense<0.000000e+00> : vector<128x32xf32>
    %2 = tpu.matmul %0, %1, %cst {dimension_numbers = #tpu.dot_dimension_numbers<[1], [0], [0], [1], [0, 0, 1, 1], [], []>} : vector<128x9xf32>, vector<9x32xf32>, vector<128x32xf32> -> vector<128x32xf32>
    %c0_3 = arith.constant 0 : index
    %c0_4 = arith.constant 0 : index
    %3 = vector.load %arg2[%c0_3, %c0_4] : memref<1x32xf32, #tpu.memory_space<vmem>>, vector<1x32xf32>
    %4 = vector.broadcast %3 : vector<1x32xf32> to vector<128x32xf32>
    %5 = arith.mulf %2, %4 : vector<128x32xf32>
    %c0_5 = arith.constant 0 : index
    %c0_6 = arith.constant 0 : index
    %6 = vector.load %arg3[%c0_5, %c0_6] : memref<1x32xf32, #tpu.memory_space<vmem>>, vector<1x32xf32>
    %7 = vector.broadcast %6 : vector<1x32xf32> to vector<128x32xf32>
    %8 = arith.addf %5, %7 : vector<128x32xf32>
    %cst_7 = arith.constant 0.000000e+00 : f32
    %9 = vector.broadcast %cst_7 : f32 to vector<128x32xf32>
    %10 = arith.maximumf %8, %9 : vector<128x32xf32>
    %cst_8 = arith.constant 0.000000e+00 : f32
    %11 = vector.broadcast %cst_8 : f32 to vector<2x10x10x32xf32>
    %c0_9 = arith.constant 0 : index
    %c0_10 = arith.constant 0 : index
    %c0_11 = arith.constant 0 : index
    %c0_12 = arith.constant 0 : index
    %12 = vector.load %arg15[%c0_9, %c0_10, %c0_11, %c0_12] : memref<2x10x10x32xf32, #tpu.memory_space<vmem>>, vector<2x10x10x32xf32>
    tpu.vector_store %arg15[%c0_9, %c0_10, %c0_11, %c0_12], %11 {strides = array<i32>} : memref<2x10x10x32xf32, #tpu.memory_space<vmem>>, vector<2x10x10x32xf32>,
    %13 = vector.shape_cast %10 : vector<128x32xf32> to vector<2x8x8x32xf32>
    %c0_13 = arith.constant 0 : index
    %c1 = arith.constant 1 : index
    %c1_14 = arith.constant 1 : index
    %c0_15 = arith.constant 0 : index
    %14 = vector.load %arg15[%c0_13, %c1, %c1_14, %c0_15] : memref<2x10x10x32xf32, #tpu.memory_space<vmem>>, vector<2x8x8x32xf32>
    tpu.vector_store %arg15[%c0_13, %c1, %c1_14, %c0_15], %13 {strides = array<i32>} : memref<2x10x10x32xf32, #tpu.memory_space<vmem>>, vector<2x8x8x32xf32>,
    %cst_16 = arith.constant 0.000000e+00 : f32
    %15 = vector.broadcast %cst_16 : f32 to vector<128x64xf32>
    %c0_17 = arith.constant 0 : index
    %c0_18 = arith.constant 0 : index
    %c0_19 = arith.constant 0 : index
    %c0_20 = arith.constant 0 : index
    %16 = vector.load %arg15[%c0_17, %c0_18, %c0_19, %c0_20] : memref<2x10x10x32xf32, #tpu.memory_space<vmem>>, vector<2x8x8x32xf32>
    %17 = vector.shape_cast %16 : vector<2x8x8x32xf32> to vector<128x32xf32>
    %c0_21 = arith.constant 0 : index
    %c0_22 = arith.constant 0 : index
    %18 = vector.load %arg4[%c0_21, %c0_22] : memref<288x64xf32, #tpu.memory_space<vmem>>, vector<32x64xf32>
    %cst_23 = arith.constant dense<0.000000e+00> : vector<128x64xf32>
    %19 = tpu.matmul %17, %18, %cst_23 {dimension_numbers = #tpu.dot_dimension_numbers<[1], [0], [0], [1], [0, 0, 1, 1], [], []>} : vector<128x32xf32>, vector<32x64xf32>, vector<128x64xf32> -> vector<128x64xf32>
    %20 = arith.addf %15, %19 : vector<128x64xf32>
    %c0_24 = arith.constant 0 : index
    %c0_25 = arith.constant 0 : index
    %c1_26 = arith.constant 1 : index
    %c0_27 = arith.constant 0 : index
    %21 = vector.load %arg15[%c0_24, %c0_25, %c1_26, %c0_27] : memref<2x10x10x32xf32, #tpu.memory_space<vmem>>, vector<2x8x8x32xf32>
    %22 = vector.shape_cast %21 : vector<2x8x8x32xf32> to vector<128x32xf32>
    %c32 = arith.constant 32 : index
    %c0_28 = arith.constant 0 : index
    %23 = vector.load %arg4[%c32, %c0_28] : memref<288x64xf32, #tpu.memory_space<vmem>>, vector<32x64xf32>
    %cst_29 = arith.constant dense<0.000000e+00> : vector<128x64xf32>
    %24 = tpu.matmul %22, %23, %cst_29 {dimension_numbers = #tpu.dot_dimension_numbers<[1], [0], [0], [1], [0, 0, 1, 1], [], []>} : vector<128x32xf32>, vector<32x64xf32>, vector<128x64xf32> -> vector<128x64xf32>
    %25 = arith.addf %20, %24 : vector<128x64xf32>
    %c0_30 = arith.constant 0 : index
    %c0_31 = arith.constant 0 : index
    %c2 = arith.constant 2 : index
    %c0_32 = arith.constant 0 : index
    %26 = vector.load %arg15[%c0_30, %c0_31, %c2, %c0_32] : memref<2x10x10x32xf32, #tpu.memory_space<vmem>>, vector<2x8x8x32xf32>
    %27 = vector.shape_cast %26 : vector<2x8x8x32xf32> to vector<128x32xf32>
    %c64 = arith.constant 64 : index
    %c0_33 = arith.constant 0 : index
    %28 = vector.load %arg4[%c64, %c0_33] : memref<288x64xf32, #tpu.memory_space<vmem>>, vector<32x64xf32>
    %cst_34 = arith.constant dense<0.000000e+00> : vector<128x64xf32>
    %29 = tpu.matmul %27, %28, %cst_34 {dimension_numbers = #tpu.dot_dimension_numbers<[1], [0], [0], [1], [0, 0, 1, 1], [], []>} : vector<128x32xf32>, vector<32x64xf32>, vector<128x64xf32> -> vector<128x64xf32>
    %30 = arith.addf %25, %29 : vector<128x64xf32>
    %c0_35 = arith.constant 0 : index
    %c1_36 = arith.constant 1 : index
    %c0_37 = arith.constant 0 : index
    %c0_38 = arith.constant 0 : index
    %31 = vector.load %arg15[%c0_35, %c1_36, %c0_37, %c0_38] : memref<2x10x10x32xf32, #tpu.memory_space<vmem>>, vector<2x8x8x32xf32>
    %32 = vector.shape_cast %31 : vector<2x8x8x32xf32> to vector<128x32xf32>
    %c96 = arith.constant 96 : index
    %c0_39 = arith.constant 0 : index
    %33 = vector.load %arg4[%c96, %c0_39] : memref<288x64xf32, #tpu.memory_space<vmem>>, vector<32x64xf32>
    %cst_40 = arith.constant dense<0.000000e+00> : vector<128x64xf32>
    %34 = tpu.matmul %32, %33, %cst_40 {dimension_numbers = #tpu.dot_dimension_numbers<[1], [0], [0], [1], [0, 0, 1, 1], [], []>} : vector<128x32xf32>, vector<32x64xf32>, vector<128x64xf32> -> vector<128x64xf32>
    %35 = arith.addf %30, %34 : vector<128x64xf32>
    %c0_41 = arith.constant 0 : index
    %c1_42 = arith.constant 1 : index
    %c1_43 = arith.constant 1 : index
    %c0_44 = arith.constant 0 : index
    %36 = vector.load %arg15[%c0_41, %c1_42, %c1_43, %c0_44] : memref<2x10x10x32xf32, #tpu.memory_space<vmem>>, vector<2x8x8x32xf32>
    %37 = vector.shape_cast %36 : vector<2x8x8x32xf32> to vector<128x32xf32>
    %c128 = arith.constant 128 : index
    %c0_45 = arith.constant 0 : index
    %38 = vector.load %arg4[%c128, %c0_45] : memref<288x64xf32, #tpu.memory_space<vmem>>, vector<32x64xf32>
    %cst_46 = arith.constant dense<0.000000e+00> : vector<128x64xf32>
    %39 = tpu.matmul %37, %38, %cst_46 {dimension_numbers = #tpu.dot_dimension_numbers<[1], [0], [0], [1], [0, 0, 1, 1], [], []>} : vector<128x32xf32>, vector<32x64xf32>, vector<128x64xf32> -> vector<128x64xf32>
    %40 = arith.addf %35, %39 : vector<128x64xf32>
    %c0_47 = arith.constant 0 : index
    %c1_48 = arith.constant 1 : index
    %c2_49 = arith.constant 2 : index
    %c0_50 = arith.constant 0 : index
    %41 = vector.load %arg15[%c0_47, %c1_48, %c2_49, %c0_50] : memref<2x10x10x32xf32, #tpu.memory_space<vmem>>, vector<2x8x8x32xf32>
    %42 = vector.shape_cast %41 : vector<2x8x8x32xf32> to vector<128x32xf32>
    %c160 = arith.constant 160 : index
    %c0_51 = arith.constant 0 : index
    %43 = vector.load %arg4[%c160, %c0_51] : memref<288x64xf32, #tpu.memory_space<vmem>>, vector<32x64xf32>
    %cst_52 = arith.constant dense<0.000000e+00> : vector<128x64xf32>
    %44 = tpu.matmul %42, %43, %cst_52 {dimension_numbers = #tpu.dot_dimension_numbers<[1], [0], [0], [1], [0, 0, 1, 1], [], []>} : vector<128x32xf32>, vector<32x64xf32>, vector<128x64xf32> -> vector<128x64xf32>
    %45 = arith.addf %40, %44 : vector<128x64xf32>
    %c0_53 = arith.constant 0 : index
    %c2_54 = arith.constant 2 : index
    %c0_55 = arith.constant 0 : index
    %c0_56 = arith.constant 0 : index
    %46 = vector.load %arg15[%c0_53, %c2_54, %c0_55, %c0_56] : memref<2x10x10x32xf32, #tpu.memory_space<vmem>>, vector<2x8x8x32xf32>
    %47 = vector.shape_cast %46 : vector<2x8x8x32xf32> to vector<128x32xf32>
    %c192 = arith.constant 192 : index
    %c0_57 = arith.constant 0 : index
    %48 = vector.load %arg4[%c192, %c0_57] : memref<288x64xf32, #tpu.memory_space<vmem>>, vector<32x64xf32>
    %cst_58 = arith.constant dense<0.000000e+00> : vector<128x64xf32>
    %49 = tpu.matmul %47, %48, %cst_58 {dimension_numbers = #tpu.dot_dimension_numbers<[1], [0], [0], [1], [0, 0, 1, 1], [], []>} : vector<128x32xf32>, vector<32x64xf32>, vector<128x64xf32> -> vector<128x64xf32>
    %50 = arith.addf %45, %49 : vector<128x64xf32>
    %c0_59 = arith.constant 0 : index
    %c2_60 = arith.constant 2 : index
    %c1_61 = arith.constant 1 : index
    %c0_62 = arith.constant 0 : index
    %51 = vector.load %arg15[%c0_59, %c2_60, %c1_61, %c0_62] : memref<2x10x10x32xf32, #tpu.memory_space<vmem>>, vector<2x8x8x32xf32>
    %52 = vector.shape_cast %51 : vector<2x8x8x32xf32> to vector<128x32xf32>
    %c224 = arith.constant 224 : index
    %c0_63 = arith.constant 0 : index
    %53 = vector.load %arg4[%c224, %c0_63] : memref<288x64xf32, #tpu.memory_space<vmem>>, vector<32x64xf32>
    %cst_64 = arith.constant dense<0.000000e+00> : vector<128x64xf32>
    %54 = tpu.matmul %52, %53, %cst_64 {dimension_numbers = #tpu.dot_dimension_numbers<[1], [0], [0], [1], [0, 0, 1, 1], [], []>} : vector<128x32xf32>, vector<32x64xf32>, vector<128x64xf32> -> vector<128x64xf32>
    %55 = arith.addf %50, %54 : vector<128x64xf32>
    %c0_65 = arith.constant 0 : index
    %c2_66 = arith.constant 2 : index
    %c2_67 = arith.constant 2 : index
    %c0_68 = arith.constant 0 : index
    %56 = vector.load %arg15[%c0_65, %c2_66, %c2_67, %c0_68] : memref<2x10x10x32xf32, #tpu.memory_space<vmem>>, vector<2x8x8x32xf32>
    %57 = vector.shape_cast %56 : vector<2x8x8x32xf32> to vector<128x32xf32>
    %c256 = arith.constant 256 : index
    %c0_69 = arith.constant 0 : index
    %58 = vector.load %arg4[%c256, %c0_69] : memref<288x64xf32, #tpu.memory_space<vmem>>, vector<32x64xf32>
    %cst_70 = arith.constant dense<0.000000e+00> : vector<128x64xf32>
    %59 = tpu.matmul %57, %58, %cst_70 {dimension_numbers = #tpu.dot_dimension_numbers<[1], [0], [0], [1], [0, 0, 1, 1], [], []>} : vector<128x32xf32>, vector<32x64xf32>, vector<128x64xf32> -> vector<128x64xf32>
    %60 = arith.addf %55, %59 : vector<128x64xf32>
    %c0_71 = arith.constant 0 : index
    %c0_72 = arith.constant 0 : index
    %61 = vector.load %arg5[%c0_71, %c0_72] : memref<1x64xf32, #tpu.memory_space<vmem>>, vector<1x64xf32>
    %62 = vector.broadcast %61 : vector<1x64xf32> to vector<128x64xf32>
    %63 = arith.mulf %60, %62 : vector<128x64xf32>
    %c0_73 = arith.constant 0 : index
    %c0_74 = arith.constant 0 : index
    %64 = vector.load %arg6[%c0_73, %c0_74] : memref<1x64xf32, #tpu.memory_space<vmem>>, vector<1x64xf32>
    %65 = vector.broadcast %64 : vector<1x64xf32> to vector<128x64xf32>
    %66 = arith.addf %63, %65 : vector<128x64xf32>
    %cst_75 = arith.constant 0.000000e+00 : f32
    %67 = vector.broadcast %cst_75 : f32 to vector<128x64xf32>
    %68 = arith.maximumf %66, %67 : vector<128x64xf32>
    %c0_76 = arith.constant 0 : index
    %c0_77 = arith.constant 0 : index
    %69 = vector.load %arg7[%c0_76, %c0_77] : memref<64x8xf32, #tpu.memory_space<vmem>>, vector<64x8xf32>
    %cst_78 = arith.constant dense<0.000000e+00> : vector<128x8xf32>
    %70 = tpu.matmul %68, %69, %cst_78 {dimension_numbers = #tpu.dot_dimension_numbers<[1], [0], [0], [1], [0, 0, 1, 1], [], []>} : vector<128x64xf32>, vector<64x8xf32>, vector<128x8xf32> -> vector<128x8xf32>
    %c0_79 = arith.constant 0 : index
    %c0_80 = arith.constant 0 : index
    %71 = vector.load %arg8[%c0_79, %c0_80] : memref<1x8xf32, #tpu.memory_space<vmem>>, vector<1x8xf32>
    %72 = vector.broadcast %71 : vector<1x8xf32> to vector<128x8xf32>
    %73 = arith.mulf %70, %72 : vector<128x8xf32>
    %c0_81 = arith.constant 0 : index
    %c0_82 = arith.constant 0 : index
    %74 = vector.load %arg9[%c0_81, %c0_82] : memref<1x8xf32, #tpu.memory_space<vmem>>, vector<1x8xf32>
    %75 = vector.broadcast %74 : vector<1x8xf32> to vector<128x8xf32>
    %76 = arith.addf %73, %75 : vector<128x8xf32>
    %cst_83 = arith.constant 0.000000e+00 : f32
    %77 = vector.broadcast %cst_83 : f32 to vector<128x8xf32>
    %78 = arith.maximumf %76, %77 : vector<128x8xf32>
    %c0_84 = arith.constant 0 : index
    %c0_85 = arith.constant 0 : index
    %79 = vector.load %arg13[%c0_84, %c0_85] : memref<2x128xf32, #tpu.memory_space<vmem>>, vector<2x128xf32>
    %cst_86 = arith.constant 0.000000e+00 : f32
    %80 = vector.broadcast %cst_86 : f32 to vector<2x64xf32>
    %c0_87 = arith.constant 0 : index
    %c0_88 = arith.constant 0 : index
    %81 = vector.load %arg12[%c0_87, %c0_88] : memref<8x512xf32, #tpu.memory_space<vmem>>, vector<8x128xf32>
    %cst_89 = arith.constant dense<0.000000e+00> : vector<128x128xf32>
    %82 = tpu.matmul %78, %81, %cst_89 {dimension_numbers = #tpu.dot_dimension_numbers<[1], [0], [0], [1], [0, 0, 1, 1], [], []>} : vector<128x8xf32>, vector<8x128xf32>, vector<128x128xf32> -> vector<128x128xf32>
    %83 = tpu.iota {dimensions = array<i32: 1>} : vector<128x128xi32>
    %c0_i32 = arith.constant 0 : i32
    %84 = vector.broadcast %c0_i32 : i32 to vector<128x128xi32>
    %85 = arith.addi %83, %84 : vector<128x128xi32>
    %86 = tpu.iota {dimensions = array<i32: 1>} : vector<2x64x128xi32>
    %87 = vector.shape_cast %86 : vector<2x64x128xi32> to vector<128x128xi32>
    %c8_i32 = arith.constant 8 : i32
    %88 = vector.broadcast %c8_i32 : i32 to vector<128x128xi32>
    %89 = arith.muli %87, %88 : vector<128x128xi32>
    %90 = arith.cmpi sge, %85, %89 : vector<128x128xi32>
    %c8_i32_90 = arith.constant 8 : i32
    %91 = vector.broadcast %c8_i32_90 : i32 to vector<128x128xi32>
    %92 = arith.addi %89, %91 : vector<128x128xi32>
    %93 = arith.cmpi slt, %85, %92 : vector<128x128xi32>
    %94 = arith.andi %90, %93 : vector<128x128xi1>
    %cst_91 = arith.constant 0.000000e+00 : f32
    %95 = vector.broadcast %cst_91 : f32 to vector<128x128xf32>
    %96 = arith.select %94, %82, %95 : vector<128x128xi1>, vector<128x128xf32>
    %cst_92 = arith.constant dense<0.000000e+00> : vector<2x128xf32>
    %97 = tpu.matmul %79, %96, %cst_92 {dimension_numbers = #tpu.dot_dimension_numbers<[1], [0], [0], [1], [0, 0, 1, 1], [], []>} : vector<2x128xf32>, vector<128x128xf32>, vector<2x128xf32> -> vector<2x128xf32>
    %c0_93 = arith.constant 0 : index
    %c0_94 = arith.constant 0 : index
    %98 = vector.load %arg10[%c0_93, %c0_94] : memref<512x64xf32, #tpu.memory_space<vmem>>, vector<128x64xf32>
    %cst_95 = arith.constant dense<0.000000e+00> : vector<2x64xf32>
    %99 = tpu.matmul %97, %98, %cst_95 {dimension_numbers = #tpu.dot_dimension_numbers<[1], [0], [0], [1], [0, 0, 1, 1], [], []>} : vector<2x128xf32>, vector<128x64xf32>, vector<2x64xf32> -> vector<2x64xf32>
    %100 = arith.addf %80, %99 : vector<2x64xf32>
    %c0_96 = arith.constant 0 : index
    %c128_97 = arith.constant 128 : index
    %101 = vector.load %arg12[%c0_96, %c128_97] : memref<8x512xf32, #tpu.memory_space<vmem>>, vector<8x128xf32>
    %cst_98 = arith.constant dense<0.000000e+00> : vector<128x128xf32>
    %102 = tpu.matmul %78, %101, %cst_98 {dimension_numbers = #tpu.dot_dimension_numbers<[1], [0], [0], [1], [0, 0, 1, 1], [], []>} : vector<128x8xf32>, vector<8x128xf32>, vector<128x128xf32> -> vector<128x128xf32>
    %103 = tpu.iota {dimensions = array<i32: 1>} : vector<128x128xi32>
    %c128_i32 = arith.constant 128 : i32
    %104 = vector.broadcast %c128_i32 : i32 to vector<128x128xi32>
    %105 = arith.addi %103, %104 : vector<128x128xi32>
    %106 = tpu.iota {dimensions = array<i32: 1>} : vector<2x64x128xi32>
    %107 = vector.shape_cast %106 : vector<2x64x128xi32> to vector<128x128xi32>
    %c8_i32_99 = arith.constant 8 : i32
    %108 = vector.broadcast %c8_i32_99 : i32 to vector<128x128xi32>
    %109 = arith.muli %107, %108 : vector<128x128xi32>
    %110 = arith.cmpi sge, %105, %109 : vector<128x128xi32>
    %c8_i32_100 = arith.constant 8 : i32
    %111 = vector.broadcast %c8_i32_100 : i32 to vector<128x128xi32>
    %112 = arith.addi %109, %111 : vector<128x128xi32>
    %113 = arith.cmpi slt, %105, %112 : vector<128x128xi32>
    %114 = arith.andi %110, %113 : vector<128x128xi1>
    %cst_101 = arith.constant 0.000000e+00 : f32
    %115 = vector.broadcast %cst_101 : f32 to vector<128x128xf32>
    %116 = arith.select %114, %102, %115 : vector<128x128xi1>, vector<128x128xf32>
    %cst_102 = arith.constant dense<0.000000e+00> : vector<2x128xf32>
    %117 = tpu.matmul %79, %116, %cst_102 {dimension_numbers = #tpu.dot_dimension_numbers<[1], [0], [0], [1], [0, 0, 1, 1], [], []>} : vector<2x128xf32>, vector<128x128xf32>, vector<2x128xf32> -> vector<2x128xf32>
    %c128_103 = arith.constant 128 : index
    %c0_104 = arith.constant 0 : index
    %118 = vector.load %arg10[%c128_103, %c0_104] : memref<512x64xf32, #tpu.memory_space<vmem>>, vector<128x64xf32>
    %cst_105 = arith.constant dense<0.000000e+00> : vector<2x64xf32>
    %119 = tpu.matmul %117, %118, %cst_105 {dimension_numbers = #tpu.dot_dimension_numbers<[1], [0], [0], [1], [0, 0, 1, 1], [], []>} : vector<2x128xf32>, vector<128x64xf32>, vector<2x64xf32> -> vector<2x64xf32>
    %120 = arith.addf %100, %119 : vector<2x64xf32>
    %c0_106 = arith.constant 0 : index
    %c256_107 = arith.constant 256 : index
    %121 = vector.load %arg12[%c0_106, %c256_107] : memref<8x512xf32, #tpu.memory_space<vmem>>, vector<8x128xf32>
    %cst_108 = arith.constant dense<0.000000e+00> : vector<128x128xf32>
    %122 = tpu.matmul %78, %121, %cst_108 {dimension_numbers = #tpu.dot_dimension_numbers<[1], [0], [0], [1], [0, 0, 1, 1], [], []>} : vector<128x8xf32>, vector<8x128xf32>, vector<128x128xf32> -> vector<128x128xf32>
    %123 = tpu.iota {dimensions = array<i32: 1>} : vector<128x128xi32>
    %c256_i32 = arith.constant 256 : i32
    %124 = vector.broadcast %c256_i32 : i32 to vector<128x128xi32>
    %125 = arith.addi %123, %124 : vector<128x128xi32>
    %126 = tpu.iota {dimensions = array<i32: 1>} : vector<2x64x128xi32>
    %127 = vector.shape_cast %126 : vector<2x64x128xi32> to vector<128x128xi32>
    %c8_i32_109 = arith.constant 8 : i32
    %128 = vector.broadcast %c8_i32_109 : i32 to vector<128x128xi32>
    %129 = arith.muli %127, %128 : vector<128x128xi32>
    %130 = arith.cmpi sge, %125, %129 : vector<128x128xi32>
    %c8_i32_110 = arith.constant 8 : i32
    %131 = vector.broadcast %c8_i32_110 : i32 to vector<128x128xi32>
    %132 = arith.addi %129, %131 : vector<128x128xi32>
    %133 = arith.cmpi slt, %125, %132 : vector<128x128xi32>
    %134 = arith.andi %130, %133 : vector<128x128xi1>
    %cst_111 = arith.constant 0.000000e+00 : f32
    %135 = vector.broadcast %cst_111 : f32 to vector<128x128xf32>
    %136 = arith.select %134, %122, %135 : vector<128x128xi1>, vector<128x128xf32>
    %cst_112 = arith.constant dense<0.000000e+00> : vector<2x128xf32>
    %137 = tpu.matmul %79, %136, %cst_112 {dimension_numbers = #tpu.dot_dimension_numbers<[1], [0], [0], [1], [0, 0, 1, 1], [], []>} : vector<2x128xf32>, vector<128x128xf32>, vector<2x128xf32> -> vector<2x128xf32>
    %c256_113 = arith.constant 256 : index
    %c0_114 = arith.constant 0 : index
    %138 = vector.load %arg10[%c256_113, %c0_114] : memref<512x64xf32, #tpu.memory_space<vmem>>, vector<128x64xf32>
    %cst_115 = arith.constant dense<0.000000e+00> : vector<2x64xf32>
    %139 = tpu.matmul %137, %138, %cst_115 {dimension_numbers = #tpu.dot_dimension_numbers<[1], [0], [0], [1], [0, 0, 1, 1], [], []>} : vector<2x128xf32>, vector<128x64xf32>, vector<2x64xf32> -> vector<2x64xf32>
    %140 = arith.addf %120, %139 : vector<2x64xf32>
    %c0_116 = arith.constant 0 : index
    %c384 = arith.constant 384 : index
    %141 = vector.load %arg12[%c0_116, %c384] : memref<8x512xf32, #tpu.memory_space<vmem>>, vector<8x128xf32>
    %cst_117 = arith.constant dense<0.000000e+00> : vector<128x128xf32>
    %142 = tpu.matmul %78, %141, %cst_117 {dimension_numbers = #tpu.dot_dimension_numbers<[1], [0], [0], [1], [0, 0, 1, 1], [], []>} : vector<128x8xf32>, vector<8x128xf32>, vector<128x128xf32> -> vector<128x128xf32>
    %143 = tpu.iota {dimensions = array<i32: 1>} : vector<128x128xi32>
    %c384_i32 = arith.constant 384 : i32
    %144 = vector.broadcast %c384_i32 : i32 to vector<128x128xi32>
    %145 = arith.addi %143, %144 : vector<128x128xi32>
    %146 = tpu.iota {dimensions = array<i32: 1>} : vector<2x64x128xi32>
    %147 = vector.shape_cast %146 : vector<2x64x128xi32> to vector<128x128xi32>
    %c8_i32_118 = arith.constant 8 : i32
    %148 = vector.broadcast %c8_i32_118 : i32 to vector<128x128xi32>
    %149 = arith.muli %147, %148 : vector<128x128xi32>
    %150 = arith.cmpi sge, %145, %149 : vector<128x128xi32>
    %c8_i32_119 = arith.constant 8 : i32
    %151 = vector.broadcast %c8_i32_119 : i32 to vector<128x128xi32>
    %152 = arith.addi %149, %151 : vector<128x128xi32>
    %153 = arith.cmpi slt, %145, %152 : vector<128x128xi32>
    %154 = arith.andi %150, %153 : vector<128x128xi1>
    %cst_120 = arith.constant 0.000000e+00 : f32
    %155 = vector.broadcast %cst_120 : f32 to vector<128x128xf32>
    %156 = arith.select %154, %142, %155 : vector<128x128xi1>, vector<128x128xf32>
    %cst_121 = arith.constant dense<0.000000e+00> : vector<2x128xf32>
    %157 = tpu.matmul %79, %156, %cst_121 {dimension_numbers = #tpu.dot_dimension_numbers<[1], [0], [0], [1], [0, 0, 1, 1], [], []>} : vector<2x128xf32>, vector<128x128xf32>, vector<2x128xf32> -> vector<2x128xf32>
    %c384_122 = arith.constant 384 : index
    %c0_123 = arith.constant 0 : index
    %158 = vector.load %arg10[%c384_122, %c0_123] : memref<512x64xf32, #tpu.memory_space<vmem>>, vector<128x64xf32>
    %cst_124 = arith.constant dense<0.000000e+00> : vector<2x64xf32>
    %159 = tpu.matmul %157, %158, %cst_124 {dimension_numbers = #tpu.dot_dimension_numbers<[1], [0], [0], [1], [0, 0, 1, 1], [], []>} : vector<2x128xf32>, vector<128x64xf32>, vector<2x64xf32> -> vector<2x64xf32>
    %160 = arith.addf %140, %159 : vector<2x64xf32>
    %c0_125 = arith.constant 0 : index
    %c0_126 = arith.constant 0 : index
    %161 = vector.load %arg11[%c0_125, %c0_126] : memref<1x64xf32, #tpu.memory_space<vmem>>, vector<1x64xf32>
    %162 = vector.broadcast %161 : vector<1x64xf32> to vector<2x64xf32>
    %163 = arith.addf %160, %162 : vector<2x64xf32>
    %cst_127 = arith.constant dense<0xFF800000> : vector<2xf32>
    %164 = vector.multi_reduction <maximumf>, %163, %cst_127 [1] : vector<2x64xf32> to vector<2xf32>
    %165 = vector.shape_cast %164 : vector<2xf32> to vector<2x1xf32>
    %166 = vector.broadcast %165 : vector<2x1xf32> to vector<2x64xf32>
    %167 = arith.subf %163, %166 : vector<2x64xf32>
    %168 = math.exp %167 : vector<2x64xf32>
    %cst_128 = arith.constant dense<0.000000e+00> : vector<2xf32>
    %169 = vector.multi_reduction <add>, %168, %cst_128 [1] : vector<2x64xf32> to vector<2xf32>
    %170 = vector.shape_cast %169 : vector<2xf32> to vector<2x1xf32>
    %171 = math.log %170 : vector<2x1xf32>
    %172 = arith.addf %165, %171 : vector<2x1xf32>
    %173 = vector.broadcast %172 : vector<2x1xf32> to vector<2x64xf32>
    %174 = arith.subf %163, %173 : vector<2x64xf32>
    %175 = tpu.concatenate %163, %174 in 1 : vector<2x64xf32>, vector<2x64xf32> -> vector<2x128xf32>
    %c0_129 = arith.constant 0 : index
    %c0_130 = arith.constant 0 : index
    %176 = vector.load %arg14[%c0_129, %c0_130] : memref<2x128xf32, #tpu.memory_space<vmem>>, vector<2x128xf32>
    tpu.vector_store %arg14[%c0_129, %c0_130], %175 {strides = array<i32>} : memref<2x128xf32, #tpu.memory_space<vmem>>, vector<2x128xf32>,
    return
  }
}

</mosaic_0001>

<llo_original>
// kernel: forward.1
$region0: #{forward.1}
  #allocation0 [shape = 'u32[]', space=smem, size = 0x4, offset = 0x4, fixed_abs, tag = 'smem constant byte address 0x4 - core index']
  #allocation1 [shape = 'u32[144,128]{1,0:T(1,128)}', space=vmem, size = 0x12000, scoped, tag = 'internal scratch']
  #allocation2 [shape = 'f32[2,10,10,32]{3,2,1,0:T(8,128)}', space=vmem, size = 0x28000, scoped, tag = 'scratch operand']
  %s0 = inlined_call_operand.vmem [shape: f32[128,9], index: 0, kind: input, shape index: {}]
  %s1 = inlined_call_operand.vmem [shape: f32[9,32], index: 1, kind: input, shape index: {}]
  %s2 = inlined_call_operand.vmem [shape: f32[1,32], index: 2, kind: input, shape index: {}]
  %s3 = inlined_call_operand.vmem [shape: f32[1,32], index: 3, kind: input, shape index: {}]
  %s4 = inlined_call_operand.vmem [shape: f32[288,64], index: 4, kind: input, shape index: {}]
  %s5 = inlined_call_operand.vmem [shape: f32[1,64], index: 5, kind: input, shape index: {}]
  %s6 = inlined_call_operand.vmem [shape: f32[1,64], index: 6, kind: input, shape index: {}]
  %s7 = inlined_call_operand.vmem [shape: f32[64,8], index: 7, kind: input, shape index: {}]
  %s8 = inlined_call_operand.vmem [shape: f32[1,8], index: 8, kind: input, shape index: {}]
  %s9 = inlined_call_operand.vmem [shape: f32[1,8], index: 9, kind: input, shape index: {}]
  %s10 = inlined_call_operand.vmem [shape: f32[512,64], index: 10, kind: input, shape index: {}]
  %s11 = inlined_call_operand.vmem [shape: f32[1,64], index: 11, kind: input, shape index: {}]
  %s12 = inlined_call_operand.vmem [shape: f32[8,512], index: 12, kind: input, shape index: {}]
  %s13 = inlined_call_operand.vmem [shape: f32[2,128], index: 13, kind: input, shape index: {}]
  %s14 = inlined_call_operand.vmem [shape: f32[2,128], index: 14, kind: output, shape index: {}]
  %s15 = sld [smem:[#allocation0]]
  $region66: #{forward.1} parent=0
    _
  %s17 = ssub.s32 1, %s15
  %s18 = scalar_select 0, %s17, %s15
  // Predicated region
  $region2: #{forward.1} parent=0 // pred_check
    _
  $region3: #{forward.1} parent=0 // pred_check_branch
    %20 = sbr.rel (0) target = $region5
  $region4: #{forward.1} parent=0 // pred_region
    _
  $region5: #{forward.1} parent=0 // pred_fallthru
    _
  // Predicated region
  $region6: #{forward.1} parent=0 // pred_check
    _
  $region7: #{forward.1} parent=0 // pred_check_branch
    %22 = sbr.rel (0) target = $region9
  $region8: #{forward.1} parent=0 // pred_region
    _
  $region9: #{forward.1} parent=0 // pred_fallthru
    _
  // Predicated region
  $region10: #{forward.1} parent=0 // pred_check
    _
  $region11: #{forward.1} parent=0 // pred_check_branch
    %24 = sbr.rel (0) target = $region13
  $region12: #{forward.1} parent=0 // pred_region
    _
  $region13: #{forward.1} parent=0 // pred_fallthru
    _
  // Predicated region
  $region14: #{forward.1} parent=0 // pred_check
    _
  $region15: #{forward.1} parent=0 // pred_check_branch
    %26 = sbr.rel (0) target = $region17
  $region16: #{forward.1} parent=0 // pred_region
    _
  $region17: #{forward.1} parent=0 // pred_fallthru
    _
  // Predicated region
  $region18: #{forward.1} parent=0 // pred_check
    _
  $region19: #{forward.1} parent=0 // pred_check_branch
    %28 = sbr.rel (0) target = $region21
  $region20: #{forward.1} parent=0 // pred_region
    _
  $region21: #{forward.1} parent=0 // pred_fallthru
    _
  // Predicated region
  $region22: #{forward.1} parent=0 // pred_check
    _
  $region23: #{forward.1} parent=0 // pred_check_branch
    %30 = sbr.rel (0) target = $region25
  $region24: #{forward.1} parent=0 // pred_region
    _
  $region25: #{forward.1} parent=0 // pred_fallthru
    _
  // Predicated region
  $region26: #{forward.1} parent=0 // pred_check
    _
  $region27: #{forward.1} parent=0 // pred_check_branch
    %32 = sbr.rel (0) target = $region29
  $region28: #{forward.1} parent=0 // pred_region
    _
  $region29: #{forward.1} parent=0 // pred_fallthru
    _
  // Predicated region
  $region30: #{forward.1} parent=0 // pred_check
    _
  $region31: #{forward.1} parent=0 // pred_check_branch
    %34 = sbr.rel (0) target = $region33
  $region32: #{forward.1} parent=0 // pred_region
    _
  $region33: #{forward.1} parent=0 // pred_fallthru
    _
  // Predicated region
  $region34: #{forward.1} parent=0 // pred_check
    _
  $region35: #{forward.1} parent=0 // pred_check_branch
    %36 = sbr.rel (0) target = $region37
  $region36: #{forward.1} parent=0 // pred_region
    _
  $region37: #{forward.1} parent=0 // pred_fallthru
    _
  // Predicated region
  $region38: #{forward.1} parent=0 // pred_check
    _
  $region39: #{forward.1} parent=0 // pred_check_branch
    %38 = sbr.rel (0) target = $region41
  $region40: #{forward.1} parent=0 // pred_region
    _
  $region41: #{forward.1} parent=0 // pred_fallthru
    _
  // Predicated region
  $region42: #{forward.1} parent=0 // pred_check
    _
  $region43: #{forward.1} parent=0 // pred_check_branch
    %40 = sbr.rel (0) target = $region45
  $region44: #{forward.1} parent=0 // pred_region
    _
  $region45: #{forward.1} parent=0 // pred_fallthru
    _
  // Predicated region
  $region46: #{forward.1} parent=0 // pred_check
    _
  $region47: #{forward.1} parent=0 // pred_check_branch
    %42 = sbr.rel (0) target = $region49
  $region48: #{forward.1} parent=0 // pred_region
    _
  $region49: #{forward.1} parent=0 // pred_fallthru
    _
  // Predicated region
  $region50: #{forward.1} parent=0 // pred_check
    _
  $region51: #{forward.1} parent=0 // pred_check_branch
    %44 = sbr.rel (0) target = $region53
  $region52: #{forward.1} parent=0 // pred_region
    _
  $region53: #{forward.1} parent=0 // pred_fallthru
    _
  // Predicated region
  $region54: #{forward.1} parent=0 // pred_check
    _
  $region55: #{forward.1} parent=0 // pred_check_branch
    %46 = sbr.rel (0) target = $region57
  $region56: #{forward.1} parent=0 // pred_region
    _
  $region57: #{forward.1} parent=0 // pred_fallthru
    _
  %v47 = vld [vmem:[%s0] sm:$0xff]
  %v48 = vld [vmem:[%s0 + $0x8] sm:$0xff]
  %v49 = vld [vmem:[%s0 + $0x10] sm:$0xff]
  %v50 = vld [vmem:[%s0 + $0x18] sm:$0xff]
  %v51 = vld [vmem:[%s0 + $0x20] sm:$0xff]
  %v52 = vld [vmem:[%s0 + $0x28] sm:$0xff]
  %v53 = vld [vmem:[%s0 + $0x30] sm:$0xff]
  %v54 = vld [vmem:[%s0 + $0x38] sm:$0xff]
  %v55 = vld [vmem:[%s0 + $0x40] sm:$0xff]
  %v56 = vld [vmem:[%s0 + $0x48] sm:$0xff]
  %v57 = vld [vmem:[%s0 + $0x50] sm:$0xff]
  %v58 = vld [vmem:[%s0 + $0x58] sm:$0xff]
  %v59 = vld [vmem:[%s0 + $0x60] sm:$0xff]
  %v60 = vld [vmem:[%s0 + $0x68] sm:$0xff]
  %v61 = vld [vmem:[%s0 + $0x70] sm:$0xff]
  %v62 = vld [vmem:[%s0 + $0x78] sm:$0xff]
  %v63 = vld [vmem:[%s1] sm:$0xff]
  %v64 = vld [vmem:[%s1 + $0x8] sm:$0x1]
  %vm65 = vcmask 72704
  %v67 = vsel %vm65, %v47, 0
  %v70 = vsel %vm65, %v48, 0
  %v73 = vsel %vm65, %v49, 0
  %v76 = vsel %vm65, %v50, 0
  %v79 = vsel %vm65, %v51, 0
  %v82 = vsel %vm65, %v52, 0
  %v85 = vsel %vm65, %v53, 0
  %v88 = vsel %vm65, %v54, 0
  %v91 = vsel %vm65, %v55, 0
  %v94 = vsel %vm65, %v56, 0
  %v97 = vsel %vm65, %v57, 0
  %v100 = vsel %vm65, %v58, 0
  %v103 = vsel %vm65, %v59, 0
  %v106 = vsel %vm65, %v60, 0
  %v109 = vsel %vm65, %v61, 0
  %v112 = vsel %vm65, %v62, 0
  %vm114 = vcmask 1040384
  %v116 = vsel %vm114, %v64, 0
  %118 = vmatprep.subr.mxu0 0.0
  %119 = vmatpush1.msra.mxu0 %v63
  %120 = vmatprep.subr.mxu0 0.0
  %121 = vmatpush1.msra.mxu0 %v116
  %122 = vmatprep.subr.mxu0 0.0
  %123 = vmatpush1.msra.mxu0 0.0
  %124 = vmatprep.subr.mxu0 0.0
  %125 = vmatpush1.msra.mxu0 0.0
  %126 = vmatprep.subr.mxu0 0.0
  %127 = vmatpush1.msra.mxu0 0.0
  %128 = vmatprep.subr.mxu0 0.0
  %129 = vmatpush1.msra.mxu0 0.0
  %130 = vmatprep.subr.mxu0 0.0
  %131 = vmatpush1.msra.mxu0 0.0
  %132 = vmatprep.subr.mxu0 0.0
  %133 = vmatpush1.msra.mxu0 0.0
  %134 = vmatprep.subr.mxu0 0.0
  %135 = vmatpush1.msra.mxu0 0.0
  %136 = vmatprep.subr.mxu0 0.0
  %137 = vmatpush1.msra.mxu0 0.0
  %138 = vmatprep.subr.mxu0 0.0
  %139 = vmatpush1.msra.mxu0 0.0
  %140 = vmatprep.subr.mxu0 0.0
  %141 = vmatpush1.msra.mxu0 0.0
  %142 = vmatprep.subr.mxu0 0.0
  %143 = vmatpush1.msra.mxu0 0.0
  %144 = vmatprep.subr.mxu0 0.0
  %145 = vmatpush1.msra.mxu0 0.0
  %146 = vmatprep.subr.mxu0 0.0
  %147 = vmatpush1.msra.mxu0 0.0
  %148 = vmatprep.subr.mxu0 0.0
  %149 = vmatpush1.msra.mxu0 0.0
  %150 = vmatprep.subr.mxu0 0.0
  %151 = vmatpush1.msra.mxu0 0.0
  %152 = vmatprep.subr.mxu0 0.0
  %153 = vmatpush1.msra.mxu0 0.0
  %154 = vmatprep.subr.mxu0 0.0
  %155 = vmatpush1.msra.mxu0 0.0
  %156 = vmatprep.subr.mxu0 0.0
  %157 = vmatpush1.msra.mxu0 0.0
  %158 = vmatprep.subr.mxu0 0.0
  %159 = vmatpush1.msra.mxu0 0.0
  %160 = vmatprep.subr.mxu0 0.0
  %161 = vmatpush1.msra.mxu0 0.0
  %162 = vmatprep.subr.mxu0 0.0
  %163 = vmatpush1.msra.mxu0 0.0
  %164 = vmatprep.subr.mxu0 0.0
  %165 = vmatpush1.msra.mxu0 0.0
  %166 = vmatprep.subr.mxu0 0.0
  %167 = vmatpush1.msra.mxu0 0.0
  %168 = vmatprep.subr.mxu0 0.0
  %169 = vmatpush1.msra.mxu0 0.0
  %170 = vmatprep.subr.mxu0 0.0
  %171 = vmatpush1.msra.mxu0 0.0
  %172 = vmatprep.subr.mxu0 0.0
  %173 = vmatpush1.msra.mxu0 0.0
  %174 = vmatprep.subr.mxu0 0.0
  %175 = vmatpush1.msra.mxu0 0.0
  %176 = vmatprep.subr.mxu0 0.0
  %177 = vmatpush1.msra.mxu0 0.0
  %178 = vmatprep.subr.mxu0 0.0
  %179 = vmatpush1.msra.mxu0 0.0
  %180 = vmatprep.subr.mxu0 0.0
  %181 = vmatpush1.msra.mxu0 0.0
  %182 = vmatprep.mubr.f32.mxu0 0.0
  %183 = vmatmul.mubr.f32.gmra.mrb[0].mxu0 %v67
  %v184 = vpop.f32.mrb[0].mxu0
  %v185 = vadd.f32 0.0, %v184
  %v186 = vpop.f32.mrb[0].mxu0
  %187 = vmatprep.mubr.f32.mxu0 0.0
  %188 = vmatmul.mubr.f32.gmra.mrb[0].mxu0 %v70
  %v189 = vpop.f32.mrb[0].mxu0
  %v190 = vadd.f32 0.0, %v189
  %v191 = vpop.f32.mrb[0].mxu0
  %192 = vmatprep.mubr.f32.mxu0 0.0
  %193 = vmatmul.mubr.f32.gmra.mrb[0].mxu0 %v73
  %v194 = vpop.f32.mrb[0].mxu0
  %v195 = vadd.f32 0.0, %v194
  %v196 = vpop.f32.mrb[0].mxu0
  %197 = vmatprep.mubr.f32.mxu0 0.0
  %198 = vmatmul.mubr.f32.gmra.mrb[0].mxu0 %v76
  %v199 = vpop.f32.mrb[0].mxu0
  %v200 = vadd.f32 0.0, %v199
  %v201 = vpop.f32.mrb[0].mxu0
  %202 = vmatprep.mubr.f32.mxu0 0.0
  %203 = vmatmul.mubr.f32.gmra.mrb[0].mxu0 %v79
  %v204 = vpop.f32.mrb[0].mxu0
  %v205 = vadd.f32 0.0, %v204
  %v206 = vpop.f32.mrb[0].mxu0
  %207 = vmatprep.mubr.f32.mxu0 0.0
  %208 = vmatmul.mubr.f32.gmra.mrb[0].mxu0 %v82
  %v209 = vpop.f32.mrb[0].mxu0
  %v210 = vadd.f32 0.0, %v209
  %v211 = vpop.f32.mrb[0].mxu0
  %212 = vmatprep.mubr.f32.mxu0 0.0
  %213 = vmatmul.mubr.f32.gmra.mrb[0].mxu0 %v85
  %v214 = vpop.f32.mrb[0].mxu0
  %v215 = vadd.f32 0.0, %v214
  %v216 = vpop.f32.mrb[0].mxu0
  %217 = vmatprep.mubr.f32.mxu0 0.0
  %218 = vmatmul.mubr.f32.gmra.mrb[0].mxu0 %v88
  %v219 = vpop.f32.mrb[0].mxu0
  %v220 = vadd.f32 0.0, %v219
  %v221 = vpop.f32.mrb[0].mxu0
  %222 = vmatprep.mubr.f32.mxu0 0.0
  %223 = vmatmul.mubr.f32.gmra.mrb[0].mxu0 %v91
  %v224 = vpop.f32.mrb[0].mxu0
  %v225 = vadd.f32 0.0, %v224
  %v226 = vpop.f32.mrb[0].mxu0
  %227 = vmatprep.mubr.f32.mxu0 0.0
  %228 = vmatmul.mubr.f32.gmra.mrb[0].mxu0 %v94
  %v229 = vpop.f32.mrb[0].mxu0
  %v230 = vadd.f32 0.0, %v229
  %v231 = vpop.f32.mrb[0].mxu0
  %232 = vmatprep.mubr.f32.mxu0 0.0
  %233 = vmatmul.mubr.f32.gmra.mrb[0].mxu0 %v97
  %v234 = vpop.f32.mrb[0].mxu0
  %v235 = vadd.f32 0.0, %v234
  %v236 = vpop.f32.mrb[0].mxu0
  %237 = vmatprep.mubr.f32.mxu0 0.0
  %238 = vmatmul.mubr.f32.gmra.mrb[0].mxu0 %v100
  %v239 = vpop.f32.mrb[0].mxu0
  %v240 = vadd.f32 0.0, %v239
  %v241 = vpop.f32.mrb[0].mxu0
  %242 = vmatprep.mubr.f32.mxu0 0.0
  %243 = vmatmul.mubr.f32.gmra.mrb[0].mxu0 %v103
  %v244 = vpop.f32.mrb[0].mxu0
  %v245 = vadd.f32 0.0, %v244
  %v246 = vpop.f32.mrb[0].mxu0
  %247 = vmatprep.mubr.f32.mxu0 0.0
  %248 = vmatmul.mubr.f32.gmra.mrb[0].mxu0 %v106
  %v249 = vpop.f32.mrb[0].mxu0
  %v250 = vadd.f32 0.0, %v249
  %v251 = vpop.f32.mrb[0].mxu0
  %252 = vmatprep.mubr.f32.mxu0 0.0
  %253 = vmatmul.mubr.f32.gmra.mrb[0].mxu0 %v109
  %v254 = vpop.f32.mrb[0].mxu0
  %v255 = vadd.f32 0.0, %v254
  %v256 = vpop.f32.mrb[0].mxu0
  %257 = vmatprep.mubr.f32.mxu0 0.0
  %258 = vmatmul.mubr.f32.gmra.mrb[0].mxu0 %v112
  %v259 = vpop.f32.mrb[0].mxu0
  %v260 = vadd.f32 0.0, %v259
  %v261 = vpop.f32.mrb[0].mxu0
  %262 = vdwg.mxu0
  %v263 = vld [vmem:[%s2] sm:$0x1]
  %v265 = vlaneseq
  %v266 = vshrl.u32 %v265, 7
  %v267 = vsub.s32 0, %v266
  %v268 = vrot.slane %v263, %v267
  %v270 = vmul.f32 %v185, %v268
  %v271 = vmul.f32 %v190, %v268
  %v272 = vmul.f32 %v195, %v268
  %v273 = vmul.f32 %v200, %v268
  %v274 = vmul.f32 %v205, %v268
  %v275 = vmul.f32 %v210, %v268
  %v276 = vmul.f32 %v215, %v268
  %v277 = vmul.f32 %v220, %v268
  %v278 = vmul.f32 %v225, %v268
  %v279 = vmul.f32 %v230, %v268
  %v280 = vmul.f32 %v235, %v268
  %v281 = vmul.f32 %v240, %v268
  %v282 = vmul.f32 %v245, %v268
  %v283 = vmul.f32 %v250, %v268
  %v284 = vmul.f32 %v255, %v268
  %v285 = vmul.f32 %v260, %v268
  %v286 = vld [vmem:[%s3] sm:$0x1]
  %v288 = vlaneseq
  %v289 = vshrl.u32 %v288, 7
  %v290 = vsub.s32 0, %v289
  %v291 = vrot.slane %v286, %v290
  %v293 = vadd.f32 %v270, %v291
  %v294 = vadd.f32 %v271, %v291
  %v295 = vadd.f32 %v272, %v291
  %v296 = vadd.f32 %v273, %v291
  %v297 = vadd.f32 %v274, %v291
  %v298 = vadd.f32 %v275, %v291
  %v299 = vadd.f32 %v276, %v291
  %v300 = vadd.f32 %v277, %v291
  %v301 = vadd.f32 %v278, %v291
  %v302 = vadd.f32 %v279, %v291
  %v303 = vadd.f32 %v280, %v291
  %v304 = vadd.f32 %v281, %v291
  %v305 = vadd.f32 %v282, %v291
  %v306 = vadd.f32 %v283, %v291
  %v307 = vadd.f32 %v284, %v291
  %v308 = vadd.f32 %v285, %v291
  %v309 = vmax.f32 %v293, 0.0
  %v310 = vmax.f32 %v294, 0.0
  %v311 = vmax.f32 %v295, 0.0
  %v312 = vmax.f32 %v296, 0.0
  %v313 = vmax.f32 %v297, 0.0
  %v314 = vmax.f32 %v298, 0.0
  %v315 = vmax.f32 %v299, 0.0
  %v316 = vmax.f32 %v300, 0.0
  %v317 = vmax.f32 %v301, 0.0
  %v318 = vmax.f32 %v302, 0.0
  %v319 = vmax.f32 %v303, 0.0
  %v320 = vmax.f32 %v304, 0.0
  %v321 = vmax.f32 %v305, 0.0
  %v322 = vmax.f32 %v306, 0.0
  %v323 = vmax.f32 %v307, 0.0
  %v324 = vmax.f32 %v308, 0.0
  %vm325 = vcmask 261120
  %326 = vst.msk [vmem:[#allocation2] sm:$0xff] %vm325, 0.0
  %vm327 = vcmask 254976
  %328 = vst.msk [vmem:[#allocation2 + $0x8] sm:$0x3] %vm327, 0.0
  %329 = vst.msk [vmem:[#allocation2 + $0x10] sm:$0xff] %vm325, 0.0
  %330 = vst.msk [vmem:[#allocation2 + $0x18] sm:$0x3] %vm327, 0.0
  %331 = vst.msk [vmem:[#allocation2 + $0x20] sm:$0xff] %vm325, 0.0
  %332 = vst.msk [vmem:[#allocation2 + $0x28] sm:$0x3] %vm327, 0.0
  %333 = vst.msk [vmem:[#allocation2 + $0x30] sm:$0xff] %vm325, 0.0
  %334 = vst.msk [vmem:[#allocation2 + $0x38] sm:$0x3] %vm327, 0.0
  %335 = vst.msk [vmem:[#allocation2 + $0x40] sm:$0xff] %vm325, 0.0
  %336 = vst.msk [vmem:[#allocation2 + $0x48] sm:$0x3] %vm327, 0.0
  %337 = vst.msk [vmem:[#allocation2 + $0x50] sm:$0xff] %vm325, 0.0
  %338 = vst.msk [vmem:[#allocation2 + $0x58] sm:$0x3] %vm327, 0.0
  %339 = vst.msk [vmem:[#allocation2 + $0x60] sm:$0xff] %vm325, 0.0
  %340 = vst.msk [vmem:[#allocation2 + $0x68] sm:$0x3] %vm327, 0.0
  %341 = vst.msk [vmem:[#allocation2 + $0x70] sm:$0xff] %vm325, 0.0
  %342 = vst.msk [vmem:[#allocation2 + $0x78] sm:$0x3] %vm327, 0.0
  %343 = vst.msk [vmem:[#allocation2 + $0x80] sm:$0xff] %vm325, 0.0
  %344 = vst.msk [vmem:[#allocation2 + $0x88] sm:$0x3] %vm327, 0.0
  %345 = vst.msk [vmem:[#allocation2 + $0x90] sm:$0xff] %vm325, 0.0
  %346 = vst.msk [vmem:[#allocation2 + $0x98] sm:$0x3] %vm327, 0.0
  %347 = vst.msk [vmem:[#allocation2 + $0xa0] sm:$0xff] %vm325, 0.0
  %348 = vst.msk [vmem:[#allocation2 + $0xa8] sm:$0x3] %vm327, 0.0
  %349 = vst.msk [vmem:[#allocation2 + $0xb0] sm:$0xff] %vm325, 0.0
  %350 = vst.msk [vmem:[#allocation2 + $0xb8] sm:$0x3] %vm327, 0.0
  %351 = vst.msk [vmem:[#allocation2 + $0xc0] sm:$0xff] %vm325, 0.0
  %352 = vst.msk [vmem:[#allocation2 + $0xc8] sm:$0x3] %vm327, 0.0
  %353 = vst.msk [vmem:[#allocation2 + $0xd0] sm:$0xff] %vm325, 0.0
  %354 = vst.msk [vmem:[#allocation2 + $0xd8] sm:$0x3] %vm327, 0.0
  %355 = vst.msk [vmem:[#allocation2 + $0xe0] sm:$0xff] %vm325, 0.0
  %356 = vst.msk [vmem:[#allocation2 + $0xe8] sm:$0x3] %vm327, 0.0
  %357 = vst.msk [vmem:[#allocation2 + $0xf0] sm:$0xff] %vm325, 0.0
  %358 = vst.msk [vmem:[#allocation2 + $0xf8] sm:$0x3] %vm327, 0.0
  %359 = vst.msk [vmem:[#allocation2 + $0x100] sm:$0xff] %vm325, 0.0
  %360 = vst.msk [vmem:[#allocation2 + $0x108] sm:$0x3] %vm327, 0.0
  %361 = vst.msk [vmem:[#allocation2 + $0x110] sm:$0xff] %vm325, 0.0
  %362 = vst.msk [vmem:[#allocation2 + $0x118] sm:$0x3] %vm327, 0.0
  %363 = vst.msk [vmem:[#allocation2 + $0x120] sm:$0xff] %vm325, 0.0
  %364 = vst.msk [vmem:[#allocation2 + $0x128] sm:$0x3] %vm327, 0.0
  %365 = vst.msk [vmem:[#allocation2 + $0x130] sm:$0xff] %vm325, 0.0
  %366 = vst.msk [vmem:[#allocation2 + $0x138] sm:$0x3] %vm327, 0.0
  %s367 = scalar_lea.vmem [#allocation2], 16
  %368 = vst.msk [vmem:[%s367 + $0x1] sm:$0xff] %vm325, %v309
  %369 = vst.msk [vmem:[%s367 + $0x11] sm:$0xff] %vm325, %v310
  %370 = vst.msk [vmem:[%s367 + $0x21] sm:$0xff] %vm325, %v311
  %371 = vst.msk [vmem:[%s367 + $0x31] sm:$0xff] %vm325, %v312
  %372 = vst.msk [vmem:[%s367 + $0x41] sm:$0xff] %vm325, %v313
  %373 = vst.msk [vmem:[%s367 + $0x51] sm:$0xff] %vm325, %v314
  %374 = vst.msk [vmem:[%s367 + $0x61] sm:$0xff] %vm325, %v315
  %375 = vst.msk [vmem:[%s367 + $0x71] sm:$0xff] %vm325, %v316
  %376 = vst.msk [vmem:[%s367 + $0xa1] sm:$0xff] %vm325, %v317
  %377 = vst.msk [vmem:[%s367 + $0xb1] sm:$0xff] %vm325, %v318
  %378 = vst.msk [vmem:[%s367 + $0xc1] sm:$0xff] %vm325, %v319
  %379 = vst.msk [vmem:[%s367 + $0xd1] sm:$0xff] %vm325, %v320
  %380 = vst.msk [vmem:[%s367 + $0xe1] sm:$0xff] %vm325, %v321
  %381 = vst.msk [vmem:[%s367 + $0xf1] sm:$0xff] %vm325, %v322
  %382 = vst.msk [vmem:[%s367 + $0x101] sm:$0xff] %vm325, %v323
  %383 = vst.msk [vmem:[%s367 + $0x111] sm:$0xff] %vm325, %v324
  %v384 = vld [vmem:[#allocation2] sm:$0xff]
  %v385 = vld [vmem:[#allocation2 + $0x10] sm:$0xff]
  %v386 = vld [vmem:[#allocation2 + $0x20] sm:$0xff]
  %v387 = vld [vmem:[#allocation2 + $0x30] sm:$0xff]
  %v388 = vld [vmem:[#allocation2 + $0x40] sm:$0xff]
  %v389 = vld [vmem:[#allocation2 + $0x50] sm:$0xff]
  %v390 = vld [vmem:[#allocation2 + $0x60] sm:$0xff]
  %v391 = vld [vmem:[#allocation2 + $0x70] sm:$0xff]
  %v392 = vld [vmem:[#allocation2 + $0xa0] sm:$0xff]
  %v393 = vld [vmem:[#allocation2 + $0xb0] sm:$0xff]
  %v394 = vld [vmem:[#allocation2 + $0xc0] sm:$0xff]
  %v395 = vld [vmem:[#allocation2 + $0xd0] sm:$0xff]
  %v396 = vld [vmem:[#allocation2 + $0xe0] sm:$0xff]
  %v397 = vld [vmem:[#allocation2 + $0xf0] sm:$0xff]
  %v398 = vld [vmem:[#allocation2 + $0x100] sm:$0xff]
  %v399 = vld [vmem:[#allocation2 + $0x110] sm:$0xff]
  %v400 = vld [vmem:[%s4] sm:$0xff]
  %v401 = vld [vmem:[%s4 + $0x8] sm:$0xff]
  %v402 = vld [vmem:[%s4 + $0x10] sm:$0xff]
  %v403 = vld [vmem:[%s4 + $0x18] sm:$0xff]
  %v404 = vld [vmem:[#allocation2 + $0x1] sm:$0xff]
  %v405 = vld [vmem:[#allocation2 + $0x11] sm:$0xff]
  %v406 = vld [vmem:[#allocation2 + $0x21] sm:$0xff]
  %v407 = vld [vmem:[#allocation2 + $0x31] sm:$0xff]
  %v408 = vld [vmem:[#allocation2 + $0x41] sm:$0xff]
  %v409 = vld [vmem:[#allocation2 + $0x51] sm:$0xff]
  %v410 = vld [vmem:[#allocation2 + $0x61] sm:$0xff]
  %v411 = vld [vmem:[#allocation2 + $0x71] sm:$0xff]
  %v412 = vld [vmem:[#allocation2 + $0xa1] sm:$0xff]
  %v413 = vld [vmem:[#allocation2 + $0xb1] sm:$0xff]
  %v414 = vld [vmem:[#allocation2 + $0xc1] sm:$0xff]
  %v415 = vld [vmem:[#allocation2 + $0xd1] sm:$0xff]
  %v416 = vld [vmem:[#allocation2 + $0xe1] sm:$0xff]
  %v417 = vld [vmem:[#allocation2 + $0xf1] sm:$0xff]
  %v418 = vld [vmem:[#allocation2 + $0x101] sm:$0xff]
  %v419 = vld [vmem:[#allocation2 + $0x111] sm:$0xff]
  %v420 = vld [vmem:[%s4 + $0x20] sm:$0xff]
  %v421 = vld [vmem:[%s4 + $0x28] sm:$0xff]
  %v422 = vld [vmem:[%s4 + $0x30] sm:$0xff]
  %v423 = vld [vmem:[%s4 + $0x38] sm:$0xff]
  %v425 = vsel %vm325, %v404, 0
  %v428 = vsel %vm325, %v405, 0
  %v431 = vsel %vm325, %v406, 0
  %v434 = vsel %vm325, %v407, 0
  %v437 = vsel %vm325, %v408, 0
  %v440 = vsel %vm325, %v409, 0
  %v443 = vsel %vm325, %v410, 0
  %v446 = vsel %vm325, %v411, 0
  %v449 = vsel %vm325, %v412, 0
  %v452 = vsel %vm325, %v413, 0
  %v455 = vsel %vm325, %v414, 0
  %v458 = vsel %vm325, %v415, 0
  %v461 = vsel %vm325, %v416, 0
  %v464 = vsel %vm325, %v417, 0
  %v467 = vsel %vm325, %v418, 0
  %v470 = vsel %vm325, %v419, 0
  %472 = vmatprep.subr.mxu0 0.0
  %473 = vmatpush1.msra.mxu0 %v420
  %474 = vmatprep.subr.mxu0 0.0
  %475 = vmatpush1.msra.mxu0 %v421
  %476 = vmatprep.subr.mxu0 0.0
  %477 = vmatpush1.msra.mxu0 %v422
  %478 = vmatprep.subr.mxu0 0.0
  %479 = vmatpush1.msra.mxu0 %v423
  %480 = vmatprep.subr.mxu0 0.0
  %481 = vmatpush1.msra.mxu0 0.0
  %482 = vmatprep.subr.mxu0 0.0
  %483 = vmatpush1.msra.mxu0 0.0
  %484 = vmatprep.subr.mxu0 0.0
  %485 = vmatpush1.msra.mxu0 0.0
  %486 = vmatprep.subr.mxu0 0.0
  %487 = vmatpush1.msra.mxu0 0.0
  %488 = vmatprep.subr.mxu0 0.0
  %489 = vmatpush1.msra.mxu0 0.0
  %490 = vmatprep.subr.mxu0 0.0
  %491 = vmatpush1.msra.mxu0 0.0
  %492 = vmatprep.subr.mxu0 0.0
  %493 = vmatpush1.msra.mxu0 0.0
  %494 = vmatprep.subr.mxu0 0.0
  %495 = vmatpush1.msra.mxu0 0.0
  %496 = vmatprep.subr.mxu0 0.0
  %497 = vmatpush1.msra.mxu0 0.0
  %498 = vmatprep.subr.mxu0 0.0
  %499 = vmatpush1.msra.mxu0 0.0
  %500 = vmatprep.subr.mxu0 0.0
  %501 = vmatpush1.msra.mxu0 0.0
  %502 = vmatprep.subr.mxu0 0.0
  %503 = vmatpush1.msra.mxu0 0.0
  %504 = vmatprep.subr.mxu0 0.0
  %505 = vmatpush1.msra.mxu0 0.0
  %506 = vmatprep.subr.mxu0 0.0
  %507 = vmatpush1.msra.mxu0 0.0
  %508 = vmatprep.subr.mxu0 0.0
  %509 = vmatpush1.msra.mxu0 0.0
  %510 = vmatprep.subr.mxu0 0.0
  %511 = vmatpush1.msra.mxu0 0.0
  %512 = vmatprep.subr.mxu0 0.0
  %513 = vmatpush1.msra.mxu0 0.0
  %514 = vmatprep.subr.mxu0 0.0
  %515 = vmatpush1.msra.mxu0 0.0
  %516 = vmatprep.subr.mxu0 0.0
  %517 = vmatpush1.msra.mxu0 0.0
  %518 = vmatprep.subr.mxu0 0.0
  %519 = vmatpush1.msra.mxu0 0.0
  %520 = vmatprep.subr.mxu0 0.0
  %521 = vmatpush1.msra.mxu0 0.0
  %522 = vmatprep.subr.mxu0 0.0
  %523 = vmatpush1.msra.mxu0 0.0
  %524 = vmatprep.subr.mxu0 0.0
  %525 = vmatpush1.msra.mxu0 0.0
  %526 = vmatprep.subr.mxu0 0.0
  %527 = vmatpush1.msra.mxu0 0.0
  %528 = vmatprep.subr.mxu0 0.0
  %529 = vmatpush1.msra.mxu0 0.0
  %530 = vmatprep.subr.mxu0 0.0
  %531 = vmatpush1.msra.mxu0 0.0
  %532 = vmatprep.subr.mxu0 0.0
  %533 = vmatpush1.msra.mxu0 0.0
  %534 = vmatprep.subr.mxu0 0.0
  %535 = vmatpush1.msra.mxu0 0.0
  %536 = vmatprep.mubr.f32.mxu0 0.0
  %537 = vmatmul.mubr.f32.gmra.mrb[0].mxu0 %v425
  %v538 = vpop.f32.mrb[0].mxu0
  %v539 = vadd.f32 0.0, %v538
  %v540 = vpop.f32.mrb[0].mxu0
  %541 = vmatprep.mubr.f32.mxu0 0.0
  %542 = vmatmul.mubr.f32.gmra.mrb[0].mxu0 %v428
  %v543 = vpop.f32.mrb[0].mxu0
  %v544 = vadd.f32 0.0, %v543
  %v545 = vpop.f32.mrb[0].mxu0
  %546 = vmatprep.mubr.f32.mxu0 0.0
  %547 = vmatmul.mubr.f32.gmra.mrb[0].mxu0 %v431
  %v548 = vpop.f32.mrb[0].mxu0
  %v549 = vadd.f32 0.0, %v548
  %v550 = vpop.f32.mrb[0].mxu0
  %551 = vmatprep.mubr.f32.mxu0 0.0
  %552 = vmatmul.mubr.f32.gmra.mrb[0].mxu0 %v434
  %v553 = vpop.f32.mrb[0].mxu0
  %v554 = vadd.f32 0.0, %v553
  %v555 = vpop.f32.mrb[0].mxu0
  %556 = vmatprep.mubr.f32.mxu0 0.0
  %557 = vmatmul.mubr.f32.gmra.mrb[0].mxu0 %v437
  %v558 = vpop.f32.mrb[0].mxu0
  %v559 = vadd.f32 0.0, %v558
  %v560 = vpop.f32.mrb[0].mxu0
  %561 = vmatprep.mubr.f32.mxu0 0.0
  %562 = vmatmul.mubr.f32.gmra.mrb[0].mxu0 %v440
  %v563 = vpop.f32.mrb[0].mxu0
  %v564 = vadd.f32 0.0, %v563
  %v565 = vpop.f32.mrb[0].mxu0
  %566 = vmatprep.mubr.f32.mxu0 0.0
  %567 = vmatmul.mubr.f32.gmra.mrb[0].mxu0 %v443
  %v568 = vpop.f32.mrb[0].mxu0
  %v569 = vadd.f32 0.0, %v568
  %v570 = vpop.f32.mrb[0].mxu0
  %571 = vmatprep.mubr.f32.mxu0 0.0
  %572 = vmatmul.mubr.f32.gmra.mrb[0].mxu0 %v446
  %v573 = vpop.f32.mrb[0].mxu0
  %v574 = vadd.f32 0.0, %v573
  %v575 = vpop.f32.mrb[0].mxu0
  %576 = vmatprep.mubr.f32.mxu0 0.0
  %577 = vmatmul.mubr.f32.gmra.mrb[0].mxu0 %v449
  %v578 = vpop.f32.mrb[0].mxu0
  %v579 = vadd.f32 0.0, %v578
  %v580 = vpop.f32.mrb[0].mxu0
  %581 = vmatprep.mubr.f32.mxu0 0.0
  %582 = vmatmul.mubr.f32.gmra.mrb[0].mxu0 %v452
  %v583 = vpop.f32.mrb[0].mxu0
  %v584 = vadd.f32 0.0, %v583
  %v585 = vpop.f32.mrb[0].mxu0
  %586 = vmatprep.mubr.f32.mxu0 0.0
  %587 = vmatmul.mubr.f32.gmra.mrb[0].mxu0 %v455
  %v588 = vpop.f32.mrb[0].mxu0
  %v589 = vadd.f32 0.0, %v588
  %v590 = vpop.f32.mrb[0].mxu0
  %591 = vmatprep.mubr.f32.mxu0 0.0
  %592 = vmatmul.mubr.f32.gmra.mrb[0].mxu0 %v458
  %v593 = vpop.f32.mrb[0].mxu0
  %v594 = vadd.f32 0.0, %v593
  %v595 = vpop.f32.mrb[0].mxu0
  %596 = vmatprep.mubr.f32.mxu0 0.0
  %597 = vmatmul.mubr.f32.gmra.mrb[0].mxu0 %v461
  %v598 = vpop.f32.mrb[0].mxu0
  %v599 = vadd.f32 0.0, %v598
  %v600 = vpop.f32.mrb[0].mxu0
  %601 = vmatprep.mubr.f32.mxu0 0.0
  %602 = vmatmul.mubr.f32.gmra.mrb[0].mxu0 %v464
  %v603 = vpop.f32.mrb[0].mxu0
  %v604 = vadd.f32 0.0, %v603
  %v605 = vpop.f32.mrb[0].mxu0
  %606 = vmatprep.mubr.f32.mxu0 0.0
  %607 = vmatmul.mubr.f32.gmra.mrb[0].mxu0 %v467
  %v608 = vpop.f32.mrb[0].mxu0
  %v609 = vadd.f32 0.0, %v608
  %v610 = vpop.f32.mrb[0].mxu0
  %611 = vmatprep.mubr.f32.mxu0 0.0
  %612 = vmatmul.mubr.f32.gmra.mrb[0].mxu0 %v470
  %v613 = vpop.f32.mrb[0].mxu0
  %v614 = vadd.f32 0.0, %v613
  %v615 = vpop.f32.mrb[0].mxu0
  %616 = vdwg.mxu0
  %v618 = vsel %vm325, %v384, 0
  %v621 = vsel %vm325, %v385, 0
  %v624 = vsel %vm325, %v386, 0
  %v627 = vsel %vm325, %v387, 0
  %v630 = vsel %vm325, %v388, 0
  %v633 = vsel %vm325, %v389, 0
  %v636 = vsel %vm325, %v390, 0
  %v639 = vsel %vm325, %v391, 0
  %v642 = vsel %vm325, %v392, 0
  %v645 = vsel %vm325, %v393, 0
  %v648 = vsel %vm325, %v394, 0
  %v651 = vsel %vm325, %v395, 0
  %v654 = vsel %vm325, %v396, 0
  %v657 = vsel %vm325, %v397, 0
  %v660 = vsel %vm325, %v398, 0
  %v663 = vsel %vm325, %v399, 0
  %665 = vmatprep.subr.mxu0 0.0
  %666 = vmatpush1.msra.mxu0 %v400
  %667 = vmatprep.subr.mxu0 0.0
  %668 = vmatpush1.msra.mxu0 %v401
  %669 = vmatprep.subr.mxu0 0.0
  %670 = vmatpush1.msra.mxu0 %v402
  %671 = vmatprep.subr.mxu0 0.0
  %672 = vmatpush1.msra.mxu0 %v403
  %673 = vmatprep.subr.mxu0 0.0
  %674 = vmatpush1.msra.mxu0 0.0
  %675 = vmatprep.subr.mxu0 0.0
  %676 = vmatpush1.msra.mxu0 0.0
  %677 = vmatprep.subr.mxu0 0.0
  %678 = vmatpush1.msra.mxu0 0.0
  %679 = vmatprep.subr.mxu0 0.0
  %680 = vmatpush1.msra.mxu0 0.0
  %681 = vmatprep.subr.mxu0 0.0
  %682 = vmatpush1.msra.mxu0 0.0
  %683 = vmatprep.subr.mxu0 0.0
  %684 = vmatpush1.msra.mxu0 0.0
  %685 = vmatprep.subr.mxu0 0.0
  %686 = vmatpush1.msra.mxu0 0.0
  %687 = vmatprep.subr.mxu0 0.0
  %688 = vmatpush1.msra.mxu0 0.0
  %689 = vmatprep.subr.mxu0 0.0
  %690 = vmatpush1.msra.mxu0 0.0
  %691 = vmatprep.subr.mxu0 0.0
  %692 = vmatpush1.msra.mxu0 0.0
  %693 = vmatprep.subr.mxu0 0.0
  %694 = vmatpush1.msra.mxu0 0.0
  %695 = vmatprep.subr.mxu0 0.0
  %696 = vmatpush1.msra.mxu0 0.0
  %697 = vmatprep.subr.mxu0 0.0
  %698 = vmatpush1.msra.mxu0 0.0
  %699 = vmatprep.subr.mxu0 0.0
  %700 = vmatpush1.msra.mxu0 0.0
  %701 = vmatprep.subr.mxu0 0.0
  %702 = vmatpush1.msra.mxu0 0.0
  %703 = vmatprep.subr.mxu0 0.0
  %704 = vmatpush1.msra.mxu0 0.0
  %705 = vmatprep.subr.mxu0 0.0
  %706 = vmatpush1.msra.mxu0 0.0
  %707 = vmatprep.subr.mxu0 0.0
  %708 = vmatpush1.msra.mxu0 0.0
  %709 = vmatprep.subr.mxu0 0.0
  %710 = vmatpush1.msra.mxu0 0.0
  %711 = vmatprep.subr.mxu0 0.0
  %712 = vmatpush1.msra.mxu0 0.0
  %713 = vmatprep.subr.mxu0 0.0
  %714 = vmatpush1.msra.mxu0 0.0
  %715 = vmatprep.subr.mxu0 0.0
  %716 = vmatpush1.msra.mxu0 0.0
  %717 = vmatprep.subr.mxu0 0.0
  %718 = vmatpush1.msra.mxu0 0.0
  %719 = vmatprep.subr.mxu0 0.0
  %720 = vmatpush1.msra.mxu0 0.0
  %721 = vmatprep.subr.mxu0 0.0
  %722 = vmatpush1.msra.mxu0 0.0
  %723 = vmatprep.subr.mxu0 0.0
  %724 = vmatpush1.msra.mxu0 0.0
  %725 = vmatprep.subr.mxu0 0.0
  %726 = vmatpush1.msra.mxu0 0.0
  %727 = vmatprep.subr.mxu0 0.0
  %728 = vmatpush1.msra.mxu0 0.0
  %729 = vmatprep.mubr.f32.mxu0 0.0
  %730 = vmatmul.mubr.f32.gmra.mrb[0].mxu0 %v618
  %v731 = vpop.f32.mrb[0].mxu0
  %v732 = vadd.f32 %v539, %v731
  %v733 = vpop.f32.mrb[0].mxu0
  %734 = vmatprep.mubr.f32.mxu0 0.0
  %735 = vmatmul.mubr.f32.gmra.mrb[0].mxu0 %v621
  %v736 = vpop.f32.mrb[0].mxu0
  %v737 = vadd.f32 %v544, %v736
  %v738 = vpop.f32.mrb[0].mxu0
  %739 = vmatprep.mubr.f32.mxu0 0.0
  %740 = vmatmul.mubr.f32.gmra.mrb[0].mxu0 %v624
  %v741 = vpop.f32.mrb[0].mxu0
  %v742 = vadd.f32 %v549, %v741
  %v743 = vpop.f32.mrb[0].mxu0
  %744 = vmatprep.mubr.f32.mxu0 0.0
  %745 = vmatmul.mubr.f32.gmra.mrb[0].mxu0 %v627
  %v746 = vpop.f32.mrb[0].mxu0
  %v747 = vadd.f32 %v554, %v746
  %v748 = vpop.f32.mrb[0].mxu0
  %749 = vmatprep.mubr.f32.mxu0 0.0
  %750 = vmatmul.mubr.f32.gmra.mrb[0].mxu0 %v630
  %v751 = vpop.f32.mrb[0].mxu0
  %v752 = vadd.f32 %v559, %v751
  %v753 = vpop.f32.mrb[0].mxu0
  %754 = vmatprep.mubr.f32.mxu0 0.0
  %755 = vmatmul.mubr.f32.gmra.mrb[0].mxu0 %v633
  %v756 = vpop.f32.mrb[0].mxu0
  %v757 = vadd.f32 %v564, %v756
  %v758 = vpop.f32.mrb[0].mxu0
  %759 = vmatprep.mubr.f32.mxu0 0.0
  %760 = vmatmul.mubr.f32.gmra.mrb[0].mxu0 %v636
  %v761 = vpop.f32.mrb[0].mxu0
  %v762 = vadd.f32 %v569, %v761
  %v763 = vpop.f32.mrb[0].mxu0
  %764 = vmatprep.mubr.f32.mxu0 0.0
  %765 = vmatmul.mubr.f32.gmra.mrb[0].mxu0 %v639
  %v766 = vpop.f32.mrb[0].mxu0
  %v767 = vadd.f32 %v574, %v766
  %v768 = vpop.f32.mrb[0].mxu0
  %769 = vmatprep.mubr.f32.mxu0 0.0
  %770 = vmatmul.mubr.f32.gmra.mrb[0].mxu0 %v642
  %v771 = vpop.f32.mrb[0].mxu0
  %v772 = vadd.f32 %v579, %v771
  %v773 = vpop.f32.mrb[0].mxu0
  %774 = vmatprep.mubr.f32.mxu0 0.0
  %775 = vmatmul.mubr.f32.gmra.mrb[0].mxu0 %v645
  %v776 = vpop.f32.mrb[0].mxu0
  %v777 = vadd.f32 %v584, %v776
  %v778 = vpop.f32.mrb[0].mxu0
  %779 = vmatprep.mubr.f32.mxu0 0.0
  %780 = vmatmul.mubr.f32.gmra.mrb[0].mxu0 %v648
  %v781 = vpop.f32.mrb[0].mxu0
  %v782 = vadd.f32 %v589, %v781
  %v783 = vpop.f32.mrb[0].mxu0
  %784 = vmatprep.mubr.f32.mxu0 0.0
  %785 = vmatmul.mubr.f32.gmra.mrb[0].mxu0 %v651
  %v786 = vpop.f32.mrb[0].mxu0
  %v787 = vadd.f32 %v594, %v786
  %v788 = vpop.f32.mrb[0].mxu0
  %789 = vmatprep.mubr.f32.mxu0 0.0
  %790 = vmatmul.mubr.f32.gmra.mrb[0].mxu0 %v654
  %v791 = vpop.f32.mrb[0].mxu0
  %v792 = vadd.f32 %v599, %v791
  %v793 = vpop.f32.mrb[0].mxu0
  %794 = vmatprep.mubr.f32.mxu0 0.0
  %795 = vmatmul.mubr.f32.gmra.mrb[0].mxu0 %v657
  %v796 = vpop.f32.mrb[0].mxu0
  %v797 = vadd.f32 %v604, %v796
  %v798 = vpop.f32.mrb[0].mxu0
  %799 = vmatprep.mubr.f32.mxu0 0.0
  %800 = vmatmul.mubr.f32.gmra.mrb[0].mxu0 %v660
  %v801 = vpop.f32.mrb[0].mxu0
  %v802 = vadd.f32 %v609, %v801
  %v803 = vpop.f32.mrb[0].mxu0
  %804 = vmatprep.mubr.f32.mxu0 0.0
  %805 = vmatmul.mubr.f32.gmra.mrb[0].mxu0 %v663
  %v806 = vpop.f32.mrb[0].mxu0
  %v807 = vadd.f32 %v614, %v806
  %v808 = vpop.f32.mrb[0].mxu0
  %809 = vdwg.mxu0
  %v810 = vld [vmem:[#allocation2 + $0x2] sm:$0xff]
  %v811 = vld [vmem:[#allocation2 + $0x12] sm:$0xff]
  %v812 = vld [vmem:[#allocation2 + $0x22] sm:$0xff]
  %v813 = vld [vmem:[#allocation2 + $0x32] sm:$0xff]
  %v814 = vld [vmem:[#allocation2 + $0x42] sm:$0xff]
  %v815 = vld [vmem:[#allocation2 + $0x52] sm:$0xff]
  %v816 = vld [vmem:[#allocation2 + $0x62] sm:$0xff]
  %v817 = vld [vmem:[#allocation2 + $0x72] sm:$0xff]
  %v818 = vld [vmem:[#allocation2 + $0xa2] sm:$0xff]
  %v819 = vld [vmem:[#allocation2 + $0xb2] sm:$0xff]
  %v820 = vld [vmem:[#allocation2 + $0xc2] sm:$0xff]
  %v821 = vld [vmem:[#allocation2 + $0xd2] sm:$0xff]
  %v822 = vld [vmem:[#allocation2 + $0xe2] sm:$0xff]
  %v823 = vld [vmem:[#allocation2 + $0xf2] sm:$0xff]
  %v824 = vld [vmem:[#allocation2 + $0x102] sm:$0xff]
  %v825 = vld [vmem:[#allocation2 + $0x112] sm:$0xff]
  %v826 = vld [vmem:[%s4 + $0x40] sm:$0xff]
  %v827 = vld [vmem:[%s4 + $0x48] sm:$0xff]
  %v828 = vld [vmem:[%s4 + $0x50] sm:$0xff]
  %v829 = vld [vmem:[%s4 + $0x58] sm:$0xff]
  %v831 = vsel %vm325, %v810, 0
  %v834 = vsel %vm325, %v811, 0
  %v837 = vsel %vm325, %v812, 0
  %v840 = vsel %vm325, %v813, 0
  %v843 = vsel %vm325, %v814, 0
  %v846 = vsel %vm325, %v815, 0
  %v849 = vsel %vm325, %v816, 0
  %v852 = vsel %vm325, %v817, 0
  %v855 = vsel %vm325, %v818, 0
  %v858 = vsel %vm325, %v819, 0
  %v861 = vsel %vm325, %v820, 0
  %v864 = vsel %vm325, %v821, 0
  %v867 = vsel %vm325, %v822, 0
  %v870 = vsel %vm325, %v823, 0
  %v873 = vsel %vm325, %v824, 0
  %v876 = vsel %vm325, %v825, 0
  %878 = vmatprep.subr.mxu0 0.0
  %879 = vmatpush1.msra.mxu0 %v826
  %880 = vmatprep.subr.mxu0 0.0
  %881 = vmatpush1.msra.mxu0 %v827
  %882 = vmatprep.subr.mxu0 0.0
  %883 = vmatpush1.msra.mxu0 %v828
  %884 = vmatprep.subr.mxu0 0.0
  %885 = vmatpush1.msra.mxu0 %v829
  %886 = vmatprep.subr.mxu0 0.0
  %887 = vmatpush1.msra.mxu0 0.0
  %888 = vmatprep.subr.mxu0 0.0
  %889 = vmatpush1.msra.mxu0 0.0
  %890 = vmatprep.subr.mxu0 0.0
  %891 = vmatpush1.msra.mxu0 0.0
  %892 = vmatprep.subr.mxu0 0.0
  %893 = vmatpush1.msra.mxu0 0.0
  %894 = vmatprep.subr.mxu0 0.0
  %895 = vmatpush1.msra.mxu0 0.0
  %896 = vmatprep.subr.mxu0 0.0
  %897 = vmatpush1.msra.mxu0 0.0
  %898 = vmatprep.subr.mxu0 0.0
  %899 = vmatpush1.msra.mxu0 0.0
  %900 = vmatprep.subr.mxu0 0.0
  %901 = vmatpush1.msra.mxu0 0.0
  %902 = vmatprep.subr.mxu0 0.0
  %903 = vmatpush1.msra.mxu0 0.0
  %904 = vmatprep.subr.mxu0 0.0
  %905 = vmatpush1.msra.mxu0 0.0
  %906 = vmatprep.subr.mxu0 0.0
  %907 = vmatpush1.msra.mxu0 0.0
  %908 = vmatprep.subr.mxu0 0.0
  %909 = vmatpush1.msra.mxu0 0.0
  %910 = vmatprep.subr.mxu0 0.0
  %911 = vmatpush1.msra.mxu0 0.0
  %912 = vmatprep.subr.mxu0 0.0
  %913 = vmatpush1.msra.mxu0 0.0
  %914 = vmatprep.subr.mxu0 0.0
  %915 = vmatpush1.msra.mxu0 0.0
  %916 = vmatprep.subr.mxu0 0.0
  %917 = vmatpush1.msra.mxu0 0.0
  %918 = vmatprep.subr.mxu0 0.0
  %919 = vmatpush1.msra.mxu0 0.0
  %920 = vmatprep.subr.mxu0 0.0
  %921 = vmatpush1.msra.mxu0 0.0
  %922 = vmatprep.subr.mxu0 0.0
  %923 = vmatpush1.msra.mxu0 0.0
  %924 = vmatprep.subr.mxu0 0.0
  %925 = vmatpush1.msra.mxu0 0.0
  %926 = vmatprep.subr.mxu0 0.0
  %927 = vmatpush1.msra.mxu0 0.0
  %928 = vmatprep.subr.mxu0 0.0
  %929 = vmatpush1.msra.mxu0 0.0
  %930 = vmatprep.subr.mxu0 0.0
  %931 = vmatpush1.msra.mxu0 0.0
  %932 = vmatprep.subr.mxu0 0.0
  %933 = vmatpush1.msra.mxu0 0.0
  %934 = vmatprep.subr.mxu0 0.0
  %935 = vmatpush1.msra.mxu0 0.0
  %936 = vmatprep.subr.mxu0 0.0
  %937 = vmatpush1.msra.mxu0 0.0
  %938 = vmatprep.subr.mxu0 0.0
  %939 = vmatpush1.msra.mxu0 0.0
  %940 = vmatprep.subr.mxu0 0.0
  %941 = vmatpush1.msra.mxu0 0.0
  %942 = vmatprep.mubr.f32.mxu0 0.0
  %943 = vmatmul.mubr.f32.gmra.mrb[0].mxu0 %v831
  %v944 = vpop.f32.mrb[0].mxu0
  %v945 = vadd.f32 0.0, %v944
  %v946 = vpop.f32.mrb[0].mxu0
  %947 = vmatprep.mubr.f32.mxu0 0.0
  %948 = vmatmul.mubr.f32.gmra.mrb[0].mxu0 %v834
  %v949 = vpop.f32.mrb[0].mxu0
  %v950 = vadd.f32 0.0, %v949
  %v951 = vpop.f32.mrb[0].mxu0
  %952 = vmatprep.mubr.f32.mxu0 0.0
  %953 = vmatmul.mubr.f32.gmra.mrb[0].mxu0 %v837
  %v954 = vpop.f32.mrb[0].mxu0
  %v955 = vadd.f32 0.0, %v954
  %v956 = vpop.f32.mrb[0].mxu0
  %957 = vmatprep.mubr.f32.mxu0 0.0
  %958 = vmatmul.mubr.f32.gmra.mrb[0].mxu0 %v840
  %v959 = vpop.f32.mrb[0].mxu0
  %v960 = vadd.f32 0.0, %v959
  %v961 = vpop.f32.mrb[0].mxu0
  %962 = vmatprep.mubr.f32.mxu0 0.0
  %963 = vmatmul.mubr.f32.gmra.mrb[0].mxu0 %v843
  %v964 = vpop.f32.mrb[0].mxu0
  %v965 = vadd.f32 0.0, %v964
  %v966 = vpop.f32.mrb[0].mxu0
  %967 = vmatprep.mubr.f32.mxu0 0.0
  %968 = vmatmul.mubr.f32.gmra.mrb[0].mxu0 %v846
  %v969 = vpop.f32.mrb[0].mxu0
  %v970 = vadd.f32 0.0, %v969
  %v971 = vpop.f32.mrb[0].mxu0
  %972 = vmatprep.mubr.f32.mxu0 0.0
  %973 = vmatmul.mubr.f32.gmra.mrb[0].mxu0 %v849
  %v974 = vpop.f32.mrb[0].mxu0
  %v975 = vadd.f32 0.0, %v974
  %v976 = vpop.f32.mrb[0].mxu0
  %977 = vmatprep.mubr.f32.mxu0 0.0
  %978 = vmatmul.mubr.f32.gmra.mrb[0].mxu0 %v852
  %v979 = vpop.f32.mrb[0].mxu0
  %v980 = vadd.f32 0.0, %v979
  %v981 = vpop.f32.mrb[0].mxu0
  %982 = vmatprep.mubr.f32.mxu0 0.0
  %983 = vmatmul.mubr.f32.gmra.mrb[0].mxu0 %v855
  %v984 = vpop.f32.mrb[0].mxu0
  %v985 = vadd.f32 0.0, %v984
  %v986 = vpop.f32.mrb[0].mxu0
  %987 = vmatprep.mubr.f32.mxu0 0.0
  %988 = vmatmul.mubr.f32.gmra.mrb[0].mxu0 %v858
  %v989 = vpop.f32.mrb[0].mxu0
  %v990 = vadd.f32 0.0, %v989
  %v991 = vpop.f32.mrb[0].mxu0
  %992 = vmatprep.mubr.f32.mxu0 0.0
  %993 = vmatmul.mubr.f32.gmra.mrb[0].mxu0 %v861
  %v994 = vpop.f32.mrb[0].mxu0
  %v995 = vadd.f32 0.0, %v994
  %v996 = vpop.f32.mrb[0].mxu0
  %997 = vmatprep.mubr.f32.mxu0 0.0
  %998 = vmatmul.mubr.f32.gmra.mrb[0].mxu0 %v864
  %v999 = vpop.f32.mrb[0].mxu0
  %v1000 = vadd.f32 0.0, %v999
  %v1001 = vpop.f32.mrb[0].mxu0
  %1002 = vmatprep.mubr.f32.mxu0 0.0
  %1003 = vmatmul.mubr.f32.gmra.mrb[0].mxu0 %v867
  %v1004 = vpop.f32.mrb[0].mxu0
  %v1005 = vadd.f32 0.0, %v1004
  %v1006 = vpop.f32.mrb[0].mxu0
  %1007 = vmatprep.mubr.f32.mxu0 0.0
  %1008 = vmatmul.mubr.f32.gmra.mrb[0].mxu0 %v870
  %v1009 = vpop.f32.mrb[0].mxu0
  %v1010 = vadd.f32 0.0, %v1009
  %v1011 = vpop.f32.mrb[0].mxu0
  %1012 = vmatprep.mubr.f32.mxu0 0.0
  %1013 = vmatmul.mubr.f32.gmra.mrb[0].mxu0 %v873
  %v1014 = vpop.f32.mrb[0].mxu0
  %v1015 = vadd.f32 0.0, %v1014
  %v1016 = vpop.f32.mrb[0].mxu0
  %1017 = vmatprep.mubr.f32.mxu0 0.0
  %1018 = vmatmul.mubr.f32.gmra.mrb[0].mxu0 %v876
  %v1019 = vpop.f32.mrb[0].mxu0
  %v1020 = vadd.f32 0.0, %v1019
  %v1021 = vpop.f32.mrb[0].mxu0
  %1022 = vdwg.mxu0
  %v1023 = vadd.f32 %v732, %v945
  %v1024 = vadd.f32 %v737, %v950
  %v1025 = vadd.f32 %v742, %v955
  %v1026 = vadd.f32 %v747, %v960
  %v1027 = vadd.f32 %v752, %v965
  %v1028 = vadd.f32 %v757, %v970
  %v1029 = vadd.f32 %v762, %v975
  %v1030 = vadd.f32 %v767, %v980
  %v1031 = vadd.f32 %v772, %v985
  %v1032 = vadd.f32 %v777, %v990
  %v1033 = vadd.f32 %v782, %v995
  %v1034 = vadd.f32 %v787, %v1000
  %v1035 = vadd.f32 %v792, %v1005
  %v1036 = vadd.f32 %v797, %v1010
  %v1037 = vadd.f32 %v802, %v1015
  %v1038 = vadd.f32 %v807, %v1020
  %v1039 = vld [vmem:[%s367] sm:$0xff]
  %v1040 = vld [vmem:[%s367 + $0x10] sm:$0xff]
  %v1041 = vld [vmem:[%s367 + $0x20] sm:$0xff]
  %v1042 = vld [vmem:[%s367 + $0x30] sm:$0xff]
  %v1043 = vld [vmem:[%s367 + $0x40] sm:$0xff]
  %v1044 = vld [vmem:[%s367 + $0x50] sm:$0xff]
  %v1045 = vld [vmem:[%s367 + $0x60] sm:$0xff]
  %v1046 = vld [vmem:[%s367 + $0x70] sm:$0xff]
  %v1047 = vld [vmem:[%s367 + $0xa0] sm:$0xff]
  %v1048 = vld [vmem:[%s367 + $0xb0] sm:$0xff]
  %v1049 = vld [vmem:[%s367 + $0xc0] sm:$0xff]
  %v1050 = vld [vmem:[%s367 + $0xd0] sm:$0xff]
  %v1051 = vld [vmem:[%s367 + $0xe0] sm:$0xff]
  %v1052 = vld [vmem:[%s367 + $0xf0] sm:$0xff]
  %v1053 = vld [vmem:[%s367 + $0x100] sm:$0xff]
  %v1054 = vld [vmem:[%s367 + $0x110] sm:$0xff]
  %v1055 = vld [vmem:[%s4 + $0x60] sm:$0xff]
  %v1056 = vld [vmem:[%s4 + $0x68] sm:$0xff]
  %v1057 = vld [vmem:[%s4 + $0x70] sm:$0xff]
  %v1058 = vld [vmem:[%s4 + $0x78] sm:$0xff]
  %v1060 = vsel %vm325, %v1039, 0
  %v1063 = vsel %vm325, %v1040, 0
  %v1066 = vsel %vm325, %v1041, 0
  %v1069 = vsel %vm325, %v1042, 0
  %v1072 = vsel %vm325, %v1043, 0
  %v1075 = vsel %vm325, %v1044, 0
  %v1078 = vsel %vm325, %v1045, 0
  %v1081 = vsel %vm325, %v1046, 0
  %v1084 = vsel %vm325, %v1047, 0
  %v1087 = vsel %vm325, %v1048, 0
  %v1090 = vsel %vm325, %v1049, 0
  %v1093 = vsel %vm325, %v1050, 0
  %v1096 = vsel %vm325, %v1051, 0
  %v1099 = vsel %vm325, %v1052, 0
  %v1102 = vsel %vm325, %v1053, 0
  %v1105 = vsel %vm325, %v1054, 0
  %1107 = vmatprep.subr.mxu0 0.0
  %1108 = vmatpush1.msra.mxu0 %v1055
  %1109 = vmatprep.subr.mxu0 0.0
  %1110 = vmatpush1.msra.mxu0 %v1056
  %1111 = vmatprep.subr.mxu0 0.0
  %1112 = vmatpush1.msra.mxu0 %v1057
  %1113 = vmatprep.subr.mxu0 0.0
  %1114 = vmatpush1.msra.mxu0 %v1058
  %1115 = vmatprep.subr.mxu0 0.0
  %1116 = vmatpush1.msra.mxu0 0.0
  %1117 = vmatprep.subr.mxu0 0.0
  %1118 = vmatpush1.msra.mxu0 0.0
  %1119 = vmatprep.subr.mxu0 0.0
  %1120 = vmatpush1.msra.mxu0 0.0
  %1121 = vmatprep.subr.mxu0 0.0
  %1122 = vmatpush1.msra.mxu0 0.0
  %1123 = vmatprep.subr.mxu0 0.0
  %1124 = vmatpush1.msra.mxu0 0.0
  %1125 = vmatprep.subr.mxu0 0.0
  %1126 = vmatpush1.msra.mxu0 0.0
  %1127 = vmatprep.subr.mxu0 0.0
  %1128 = vmatpush1.msra.mxu0 0.0
  %1129 = vmatprep.subr.mxu0 0.0
  %1130 = vmatpush1.msra.mxu0 0.0
  %1131 = vmatprep.subr.mxu0 0.0
  %1132 = vmatpush1.msra.mxu0 0.0
  %1133 = vmatprep.subr.mxu0 0.0
  %1134 = vmatpush1.msra.mxu0 0.0
  %1135 = vmatprep.subr.mxu0 0.0
  %1136 = vmatpush1.msra.mxu0 0.0
  %1137 = vmatprep.subr.mxu0 0.0
  %1138 = vmatpush1.msra.mxu0 0.0
  %1139 = vmatprep.subr.mxu0 0.0
  %1140 = vmatpush1.msra.mxu0 0.0
  %1141 = vmatprep.subr.mxu0 0.0
  %1142 = vmatpush1.msra.mxu0 0.0
  %1143 = vmatprep.subr.mxu0 0.0
  %1144 = vmatpush1.msra.mxu0 0.0
  %1145 = vmatprep.subr.mxu0 0.0
  %1146 = vmatpush1.msra.mxu0 0.0
  %1147 = vmatprep.subr.mxu0 0.0
  %1148 = vmatpush1.msra.mxu0 0.0
  %1149 = vmatprep.subr.mxu0 0.0
  %1150 = vmatpush1.msra.mxu0 0.0
  %1151 = vmatprep.subr.mxu0 0.0
  %1152 = vmatpush1.msra.mxu0 0.0
  %1153 = vmatprep.subr.mxu0 0.0
  %1154 = vmatpush1.msra.mxu0 0.0
  %1155 = vmatprep.subr.mxu0 0.0
  %1156 = vmatpush1.msra.mxu0 0.0
  %1157 = vmatprep.subr.mxu0 0.0
  %1158 = vmatpush1.msra.mxu0 0.0
  %1159 = vmatprep.subr.mxu0 0.0
  %1160 = vmatpush1.msra.mxu0 0.0
  %1161 = vmatprep.subr.mxu0 0.0
  %1162 = vmatpush1.msra.mxu0 0.0
  %1163 = vmatprep.subr.mxu0 0.0
  %1164 = vmatpush1.msra.mxu0 0.0
  %1165 = vmatprep.subr.mxu0 0.0
  %1166 = vmatpush1.msra.mxu0 0.0
  %1167 = vmatprep.subr.mxu0 0.0
  %1168 = vmatpush1.msra.mxu0 0.0
  %1169 = vmatprep.subr.mxu0 0.0
  %1170 = vmatpush1.msra.mxu0 0.0
  %1171 = vmatprep.mubr.f32.mxu0 0.0
  %1172 = vmatmul.mubr.f32.gmra.mrb[0].mxu0 %v1060
  %v1173 = vpop.f32.mrb[0].mxu0
  %v1174 = vadd.f32 0.0, %v1173
  %v1175 = vpop.f32.mrb[0].mxu0
  %1176 = vmatprep.mubr.f32.mxu0 0.0
  %1177 = vmatmul.mubr.f32.gmra.mrb[0].mxu0 %v1063
  %v1178 = vpop.f32.mrb[0].mxu0
  %v1179 = vadd.f32 0.0, %v1178
  %v1180 = vpop.f32.mrb[0].mxu0
  %1181 = vmatprep.mubr.f32.mxu0 0.0
  %1182 = vmatmul.mubr.f32.gmra.mrb[0].mxu0 %v1066
  %v1183 = vpop.f32.mrb[0].mxu0
  %v1184 = vadd.f32 0.0, %v1183
  %v1185 = vpop.f32.mrb[0].mxu0
  %1186 = vmatprep.mubr.f32.mxu0 0.0
  %1187 = vmatmul.mubr.f32.gmra.mrb[0].mxu0 %v1069
  %v1188 = vpop.f32.mrb[0].mxu0
  %v1189 = vadd.f32 0.0, %v1188
  %v1190 = vpop.f32.mrb[0].mxu0
  %1191 = vmatprep.mubr.f32.mxu0 0.0
  %1192 = vmatmul.mubr.f32.gmra.mrb[0].mxu0 %v1072
  %v1193 = vpop.f32.mrb[0].mxu0
  %v1194 = vadd.f32 0.0, %v1193
  %v1195 = vpop.f32.mrb[0].mxu0
  %1196 = vmatprep.mubr.f32.mxu0 0.0
  %1197 = vmatmul.mubr.f32.gmra.mrb[0].mxu0 %v1075
  %v1198 = vpop.f32.mrb[0].mxu0
  %v1199 = vadd.f32 0.0, %v1198
  %v1200 = vpop.f32.mrb[0].mxu0
  %1201 = vmatprep.mubr.f32.mxu0 0.0
  %1202 = vmatmul.mubr.f32.gmra.mrb[0].mxu0 %v1078
  %v1203 = vpop.f32.mrb[0].mxu0
  %v1204 = vadd.f32 0.0, %v1203
  %v1205 = vpop.f32.mrb[0].mxu0
  %1206 = vmatprep.mubr.f32.mxu0 0.0
  %1207 = vmatmul.mubr.f32.gmra.mrb[0].mxu0 %v1081
  %v1208 = vpop.f32.mrb[0].mxu0
  %v1209 = vadd.f32 0.0, %v1208
  %v1210 = vpop.f32.mrb[0].mxu0
  %1211 = vmatprep.mubr.f32.mxu0 0.0
  %1212 = vmatmul.mubr.f32.gmra.mrb[0].mxu0 %v1084
  %v1213 = vpop.f32.mrb[0].mxu0
  %v1214 = vadd.f32 0.0, %v1213
  %v1215 = vpop.f32.mrb[0].mxu0
  %1216 = vmatprep.mubr.f32.mxu0 0.0
  %1217 = vmatmul.mubr.f32.gmra.mrb[0].mxu0 %v1087
  %v1218 = vpop.f32.mrb[0].mxu0
  %v1219 = vadd.f32 0.0, %v1218
  %v1220 = vpop.f32.mrb[0].mxu0
  %1221 = vmatprep.mubr.f32.mxu0 0.0
  %1222 = vmatmul.mubr.f32.gmra.mrb[0].mxu0 %v1090
  %v1223 = vpop.f32.mrb[0].mxu0
  %v1224 = vadd.f32 0.0, %v1223
  %v1225 = vpop.f32.mrb[0].mxu0
  %1226 = vmatprep.mubr.f32.mxu0 0.0
  %1227 = vmatmul.mubr.f32.gmra.mrb[0].mxu0 %v1093
  %v1228 = vpop.f32.mrb[0].mxu0
  %v1229 = vadd.f32 0.0, %v1228
  %v1230 = vpop.f32.mrb[0].mxu0
  %1231 = vmatprep.mubr.f32.mxu0 0.0
  %1232 = vmatmul.mubr.f32.gmra.mrb[0].mxu0 %v1096
  %v1233 = vpop.f32.mrb[0].mxu0
  %v1234 = vadd.f32 0.0, %v1233
  %v1235 = vpop.f32.mrb[0].mxu0
  %1236 = vmatprep.mubr.f32.mxu0 0.0
  %1237 = vmatmul.mubr.f32.gmra.mrb[0].mxu0 %v1099
  %v1238 = vpop.f32.mrb[0].mxu0
  %v1239 = vadd.f32 0.0, %v1238
  %v1240 = vpop.f32.mrb[0].mxu0
  %1241 = vmatprep.mubr.f32.mxu0 0.0
  %1242 = vmatmul.mubr.f32.gmra.mrb[0].mxu0 %v1102
  %v1243 = vpop.f32.mrb[0].mxu0
  %v1244 = vadd.f32 0.0, %v1243
  %v1245 = vpop.f32.mrb[0].mxu0
  %1246 = vmatprep.mubr.f32.mxu0 0.0
  %1247 = vmatmul.mubr.f32.gmra.mrb[0].mxu0 %v1105
  %v1248 = vpop.f32.mrb[0].mxu0
  %v1249 = vadd.f32 0.0, %v1248
  %v1250 = vpop.f32.mrb[0].mxu0
  %1251 = vdwg.mxu0
  %v1252 = vadd.f32 %v1023, %v1174
  %v1253 = vadd.f32 %v1024, %v1179
  %v1254 = vadd.f32 %v1025, %v1184
  %v1255 = vadd.f32 %v1026, %v1189
  %v1256 = vadd.f32 %v1027, %v1194
  %v1257 = vadd.f32 %v1028, %v1199
  %v1258 = vadd.f32 %v1029, %v1204
  %v1259 = vadd.f32 %v1030, %v1209
  %v1260 = vadd.f32 %v1031, %v1214
  %v1261 = vadd.f32 %v1032, %v1219
  %v1262 = vadd.f32 %v1033, %v1224
  %v1263 = vadd.f32 %v1034, %v1229
  %v1264 = vadd.f32 %v1035, %v1234
  %v1265 = vadd.f32 %v1036, %v1239
  %v1266 = vadd.f32 %v1037, %v1244
  %v1267 = vadd.f32 %v1038, %v1249
  %v1268 = vld [vmem:[%s367 + $0x1] sm:$0xff]
  %v1269 = vld [vmem:[%s367 + $0x11] sm:$0xff]
  %v1270 = vld [vmem:[%s367 + $0x21] sm:$0xff]
  %v1271 = vld [vmem:[%s367 + $0x31] sm:$0xff]
  %v1272 = vld [vmem:[%s367 + $0x41] sm:$0xff]
  %v1273 = vld [vmem:[%s367 + $0x51] sm:$0xff]
  %v1274 = vld [vmem:[%s367 + $0x61] sm:$0xff]
  %v1275 = vld [vmem:[%s367 + $0x71] sm:$0xff]
  %v1276 = vld [vmem:[%s367 + $0xa1] sm:$0xff]
  %v1277 = vld [vmem:[%s367 + $0xb1] sm:$0xff]
  %v1278 = vld [vmem:[%s367 + $0xc1] sm:$0xff]
  %v1279 = vld [vmem:[%s367 + $0xd1] sm:$0xff]
  %v1280 = vld [vmem:[%s367 + $0xe1] sm:$0xff]
  %v1281 = vld [vmem:[%s367 + $0xf1] sm:$0xff]
  %v1282 = vld [vmem:[%s367 + $0x101] sm:$0xff]
  %v1283 = vld [vmem:[%s367 + $0x111] sm:$0xff]
  %v1284 = vld [vmem:[%s4 + $0x80] sm:$0xff]
  %v1285 = vld [vmem:[%s4 + $0x88] sm:$0xff]
  %v1286 = vld [vmem:[%s4 + $0x90] sm:$0xff]
  %v1287 = vld [vmem:[%s4 + $0x98] sm:$0xff]
  %v1289 = vsel %vm325, %v1268, 0
  %v1292 = vsel %vm325, %v1269, 0
  %v1295 = vsel %vm325, %v1270, 0
  %v1298 = vsel %vm325, %v1271, 0
  %v1301 = vsel %vm325, %v1272, 0
  %v1304 = vsel %vm325, %v1273, 0
  %v1307 = vsel %vm325, %v1274, 0
  %v1310 = vsel %vm325, %v1275, 0
  %v1313 = vsel %vm325, %v1276, 0
  %v1316 = vsel %vm325, %v1277, 0
  %v1319 = vsel %vm325, %v1278, 0
  %v1322 = vsel %vm325, %v1279, 0
  %v1325 = vsel %vm325, %v1280, 0
  %v1328 = vsel %vm325, %v1281, 0
  %v1331 = vsel %vm325, %v1282, 0
  %v1334 = vsel %vm325, %v1283, 0
  %1336 = vmatprep.subr.mxu0 0.0
  %1337 = vmatpush1.msra.mxu0 %v1284
  %1338 = vmatprep.subr.mxu0 0.0
  %1339 = vmatpush1.msra.mxu0 %v1285
  %1340 = vmatprep.subr.mxu0 0.0
  %1341 = vmatpush1.msra.mxu0 %v1286
  %1342 = vmatprep.subr.mxu0 0.0
  %1343 = vmatpush1.msra.mxu0 %v1287
  %1344 = vmatprep.subr.mxu0 0.0
  %1345 = vmatpush1.msra.mxu0 0.0
  %1346 = vmatprep.subr.mxu0 0.0
  %1347 = vmatpush1.msra.mxu0 0.0
  %1348 = vmatprep.subr.mxu0 0.0
  %1349 = vmatpush1.msra.mxu0 0.0
  %1350 = vmatprep.subr.mxu0 0.0
  %1351 = vmatpush1.msra.mxu0 0.0
  %1352 = vmatprep.subr.mxu0 0.0
  %1353 = vmatpush1.msra.mxu0 0.0
  %1354 = vmatprep.subr.mxu0 0.0
  %1355 = vmatpush1.msra.mxu0 0.0
  %1356 = vmatprep.subr.mxu0 0.0
  %1357 = vmatpush1.msra.mxu0 0.0
  %1358 = vmatprep.subr.mxu0 0.0
  %1359 = vmatpush1.msra.mxu0 0.0
  %1360 = vmatprep.subr.mxu0 0.0
  %1361 = vmatpush1.msra.mxu0 0.0
  %1362 = vmatprep.subr.mxu0 0.0
  %1363 = vmatpush1.msra.mxu0 0.0
  %1364 = vmatprep.subr.mxu0 0.0
  %1365 = vmatpush1.msra.mxu0 0.0
  %1366 = vmatprep.subr.mxu0 0.0
  %1367 = vmatpush1.msra.mxu0 0.0
  %1368 = vmatprep.subr.mxu0 0.0
  %1369 = vmatpush1.msra.mxu0 0.0
  %1370 = vmatprep.subr.mxu0 0.0
  %1371 = vmatpush1.msra.mxu0 0.0
  %1372 = vmatprep.subr.mxu0 0.0
  %1373 = vmatpush1.msra.mxu0 0.0
  %1374 = vmatprep.subr.mxu0 0.0
  %1375 = vmatpush1.msra.mxu0 0.0
  %1376 = vmatprep.subr.mxu0 0.0
  %1377 = vmatpush1.msra.mxu0 0.0
  %1378 = vmatprep.subr.mxu0 0.0
  %1379 = vmatpush1.msra.mxu0 0.0
  %1380 = vmatprep.subr.mxu0 0.0
  %1381 = vmatpush1.msra.mxu0 0.0
  %1382 = vmatprep.subr.mxu0 0.0
  %1383 = vmatpush1.msra.mxu0 0.0
  %1384 = vmatprep.subr.mxu0 0.0
  %1385 = vmatpush1.msra.mxu0 0.0
  %1386 = vmatprep.subr.mxu0 0.0
  %1387 = vmatpush1.msra.mxu0 0.0
  %1388 = vmatprep.subr.mxu0 0.0
  %1389 = vmatpush1.msra.mxu0 0.0
  %1390 = vmatprep.subr.mxu0 0.0
  %1391 = vmatpush1.msra.mxu0 0.0
  %1392 = vmatprep.subr.mxu0 0.0
  %1393 = vmatpush1.msra.mxu0 0.0
  %1394 = vmatprep.subr.mxu0 0.0
  %1395 = vmatpush1.msra.mxu0 0.0
  %1396 = vmatprep.subr.mxu0 0.0
  %1397 = vmatpush1.msra.mxu0 0.0
  %1398 = vmatprep.subr.mxu0 0.0
  %1399 = vmatpush1.msra.mxu0 0.0
  %1400 = vmatprep.mubr.f32.mxu0 0.0
  %1401 = vmatmul.mubr.f32.gmra.mrb[0].mxu0 %v1289
  %v1402 = vpop.f32.mrb[0].mxu0
  %v1403 = vadd.f32 0.0, %v1402
  %v1404 = vpop.f32.mrb[0].mxu0
  %1405 = vmatprep.mubr.f32.mxu0 0.0
  %1406 = vmatmul.mubr.f32.gmra.mrb[0].mxu0 %v1292
  %v1407 = vpop.f32.mrb[0].mxu0
  %v1408 = vadd.f32 0.0, %v1407
  %v1409 = vpop.f32.mrb[0].mxu0
  %1410 = vmatprep.mubr.f32.mxu0 0.0
  %1411 = vmatmul.mubr.f32.gmra.mrb[0].mxu0 %v1295
  %v1412 = vpop.f32.mrb[0].mxu0
  %v1413 = vadd.f32 0.0, %v1412
  %v1414 = vpop.f32.mrb[0].mxu0
  %1415 = vmatprep.mubr.f32.mxu0 0.0
  %1416 = vmatmul.mubr.f32.gmra.mrb[0].mxu0 %v1298
  %v1417 = vpop.f32.mrb[0].mxu0
  %v1418 = vadd.f32 0.0, %v1417
  %v1419 = vpop.f32.mrb[0].mxu0
  %1420 = vmatprep.mubr.f32.mxu0 0.0
  %1421 = vmatmul.mubr.f32.gmra.mrb[0].mxu0 %v1301
  %v1422 = vpop.f32.mrb[0].mxu0
  %v1423 = vadd.f32 0.0, %v1422
  %v1424 = vpop.f32.mrb[0].mxu0
  %1425 = vmatprep.mubr.f32.mxu0 0.0
  %1426 = vmatmul.mubr.f32.gmra.mrb[0].mxu0 %v1304
  %v1427 = vpop.f32.mrb[0].mxu0
  %v1428 = vadd.f32 0.0, %v1427
  %v1429 = vpop.f32.mrb[0].mxu0
  %1430 = vmatprep.mubr.f32.mxu0 0.0
  %1431 = vmatmul.mubr.f32.gmra.mrb[0].mxu0 %v1307
  %v1432 = vpop.f32.mrb[0].mxu0
  %v1433 = vadd.f32 0.0, %v1432
  %v1434 = vpop.f32.mrb[0].mxu0
  %1435 = vmatprep.mubr.f32.mxu0 0.0
  %1436 = vmatmul.mubr.f32.gmra.mrb[0].mxu0 %v1310
  %v1437 = vpop.f32.mrb[0].mxu0
  %v1438 = vadd.f32 0.0, %v1437
  %v1439 = vpop.f32.mrb[0].mxu0
  %1440 = vmatprep.mubr.f32.mxu0 0.0
  %1441 = vmatmul.mubr.f32.gmra.mrb[0].mxu0 %v1313
  %v1442 = vpop.f32.mrb[0].mxu0
  %v1443 = vadd.f32 0.0, %v1442
  %v1444 = vpop.f32.mrb[0].mxu0
  %1445 = vmatprep.mubr.f32.mxu0 0.0
  %1446 = vmatmul.mubr.f32.gmra.mrb[0].mxu0 %v1316
  %v1447 = vpop.f32.mrb[0].mxu0
  %v1448 = vadd.f32 0.0, %v1447
  %v1449 = vpop.f32.mrb[0].mxu0
  %1450 = vmatprep.mubr.f32.mxu0 0.0
  %1451 = vmatmul.mubr.f32.gmra.mrb[0].mxu0 %v1319
  %v1452 = vpop.f32.mrb[0].mxu0
  %v1453 = vadd.f32 0.0, %v1452
  %v1454 = vpop.f32.mrb[0].mxu0
  %1455 = vmatprep.mubr.f32.mxu0 0.0
  %1456 = vmatmul.mubr.f32.gmra.mrb[0].mxu0 %v1322
  %v1457 = vpop.f32.mrb[0].mxu0
  %v1458 = vadd.f32 0.0, %v1457
  %v1459 = vpop.f32.mrb[0].mxu0
  %1460 = vmatprep.mubr.f32.mxu0 0.0
  %1461 = vmatmul.mubr.f32.gmra.mrb[0].mxu0 %v1325
  %v1462 = vpop.f32.mrb[0].mxu0
  %v1463 = vadd.f32 0.0, %v1462
  %v1464 = vpop.f32.mrb[0].mxu0
  %1465 = vmatprep.mubr.f32.mxu0 0.0
  %1466 = vmatmul.mubr.f32.gmra.mrb[0].mxu0 %v1328
  %v1467 = vpop.f32.mrb[0].mxu0
  %v1468 = vadd.f32 0.0, %v1467
  %v1469 = vpop.f32.mrb[0].mxu0
  %1470 = vmatprep.mubr.f32.mxu0 0.0
  %1471 = vmatmul.mubr.f32.gmra.mrb[0].mxu0 %v1331
  %v1472 = vpop.f32.mrb[0].mxu0
  %v1473 = vadd.f32 0.0, %v1472
  %v1474 = vpop.f32.mrb[0].mxu0
  %1475 = vmatprep.mubr.f32.mxu0 0.0
  %1476 = vmatmul.mubr.f32.gmra.mrb[0].mxu0 %v1334
  %v1477 = vpop.f32.mrb[0].mxu0
  %v1478 = vadd.f32 0.0, %v1477
  %v1479 = vpop.f32.mrb[0].mxu0
  %1480 = vdwg.mxu0
  %v1481 = vadd.f32 %v1252, %v1403
  %v1482 = vadd.f32 %v1253, %v1408
  %v1483 = vadd.f32 %v1254, %v1413
  %v1484 = vadd.f32 %v1255, %v1418
  %v1485 = vadd.f32 %v1256, %v1423
  %v1486 = vadd.f32 %v1257, %v1428
  %v1487 = vadd.f32 %v1258, %v1433
  %v1488 = vadd.f32 %v1259, %v1438
  %v1489 = vadd.f32 %v1260, %v1443
  %v1490 = vadd.f32 %v1261, %v1448
  %v1491 = vadd.f32 %v1262, %v1453
  %v1492 = vadd.f32 %v1263, %v1458
  %v1493 = vadd.f32 %v1264, %v1463
  %v1494 = vadd.f32 %v1265, %v1468
  %v1495 = vadd.f32 %v1266, %v1473
  %v1496 = vadd.f32 %v1267, %v1478
  %v1497 = vld [vmem:[%s367 + $0x2] sm:$0xff]
  %v1498 = vld [vmem:[%s367 + $0x12] sm:$0xff]
  %v1499 = vld [vmem:[%s367 + $0x22] sm:$0xff]
  %v1500 = vld [vmem:[%s367 + $0x32] sm:$0xff]
  %v1501 = vld [vmem:[%s367 + $0x42] sm:$0xff]
  %v1502 = vld [vmem:[%s367 + $0x52] sm:$0xff]
  %v1503 = vld [vmem:[%s367 + $0x62] sm:$0xff]
  %v1504 = vld [vmem:[%s367 + $0x72] sm:$0xff]
  %v1505 = vld [vmem:[%s367 + $0xa2] sm:$0xff]
  %v1506 = vld [vmem:[%s367 + $0xb2] sm:$0xff]
  %v1507 = vld [vmem:[%s367 + $0xc2] sm:$0xff]
  %v1508 = vld [vmem:[%s367 + $0xd2] sm:$0xff]
  %v1509 = vld [vmem:[%s367 + $0xe2] sm:$0xff]
  %v1510 = vld [vmem:[%s367 + $0xf2] sm:$0xff]
  %v1511 = vld [vmem:[%s367 + $0x102] sm:$0xff]
  %v1512 = vld [vmem:[%s367 + $0x112] sm:$0xff]
  %v1513 = vld [vmem:[%s4 + $0xa0] sm:$0xff]
  %v1514 = vld [vmem:[%s4 + $0xa8] sm:$0xff]
  %v1515 = vld [vmem:[%s4 + $0xb0] sm:$0xff]
  %v1516 = vld [vmem:[%s4 + $0xb8] sm:$0xff]
  %v1518 = vsel %vm325, %v1497, 0
  %v1521 = vsel %vm325, %v1498, 0
  %v1524 = vsel %vm325, %v1499, 0
  %v1527 = vsel %vm325, %v1500, 0
  %v1530 = vsel %vm325, %v1501, 0
  %v1533 = vsel %vm325, %v1502, 0
  %v1536 = vsel %vm325, %v1503, 0
  %v1539 = vsel %vm325, %v1504, 0
  %v1542 = vsel %vm325, %v1505, 0
  %v1545 = vsel %vm325, %v1506, 0
  %v1548 = vsel %vm325, %v1507, 0
  %v1551 = vsel %vm325, %v1508, 0
  %v1554 = vsel %vm325, %v1509, 0
  %v1557 = vsel %vm325, %v1510, 0
  %v1560 = vsel %vm325, %v1511, 0
  %v1563 = vsel %vm325, %v1512, 0
  %1565 = vmatprep.subr.mxu0 0.0
  %1566 = vmatpush1.msra.mxu0 %v1513
  %1567 = vmatprep.subr.mxu0 0.0
  %1568 = vmatpush1.msra.mxu0 %v1514
  %1569 = vmatprep.subr.mxu0 0.0
  %1570 = vmatpush1.msra.mxu0 %v1515
  %1571 = vmatprep.subr.mxu0 0.0
  %1572 = vmatpush1.msra.mxu0 %v1516
  %1573 = vmatprep.subr.mxu0 0.0
  %1574 = vmatpush1.msra.mxu0 0.0
  %1575 = vmatprep.subr.mxu0 0.0
  %1576 = vmatpush1.msra.mxu0 0.0
  %1577 = vmatprep.subr.mxu0 0.0
  %1578 = vmatpush1.msra.mxu0 0.0
  %1579 = vmatprep.subr.mxu0 0.0
  %1580 = vmatpush1.msra.mxu0 0.0
  %1581 = vmatprep.subr.mxu0 0.0
  %1582 = vmatpush1.msra.mxu0 0.0
  %1583 = vmatprep.subr.mxu0 0.0
  %1584 = vmatpush1.msra.mxu0 0.0
  %1585 = vmatprep.subr.mxu0 0.0
  %1586 = vmatpush1.msra.mxu0 0.0
  %1587 = vmatprep.subr.mxu0 0.0
  %1588 = vmatpush1.msra.mxu0 0.0
  %1589 = vmatprep.subr.mxu0 0.0
  %1590 = vmatpush1.msra.mxu0 0.0
  %1591 = vmatprep.subr.mxu0 0.0
  %1592 = vmatpush1.msra.mxu0 0.0
  %1593 = vmatprep.subr.mxu0 0.0
  %1594 = vmatpush1.msra.mxu0 0.0
  %1595 = vmatprep.subr.mxu0 0.0
  %1596 = vmatpush1.msra.mxu0 0.0
  %1597 = vmatprep.subr.mxu0 0.0
  %1598 = vmatpush1.msra.mxu0 0.0
  %1599 = vmatprep.subr.mxu0 0.0
  %1600 = vmatpush1.msra.mxu0 0.0
  %1601 = vmatprep.subr.mxu0 0.0
  %1602 = vmatpush1.msra.mxu0 0.0
  %1603 = vmatprep.subr.mxu0 0.0
  %1604 = vmatpush1.msra.mxu0 0.0
  %1605 = vmatprep.subr.mxu0 0.0
  %1606 = vmatpush1.msra.mxu0 0.0
  %1607 = vmatprep.subr.mxu0 0.0
  %1608 = vmatpush1.msra.mxu0 0.0
  %1609 = vmatprep.subr.mxu0 0.0
  %1610 = vmatpush1.msra.mxu0 0.0
  %1611 = vmatprep.subr.mxu0 0.0
  %1612 = vmatpush1.msra.mxu0 0.0
  %1613 = vmatprep.subr.mxu0 0.0
  %1614 = vmatpush1.msra.mxu0 0.0
  %1615 = vmatprep.subr.mxu0 0.0
  %1616 = vmatpush1.msra.mxu0 0.0
  %1617 = vmatprep.subr.mxu0 0.0
  %1618 = vmatpush1.msra.mxu0 0.0
  %1619 = vmatprep.subr.mxu0 0.0
  %1620 = vmatpush1.msra.mxu0 0.0
  %1621 = vmatprep.subr.mxu0 0.0
  %1622 = vmatpush1.msra.mxu0 0.0
  %1623 = vmatprep.subr.mxu0 0.0
  %1624 = vmatpush1.msra.mxu0 0.0
  %1625 = vmatprep.subr.mxu0 0.0
  %1626 = vmatpush1.msra.mxu0 0.0
  %1627 = vmatprep.subr.mxu0 0.0
  %1628 = vmatpush1.msra.mxu0 0.0
  %1629 = vmatprep.mubr.f32.mxu0 0.0
  %1630 = vmatmul.mubr.f32.gmra.mrb[0].mxu0 %v1518
  %v1631 = vpop.f32.mrb[0].mxu0
  %v1632 = vadd.f32 0.0, %v1631
  %v1633 = vpop.f32.mrb[0].mxu0
  %1634 = vmatprep.mubr.f32.mxu0 0.0
  %1635 = vmatmul.mubr.f32.gmra.mrb[0].mxu0 %v1521
  %v1636 = vpop.f32.mrb[0].mxu0
  %v1637 = vadd.f32 0.0, %v1636
  %v1638 = vpop.f32.mrb[0].mxu0
  %1639 = vmatprep.mubr.f32.mxu0 0.0
  %1640 = vmatmul.mubr.f32.gmra.mrb[0].mxu0 %v1524
  %v1641 = vpop.f32.mrb[0].mxu0
  %v1642 = vadd.f32 0.0, %v1641
  %v1643 = vpop.f32.mrb[0].mxu0
  %1644 = vmatprep.mubr.f32.mxu0 0.0
  %1645 = vmatmul.mubr.f32.gmra.mrb[0].mxu0 %v1527
  %v1646 = vpop.f32.mrb[0].mxu0
  %v1647 = vadd.f32 0.0, %v1646
  %v1648 = vpop.f32.mrb[0].mxu0
  %1649 = vmatprep.mubr.f32.mxu0 0.0
  %1650 = vmatmul.mubr.f32.gmra.mrb[0].mxu0 %v1530
  %v1651 = vpop.f32.mrb[0].mxu0
  %v1652 = vadd.f32 0.0, %v1651
  %v1653 = vpop.f32.mrb[0].mxu0
  %1654 = vmatprep.mubr.f32.mxu0 0.0
  %1655 = vmatmul.mubr.f32.gmra.mrb[0].mxu0 %v1533
  %v1656 = vpop.f32.mrb[0].mxu0
  %v1657 = vadd.f32 0.0, %v1656
  %v1658 = vpop.f32.mrb[0].mxu0
  %1659 = vmatprep.mubr.f32.mxu0 0.0
  %1660 = vmatmul.mubr.f32.gmra.mrb[0].mxu0 %v1536
  %v1661 = vpop.f32.mrb[0].mxu0
  %v1662 = vadd.f32 0.0, %v1661
  %v1663 = vpop.f32.mrb[0].mxu0
  %1664 = vmatprep.mubr.f32.mxu0 0.0
  %1665 = vmatmul.mubr.f32.gmra.mrb[0].mxu0 %v1539
  %v1666 = vpop.f32.mrb[0].mxu0
  %v1667 = vadd.f32 0.0, %v1666
  %v1668 = vpop.f32.mrb[0].mxu0
  %1669 = vmatprep.mubr.f32.mxu0 0.0
  %1670 = vmatmul.mubr.f32.gmra.mrb[0].mxu0 %v1542
  %v1671 = vpop.f32.mrb[0].mxu0
  %v1672 = vadd.f32 0.0, %v1671
  %v1673 = vpop.f32.mrb[0].mxu0
  %1674 = vmatprep.mubr.f32.mxu0 0.0
  %1675 = vmatmul.mubr.f32.gmra.mrb[0].mxu0 %v1545
  %v1676 = vpop.f32.mrb[0].mxu0
  %v1677 = vadd.f32 0.0, %v1676
  %v1678 = vpop.f32.mrb[0].mxu0
  %1679 = vmatprep.mubr.f32.mxu0 0.0
  %1680 = vmatmul.mubr.f32.gmra.mrb[0].mxu0 %v1548
  %v1681 = vpop.f32.mrb[0].mxu0
  %v1682 = vadd.f32 0.0, %v1681
  %v1683 = vpop.f32.mrb[0].mxu0
  %1684 = vmatprep.mubr.f32.mxu0 0.0
  %1685 = vmatmul.mubr.f32.gmra.mrb[0].mxu0 %v1551
  %v1686 = vpop.f32.mrb[0].mxu0
  %v1687 = vadd.f32 0.0, %v1686
  %v1688 = vpop.f32.mrb[0].mxu0
  %1689 = vmatprep.mubr.f32.mxu0 0.0
  %1690 = vmatmul.mubr.f32.gmra.mrb[0].mxu0 %v1554
  %v1691 = vpop.f32.mrb[0].mxu0
  %v1692 = vadd.f32 0.0, %v1691
  %v1693 = vpop.f32.mrb[0].mxu0
  %1694 = vmatprep.mubr.f32.mxu0 0.0
  %1695 = vmatmul.mubr.f32.gmra.mrb[0].mxu0 %v1557
  %v1696 = vpop.f32.mrb[0].mxu0
  %v1697 = vadd.f32 0.0, %v1696
  %v1698 = vpop.f32.mrb[0].mxu0
  %1699 = vmatprep.mubr.f32.mxu0 0.0
  %1700 = vmatmul.mubr.f32.gmra.mrb[0].mxu0 %v1560
  %v1701 = vpop.f32.mrb[0].mxu0
  %v1702 = vadd.f32 0.0, %v1701
  %v1703 = vpop.f32.mrb[0].mxu0
  %1704 = vmatprep.mubr.f32.mxu0 0.0
  %1705 = vmatmul.mubr.f32.gmra.mrb[0].mxu0 %v1563
  %v1706 = vpop.f32.mrb[0].mxu0
  %v1707 = vadd.f32 0.0, %v1706
  %v1708 = vpop.f32.mrb[0].mxu0
  %1709 = vdwg.mxu0
  %v1710 = vadd.f32 %v1481, %v1632
  %v1711 = vadd.f32 %v1482, %v1637
  %v1712 = vadd.f32 %v1483, %v1642
  %v1713 = vadd.f32 %v1484, %v1647
  %v1714 = vadd.f32 %v1485, %v1652
  %v1715 = vadd.f32 %v1486, %v1657
  %v1716 = vadd.f32 %v1487, %v1662
  %v1717 = vadd.f32 %v1488, %v1667
  %v1718 = vadd.f32 %v1489, %v1672
  %v1719 = vadd.f32 %v1490, %v1677
  %v1720 = vadd.f32 %v1491, %v1682
  %v1721 = vadd.f32 %v1492, %v1687
  %v1722 = vadd.f32 %v1493, %v1692
  %v1723 = vadd.f32 %v1494, %v1697
  %v1724 = vadd.f32 %v1495, %v1702
  %v1725 = vadd.f32 %v1496, %v1707
  %s1726 = scalar_lea.vmem [#allocation2], 32
  %v1727 = vld [vmem:[%s1726] sm:$0xff]
  %v1728 = vld [vmem:[%s1726 + $0x10] sm:$0xff]
  %v1729 = vld [vmem:[%s1726 + $0x20] sm:$0xff]
  %v1730 = vld [vmem:[%s1726 + $0x30] sm:$0xff]
  %v1731 = vld [vmem:[%s1726 + $0x40] sm:$0xff]
  %v1732 = vld [vmem:[%s1726 + $0x50] sm:$0xff]
  %v1733 = vld [vmem:[%s1726 + $0x60] sm:$0xff]
  %v1734 = vld [vmem:[%s1726 + $0x70] sm:$0xff]
  %v1735 = vld [vmem:[%s1726 + $0xa0] sm:$0xff]
  %v1736 = vld [vmem:[%s1726 + $0xb0] sm:$0xff]
  %v1737 = vld [vmem:[%s1726 + $0xc0] sm:$0xff]
  %v1738 = vld [vmem:[%s1726 + $0xd0] sm:$0xff]
  %v1739 = vld [vmem:[%s1726 + $0xe0] sm:$0xff]
  %v1740 = vld [vmem:[%s1726 + $0xf0] sm:$0xff]
  %v1741 = vld [vmem:[%s1726 + $0x100] sm:$0xff]
  %v1742 = vld [vmem:[%s1726 + $0x110] sm:$0xff]
  %v1743 = vld [vmem:[%s4 + $0xc0] sm:$0xff]
  %v1744 = vld [vmem:[%s4 + $0xc8] sm:$0xff]
  %v1745 = vld [vmem:[%s4 + $0xd0] sm:$0xff]
  %v1746 = vld [vmem:[%s4 + $0xd8] sm:$0xff]
  %v1748 = vsel %vm325, %v1727, 0
  %v1751 = vsel %vm325, %v1728, 0
  %v1754 = vsel %vm325, %v1729, 0
  %v1757 = vsel %vm325, %v1730, 0
  %v1760 = vsel %vm325, %v1731, 0
  %v1763 = vsel %vm325, %v1732, 0
  %v1766 = vsel %vm325, %v1733, 0
  %v1769 = vsel %vm325, %v1734, 0
  %v1772 = vsel %vm325, %v1735, 0
  %v1775 = vsel %vm325, %v1736, 0
  %v1778 = vsel %vm325, %v1737, 0
  %v1781 = vsel %vm325, %v1738, 0
  %v1784 = vsel %vm325, %v1739, 0
  %v1787 = vsel %vm325, %v1740, 0
  %v1790 = vsel %vm325, %v1741, 0
  %v1793 = vsel %vm325, %v1742, 0
  %1795 = vmatprep.subr.mxu0 0.0
  %1796 = vmatpush1.msra.mxu0 %v1743
  %1797 = vmatprep.subr.mxu0 0.0
  %1798 = vmatpush1.msra.mxu0 %v1744
  %1799 = vmatprep.subr.mxu0 0.0
  %1800 = vmatpush1.msra.mxu0 %v1745
  %1801 = vmatprep.subr.mxu0 0.0
  %1802 = vmatpush1.msra.mxu0 %v1746
  %1803 = vmatprep.subr.mxu0 0.0
  %1804 = vmatpush1.msra.mxu0 0.0
  %1805 = vmatprep.subr.mxu0 0.0
  %1806 = vmatpush1.msra.mxu0 0.0
  %1807 = vmatprep.subr.mxu0 0.0
  %1808 = vmatpush1.msra.mxu0 0.0
  %1809 = vmatprep.subr.mxu0 0.0
  %1810 = vmatpush1.msra.mxu0 0.0
  %1811 = vmatprep.subr.mxu0 0.0
  %1812 = vmatpush1.msra.mxu0 0.0
  %1813 = vmatprep.subr.mxu0 0.0
  %1814 = vmatpush1.msra.mxu0 0.0
  %1815 = vmatprep.subr.mxu0 0.0
  %1816 = vmatpush1.msra.mxu0 0.0
  %1817 = vmatprep.subr.mxu0 0.0
  %1818 = vmatpush1.msra.mxu0 0.0
  %1819 = vmatprep.subr.mxu0 0.0
  %1820 = vmatpush1.msra.mxu0 0.0
  %1821 = vmatprep.subr.mxu0 0.0
  %1822 = vmatpush1.msra.mxu0 0.0
  %1823 = vmatprep.subr.mxu0 0.0
  %1824 = vmatpush1.msra.mxu0 0.0
  %1825 = vmatprep.subr.mxu0 0.0
  %1826 = vmatpush1.msra.mxu0 0.0
  %1827 = vmatprep.subr.mxu0 0.0
  %1828 = vmatpush1.msra.mxu0 0.0
  %1829 = vmatprep.subr.mxu0 0.0
  %1830 = vmatpush1.msra.mxu0 0.0
  %1831 = vmatprep.subr.mxu0 0.0
  %1832 = vmatpush1.msra.mxu0 0.0
  %1833 = vmatprep.subr.mxu0 0.0
  %1834 = vmatpush1.msra.mxu0 0.0
  %1835 = vmatprep.subr.mxu0 0.0
  %1836 = vmatpush1.msra.mxu0 0.0
  %1837 = vmatprep.subr.mxu0 0.0
  %1838 = vmatpush1.msra.mxu0 0.0
  %1839 = vmatprep.subr.mxu0 0.0
  %1840 = vmatpush1.msra.mxu0 0.0
  %1841 = vmatprep.subr.mxu0 0.0
  %1842 = vmatpush1.msra.mxu0 0.0
  %1843 = vmatprep.subr.mxu0 0.0
  %1844 = vmatpush1.msra.mxu0 0.0
  %1845 = vmatprep.subr.mxu0 0.0
  %1846 = vmatpush1.msra.mxu0 0.0
  %1847 = vmatprep.subr.mxu0 0.0
  %1848 = vmatpush1.msra.mxu0 0.0
  %1849 = vmatprep.subr.mxu0 0.0
  %1850 = vmatpush1.msra.mxu0 0.0
  %1851 = vmatprep.subr.mxu0 0.0
  %1852 = vmatpush1.msra.mxu0 0.0
  %1853 = vmatprep.subr.mxu0 0.0
  %1854 = vmatpush1.msra.mxu0 0.0
  %1855 = vmatprep.subr.mxu0 0.0
  %1856 = vmatpush1.msra.mxu0 0.0
  %1857 = vmatprep.subr.mxu0 0.0
  %1858 = vmatpush1.msra.mxu0 0.0
  %1859 = vmatprep.mubr.f32.mxu0 0.0
  %1860 = vmatmul.mubr.f32.gmra.mrb[0].mxu0 %v1748
  %v1861 = vpop.f32.mrb[0].mxu0
  %v1862 = vadd.f32 0.0, %v1861
  %v1863 = vpop.f32.mrb[0].mxu0
  %1864 = vmatprep.mubr.f32.mxu0 0.0
  %1865 = vmatmul.mubr.f32.gmra.mrb[0].mxu0 %v1751
  %v1866 = vpop.f32.mrb[0].mxu0
  %v1867 = vadd.f32 0.0, %v1866
  %v1868 = vpop.f32.mrb[0].mxu0
  %1869 = vmatprep.mubr.f32.mxu0 0.0
  %1870 = vmatmul.mubr.f32.gmra.mrb[0].mxu0 %v1754
  %v1871 = vpop.f32.mrb[0].mxu0
  %v1872 = vadd.f32 0.0, %v1871
  %v1873 = vpop.f32.mrb[0].mxu0
  %1874 = vmatprep.mubr.f32.mxu0 0.0
  %1875 = vmatmul.mubr.f32.gmra.mrb[0].mxu0 %v1757
  %v1876 = vpop.f32.mrb[0].mxu0
  %v1877 = vadd.f32 0.0, %v1876
  %v1878 = vpop.f32.mrb[0].mxu0
  %1879 = vmatprep.mubr.f32.mxu0 0.0
  %1880 = vmatmul.mubr.f32.gmra.mrb[0].mxu0 %v1760
  %v1881 = vpop.f32.mrb[0].mxu0
  %v1882 = vadd.f32 0.0, %v1881
  %v1883 = vpop.f32.mrb[0].mxu0
  %1884 = vmatprep.mubr.f32.mxu0 0.0
  %1885 = vmatmul.mubr.f32.gmra.mrb[0].mxu0 %v1763
  %v1886 = vpop.f32.mrb[0].mxu0
  %v1887 = vadd.f32 0.0, %v1886
  %v1888 = vpop.f32.mrb[0].mxu0
  %1889 = vmatprep.mubr.f32.mxu0 0.0
  %1890 = vmatmul.mubr.f32.gmra.mrb[0].mxu0 %v1766
  %v1891 = vpop.f32.mrb[0].mxu0
  %v1892 = vadd.f32 0.0, %v1891
  %v1893 = vpop.f32.mrb[0].mxu0
  %1894 = vmatprep.mubr.f32.mxu0 0.0
  %1895 = vmatmul.mubr.f32.gmra.mrb[0].mxu0 %v1769
  %v1896 = vpop.f32.mrb[0].mxu0
  %v1897 = vadd.f32 0.0, %v1896
  %v1898 = vpop.f32.mrb[0].mxu0
  %1899 = vmatprep.mubr.f32.mxu0 0.0
  %1900 = vmatmul.mubr.f32.gmra.mrb[0].mxu0 %v1772
  %v1901 = vpop.f32.mrb[0].mxu0
  %v1902 = vadd.f32 0.0, %v1901
  %v1903 = vpop.f32.mrb[0].mxu0
  %1904 = vmatprep.mubr.f32.mxu0 0.0
  %1905 = vmatmul.mubr.f32.gmra.mrb[0].mxu0 %v1775
  %v1906 = vpop.f32.mrb[0].mxu0
  %v1907 = vadd.f32 0.0, %v1906
  %v1908 = vpop.f32.mrb[0].mxu0
  %1909 = vmatprep.mubr.f32.mxu0 0.0
  %1910 = vmatmul.mubr.f32.gmra.mrb[0].mxu0 %v1778
  %v1911 = vpop.f32.mrb[0].mxu0
  %v1912 = vadd.f32 0.0, %v1911
  %v1913 = vpop.f32.mrb[0].mxu0
  %1914 = vmatprep.mubr.f32.mxu0 0.0
  %1915 = vmatmul.mubr.f32.gmra.mrb[0].mxu0 %v1781
  %v1916 = vpop.f32.mrb[0].mxu0
  %v1917 = vadd.f32 0.0, %v1916
  %v1918 = vpop.f32.mrb[0].mxu0
  %1919 = vmatprep.mubr.f32.mxu0 0.0
  %1920 = vmatmul.mubr.f32.gmra.mrb[0].mxu0 %v1784
  %v1921 = vpop.f32.mrb[0].mxu0
  %v1922 = vadd.f32 0.0, %v1921
  %v1923 = vpop.f32.mrb[0].mxu0
  %1924 = vmatprep.mubr.f32.mxu0 0.0
  %1925 = vmatmul.mubr.f32.gmra.mrb[0].mxu0 %v1787
  %v1926 = vpop.f32.mrb[0].mxu0
  %v1927 = vadd.f32 0.0, %v1926
  %v1928 = vpop.f32.mrb[0].mxu0
  %1929 = vmatprep.mubr.f32.mxu0 0.0
  %1930 = vmatmul.mubr.f32.gmra.mrb[0].mxu0 %v1790
  %v1931 = vpop.f32.mrb[0].mxu0
  %v1932 = vadd.f32 0.0, %v1931
  %v1933 = vpop.f32.mrb[0].mxu0
  %1934 = vmatprep.mubr.f32.mxu0 0.0
  %1935 = vmatmul.mubr.f32.gmra.mrb[0].mxu0 %v1793
  %v1936 = vpop.f32.mrb[0].mxu0
  %v1937 = vadd.f32 0.0, %v1936
  %v1938 = vpop.f32.mrb[0].mxu0
  %1939 = vdwg.mxu0
  %v1940 = vadd.f32 %v1710, %v1862
  %v1941 = vadd.f32 %v1711, %v1867
  %v1942 = vadd.f32 %v1712, %v1872
  %v1943 = vadd.f32 %v1713, %v1877
  %v1944 = vadd.f32 %v1714, %v1882
  %v1945 = vadd.f32 %v1715, %v1887
  %v1946 = vadd.f32 %v1716, %v1892
  %v1947 = vadd.f32 %v1717, %v1897
  %v1948 = vadd.f32 %v1718, %v1902
  %v1949 = vadd.f32 %v1719, %v1907
  %v1950 = vadd.f32 %v1720, %v1912
  %v1951 = vadd.f32 %v1721, %v1917
  %v1952 = vadd.f32 %v1722, %v1922
  %v1953 = vadd.f32 %v1723, %v1927
  %v1954 = vadd.f32 %v1724, %v1932
  %v1955 = vadd.f32 %v1725, %v1937
  %v1956 = vld [vmem:[%s1726 + $0x1] sm:$0xff]
  %v1957 = vld [vmem:[%s1726 + $0x11] sm:$0xff]
  %v1958 = vld [vmem:[%s1726 + $0x21] sm:$0xff]
  %v1959 = vld [vmem:[%s1726 + $0x31] sm:$0xff]
  %v1960 = vld [vmem:[%s1726 + $0x41] sm:$0xff]
  %v1961 = vld [vmem:[%s1726 + $0x51] sm:$0xff]
  %v1962 = vld [vmem:[%s1726 + $0x61] sm:$0xff]
  %v1963 = vld [vmem:[%s1726 + $0x71] sm:$0xff]
  %v1964 = vld [vmem:[%s1726 + $0xa1] sm:$0xff]
  %v1965 = vld [vmem:[%s1726 + $0xb1] sm:$0xff]
  %v1966 = vld [vmem:[%s1726 + $0xc1] sm:$0xff]
  %v1967 = vld [vmem:[%s1726 + $0xd1] sm:$0xff]
  %v1968 = vld [vmem:[%s1726 + $0xe1] sm:$0xff]
  %v1969 = vld [vmem:[%s1726 + $0xf1] sm:$0xff]
  %v1970 = vld [vmem:[%s1726 + $0x101] sm:$0xff]
  %v1971 = vld [vmem:[%s1726 + $0x111] sm:$0xff]
  %v1972 = vld [vmem:[%s4 + $0xe0] sm:$0xff]
  %v1973 = vld [vmem:[%s4 + $0xe8] sm:$0xff]
  %v1974 = vld [vmem:[%s4 + $0xf0] sm:$0xff]
  %v1975 = vld [vmem:[%s4 + $0xf8] sm:$0xff]
  %v1977 = vsel %vm325, %v1956, 0
  %v1980 = vsel %vm325, %v1957, 0
  %v1983 = vsel %vm325, %v1958, 0
  %v1986 = vsel %vm325, %v1959, 0
  %v1989 = vsel %vm325, %v1960, 0
  %v1992 = vsel %vm325, %v1961, 0
  %v1995 = vsel %vm325, %v1962, 0
  %v1998 = vsel %vm325, %v1963, 0
  %v2001 = vsel %vm325, %v1964, 0
  %v2004 = vsel %vm325, %v1965, 0
  %v2007 = vsel %vm325, %v1966, 0
  %v2010 = vsel %vm325, %v1967, 0
  %v2013 = vsel %vm325, %v1968, 0
  %v2016 = vsel %vm325, %v1969, 0
  %v2019 = vsel %vm325, %v1970, 0
  %v2022 = vsel %vm325, %v1971, 0
  %2024 = vmatprep.subr.mxu0 0.0
  %2025 = vmatpush1.msra.mxu0 %v1972
  %2026 = vmatprep.subr.mxu0 0.0
  %2027 = vmatpush1.msra.mxu0 %v1973
  %2028 = vmatprep.subr.mxu0 0.0
  %2029 = vmatpush1.msra.mxu0 %v1974
  %2030 = vmatprep.subr.mxu0 0.0
  %2031 = vmatpush1.msra.mxu0 %v1975
  %2032 = vmatprep.subr.mxu0 0.0
  %2033 = vmatpush1.msra.mxu0 0.0
  %2034 = vmatprep.subr.mxu0 0.0
  %2035 = vmatpush1.msra.mxu0 0.0
  %2036 = vmatprep.subr.mxu0 0.0
  %2037 = vmatpush1.msra.mxu0 0.0
  %2038 = vmatprep.subr.mxu0 0.0
  %2039 = vmatpush1.msra.mxu0 0.0
  %2040 = vmatprep.subr.mxu0 0.0
  %2041 = vmatpush1.msra.mxu0 0.0
  %2042 = vmatprep.subr.mxu0 0.0
  %2043 = vmatpush1.msra.mxu0 0.0
  %2044 = vmatprep.subr.mxu0 0.0
  %2045 = vmatpush1.msra.mxu0 0.0
  %2046 = vmatprep.subr.mxu0 0.0
  %2047 = vmatpush1.msra.mxu0 0.0
  %2048 = vmatprep.subr.mxu0 0.0
  %2049 = vmatpush1.msra.mxu0 0.0
  %2050 = vmatprep.subr.mxu0 0.0
  %2051 = vmatpush1.msra.mxu0 0.0
  %2052 = vmatprep.subr.mxu0 0.0
  %2053 = vmatpush1.msra.mxu0 0.0
  %2054 = vmatprep.subr.mxu0 0.0
  %2055 = vmatpush1.msra.mxu0 0.0
  %2056 = vmatprep.subr.mxu0 0.0
  %2057 = vmatpush1.msra.mxu0 0.0
  %2058 = vmatprep.subr.mxu0 0.0
  %2059 = vmatpush1.msra.mxu0 0.0
  %2060 = vmatprep.subr.mxu0 0.0
  %2061 = vmatpush1.msra.mxu0 0.0
  %2062 = vmatprep.subr.mxu0 0.0
  %2063 = vmatpush1.msra.mxu0 0.0
  %2064 = vmatprep.subr.mxu0 0.0
  %2065 = vmatpush1.msra.mxu0 0.0
  %2066 = vmatprep.subr.mxu0 0.0
  %2067 = vmatpush1.msra.mxu0 0.0
  %2068 = vmatprep.subr.mxu0 0.0
  %2069 = vmatpush1.msra.mxu0 0.0
  %2070 = vmatprep.subr.mxu0 0.0
  %2071 = vmatpush1.msra.mxu0 0.0
  %2072 = vmatprep.subr.mxu0 0.0
  %2073 = vmatpush1.msra.mxu0 0.0
  %2074 = vmatprep.subr.mxu0 0.0
  %2075 = vmatpush1.msra.mxu0 0.0
  %2076 = vmatprep.subr.mxu0 0.0
  %2077 = vmatpush1.msra.mxu0 0.0
  %2078 = vmatprep.subr.mxu0 0.0
  %2079 = vmatpush1.msra.mxu0 0.0
  %2080 = vmatprep.subr.mxu0 0.0
  %2081 = vmatpush1.msra.mxu0 0.0
  %2082 = vmatprep.subr.mxu0 0.0
  %2083 = vmatpush1.msra.mxu0 0.0
  %2084 = vmatprep.subr.mxu0 0.0
  %2085 = vmatpush1.msra.mxu0 0.0
  %2086 = vmatprep.subr.mxu0 0.0
  %2087 = vmatpush1.msra.mxu0 0.0
  %2088 = vmatprep.mubr.f32.mxu0 0.0
  %2089 = vmatmul.mubr.f32.gmra.mrb[0].mxu0 %v1977
  %v2090 = vpop.f32.mrb[0].mxu0
  %v2091 = vadd.f32 0.0, %v2090
  %v2092 = vpop.f32.mrb[0].mxu0
  %2093 = vmatprep.mubr.f32.mxu0 0.0
  %2094 = vmatmul.mubr.f32.gmra.mrb[0].mxu0 %v1980
  %v2095 = vpop.f32.mrb[0].mxu0
  %v2096 = vadd.f32 0.0, %v2095
  %v2097 = vpop.f32.mrb[0].mxu0
  %2098 = vmatprep.mubr.f32.mxu0 0.0
  %2099 = vmatmul.mubr.f32.gmra.mrb[0].mxu0 %v1983
  %v2100 = vpop.f32.mrb[0].mxu0
  %v2101 = vadd.f32 0.0, %v2100
  %v2102 = vpop.f32.mrb[0].mxu0
  %2103 = vmatprep.mubr.f32.mxu0 0.0
  %2104 = vmatmul.mubr.f32.gmra.mrb[0].mxu0 %v1986
  %v2105 = vpop.f32.mrb[0].mxu0
  %v2106 = vadd.f32 0.0, %v2105
  %v2107 = vpop.f32.mrb[0].mxu0
  %2108 = vmatprep.mubr.f32.mxu0 0.0
  %2109 = vmatmul.mubr.f32.gmra.mrb[0].mxu0 %v1989
  %v2110 = vpop.f32.mrb[0].mxu0
  %v2111 = vadd.f32 0.0, %v2110
  %v2112 = vpop.f32.mrb[0].mxu0
  %2113 = vmatprep.mubr.f32.mxu0 0.0
  %2114 = vmatmul.mubr.f32.gmra.mrb[0].mxu0 %v1992
  %v2115 = vpop.f32.mrb[0].mxu0
  %v2116 = vadd.f32 0.0, %v2115
  %v2117 = vpop.f32.mrb[0].mxu0
  %2118 = vmatprep.mubr.f32.mxu0 0.0
  %2119 = vmatmul.mubr.f32.gmra.mrb[0].mxu0 %v1995
  %v2120 = vpop.f32.mrb[0].mxu0
  %v2121 = vadd.f32 0.0, %v2120
  %v2122 = vpop.f32.mrb[0].mxu0
  %2123 = vmatprep.mubr.f32.mxu0 0.0
  %2124 = vmatmul.mubr.f32.gmra.mrb[0].mxu0 %v1998
  %v2125 = vpop.f32.mrb[0].mxu0
  %v2126 = vadd.f32 0.0, %v2125
  %v2127 = vpop.f32.mrb[0].mxu0
  %2128 = vmatprep.mubr.f32.mxu0 0.0
  %2129 = vmatmul.mubr.f32.gmra.mrb[0].mxu0 %v2001
  %v2130 = vpop.f32.mrb[0].mxu0
  %v2131 = vadd.f32 0.0, %v2130
  %v2132 = vpop.f32.mrb[0].mxu0
  %2133 = vmatprep.mubr.f32.mxu0 0.0
  %2134 = vmatmul.mubr.f32.gmra.mrb[0].mxu0 %v2004
  %v2135 = vpop.f32.mrb[0].mxu0
  %v2136 = vadd.f32 0.0, %v2135
  %v2137 = vpop.f32.mrb[0].mxu0
  %2138 = vmatprep.mubr.f32.mxu0 0.0
  %2139 = vmatmul.mubr.f32.gmra.mrb[0].mxu0 %v2007
  %v2140 = vpop.f32.mrb[0].mxu0
  %v2141 = vadd.f32 0.0, %v2140
  %v2142 = vpop.f32.mrb[0].mxu0
  %2143 = vmatprep.mubr.f32.mxu0 0.0
  %2144 = vmatmul.mubr.f32.gmra.mrb[0].mxu0 %v2010
  %v2145 = vpop.f32.mrb[0].mxu0
  %v2146 = vadd.f32 0.0, %v2145
  %v2147 = vpop.f32.mrb[0].mxu0
  %2148 = vmatprep.mubr.f32.mxu0 0.0
  %2149 = vmatmul.mubr.f32.gmra.mrb[0].mxu0 %v2013
  %v2150 = vpop.f32.mrb[0].mxu0
  %v2151 = vadd.f32 0.0, %v2150
  %v2152 = vpop.f32.mrb[0].mxu0
  %2153 = vmatprep.mubr.f32.mxu0 0.0
  %2154 = vmatmul.mubr.f32.gmra.mrb[0].mxu0 %v2016
  %v2155 = vpop.f32.mrb[0].mxu0
  %v2156 = vadd.f32 0.0, %v2155
  %v2157 = vpop.f32.mrb[0].mxu0
  %2158 = vmatprep.mubr.f32.mxu0 0.0
  %2159 = vmatmul.mubr.f32.gmra.mrb[0].mxu0 %v2019
  %v2160 = vpop.f32.mrb[0].mxu0
  %v2161 = vadd.f32 0.0, %v2160
  %v2162 = vpop.f32.mrb[0].mxu0
  %2163 = vmatprep.mubr.f32.mxu0 0.0
  %2164 = vmatmul.mubr.f32.gmra.mrb[0].mxu0 %v2022
  %v2165 = vpop.f32.mrb[0].mxu0
  %v2166 = vadd.f32 0.0, %v2165
  %v2167 = vpop.f32.mrb[0].mxu0
  %2168 = vdwg.mxu0
  %v2169 = vadd.f32 %v1940, %v2091
  %v2170 = vadd.f32 %v1941, %v2096
  %v2171 = vadd.f32 %v1942, %v2101
  %v2172 = vadd.f32 %v1943, %v2106
  %v2173 = vadd.f32 %v1944, %v2111
  %v2174 = vadd.f32 %v1945, %v2116
  %v2175 = vadd.f32 %v1946, %v2121
  %v2176 = vadd.f32 %v1947, %v2126
  %v2177 = vadd.f32 %v1948, %v2131
  %v2178 = vadd.f32 %v1949, %v2136
  %v2179 = vadd.f32 %v1950, %v2141
  %v2180 = vadd.f32 %v1951, %v2146
  %v2181 = vadd.f32 %v1952, %v2151
  %v2182 = vadd.f32 %v1953, %v2156
  %v2183 = vadd.f32 %v1954, %v2161
  %v2184 = vadd.f32 %v1955, %v2166
  %v2185 = vld [vmem:[%s1726 + $0x2] sm:$0xff]
  %v2186 = vld [vmem:[%s1726 + $0x12] sm:$0xff]
  %v2187 = vld [vmem:[%s1726 + $0x22] sm:$0xff]
  %v2188 = vld [vmem:[%s1726 + $0x32] sm:$0xff]
  %v2189 = vld [vmem:[%s1726 + $0x42] sm:$0xff]
  %v2190 = vld [vmem:[%s1726 + $0x52] sm:$0xff]
  %v2191 = vld [vmem:[%s1726 + $0x62] sm:$0xff]
  %v2192 = vld [vmem:[%s1726 + $0x72] sm:$0xff]
  %v2193 = vld [vmem:[%s1726 + $0xa2] sm:$0xff]
  %v2194 = vld [vmem:[%s1726 + $0xb2] sm:$0xff]
  %v2195 = vld [vmem:[%s1726 + $0xc2] sm:$0xff]
  %v2196 = vld [vmem:[%s1726 + $0xd2] sm:$0xff]
  %v2197 = vld [vmem:[%s1726 + $0xe2] sm:$0xff]
  %v2198 = vld [vmem:[%s1726 + $0xf2] sm:$0xff]
  %v2199 = vld [vmem:[%s1726 + $0x102] sm:$0xff]
  %v2200 = vld [vmem:[%s1726 + $0x112] sm:$0xff]
  %v2201 = vld [vmem:[%s4 + $0x100] sm:$0xff]
  %v2202 = vld [vmem:[%s4 + $0x108] sm:$0xff]
  %v2203 = vld [vmem:[%s4 + $0x110] sm:$0xff]
  %v2204 = vld [vmem:[%s4 + $0x118] sm:$0xff]
  %v2206 = vsel %vm325, %v2185, 0
  %v2209 = vsel %vm325, %v2186, 0
  %v2212 = vsel %vm325, %v2187, 0
  %v2215 = vsel %vm325, %v2188, 0
  %v2218 = vsel %vm325, %v2189, 0
  %v2221 = vsel %vm325, %v2190, 0
  %v2224 = vsel %vm325, %v2191, 0
  %v2227 = vsel %vm325, %v2192, 0
  %v2230 = vsel %vm325, %v2193, 0
  %v2233 = vsel %vm325, %v2194, 0
  %v2236 = vsel %vm325, %v2195, 0
  %v2239 = vsel %vm325, %v2196, 0
  %v2242 = vsel %vm325, %v2197, 0
  %v2245 = vsel %vm325, %v2198, 0
  %v2248 = vsel %vm325, %v2199, 0
  %v2251 = vsel %vm325, %v2200, 0
  %2253 = vmatprep.subr.mxu0 0.0
  %2254 = vmatpush1.msra.mxu0 %v2201
  %2255 = vmatprep.subr.mxu0 0.0
  %2256 = vmatpush1.msra.mxu0 %v2202
  %2257 = vmatprep.subr.mxu0 0.0
  %2258 = vmatpush1.msra.mxu0 %v2203
  %2259 = vmatprep.subr.mxu0 0.0
  %2260 = vmatpush1.msra.mxu0 %v2204
  %2261 = vmatprep.subr.mxu0 0.0
  %2262 = vmatpush1.msra.mxu0 0.0
  %2263 = vmatprep.subr.mxu0 0.0
  %2264 = vmatpush1.msra.mxu0 0.0
  %2265 = vmatprep.subr.mxu0 0.0
  %2266 = vmatpush1.msra.mxu0 0.0
  %2267 = vmatprep.subr.mxu0 0.0
  %2268 = vmatpush1.msra.mxu0 0.0
  %2269 = vmatprep.subr.mxu0 0.0
  %2270 = vmatpush1.msra.mxu0 0.0
  %2271 = vmatprep.subr.mxu0 0.0
  %2272 = vmatpush1.msra.mxu0 0.0
  %2273 = vmatprep.subr.mxu0 0.0
  %2274 = vmatpush1.msra.mxu0 0.0
  %2275 = vmatprep.subr.mxu0 0.0
  %2276 = vmatpush1.msra.mxu0 0.0
  %2277 = vmatprep.subr.mxu0 0.0
  %2278 = vmatpush1.msra.mxu0 0.0
  %2279 = vmatprep.subr.mxu0 0.0
  %2280 = vmatpush1.msra.mxu0 0.0
  %2281 = vmatprep.subr.mxu0 0.0
  %2282 = vmatpush1.msra.mxu0 0.0
  %2283 = vmatprep.subr.mxu0 0.0
  %2284 = vmatpush1.msra.mxu0 0.0
  %2285 = vmatprep.subr.mxu0 0.0
  %2286 = vmatpush1.msra.mxu0 0.0
  %2287 = vmatprep.subr.mxu0 0.0
  %2288 = vmatpush1.msra.mxu0 0.0
  %2289 = vmatprep.subr.mxu0 0.0
  %2290 = vmatpush1.msra.mxu0 0.0
  %2291 = vmatprep.subr.mxu0 0.0
  %2292 = vmatpush1.msra.mxu0 0.0
  %2293 = vmatprep.subr.mxu0 0.0
  %2294 = vmatpush1.msra.mxu0 0.0
  %2295 = vmatprep.subr.mxu0 0.0
  %2296 = vmatpush1.msra.mxu0 0.0
  %2297 = vmatprep.subr.mxu0 0.0
  %2298 = vmatpush1.msra.mxu0 0.0
  %2299 = vmatprep.subr.mxu0 0.0
  %2300 = vmatpush1.msra.mxu0 0.0
  %2301 = vmatprep.subr.mxu0 0.0
  %2302 = vmatpush1.msra.mxu0 0.0
  %2303 = vmatprep.subr.mxu0 0.0
  %2304 = vmatpush1.msra.mxu0 0.0
  %2305 = vmatprep.subr.mxu0 0.0
  %2306 = vmatpush1.msra.mxu0 0.0
  %2307 = vmatprep.subr.mxu0 0.0
  %2308 = vmatpush1.msra.mxu0 0.0
  %2309 = vmatprep.subr.mxu0 0.0
  %2310 = vmatpush1.msra.mxu0 0.0
  %2311 = vmatprep.subr.mxu0 0.0
  %2312 = vmatpush1.msra.mxu0 0.0
  %2313 = vmatprep.subr.mxu0 0.0
  %2314 = vmatpush1.msra.mxu0 0.0
  %2315 = vmatprep.subr.mxu0 0.0
  %2316 = vmatpush1.msra.mxu0 0.0
  %2317 = vmatprep.mubr.f32.mxu0 0.0
  %2318 = vmatmul.mubr.f32.gmra.mrb[0].mxu0 %v2206
  %v2319 = vpop.f32.mrb[0].mxu0
  %v2320 = vadd.f32 0.0, %v2319
  %v2321 = vpop.f32.mrb[0].mxu0
  %2322 = vmatprep.mubr.f32.mxu0 0.0
  %2323 = vmatmul.mubr.f32.gmra.mrb[0].mxu0 %v2209
  %v2324 = vpop.f32.mrb[0].mxu0
  %v2325 = vadd.f32 0.0, %v2324
  %v2326 = vpop.f32.mrb[0].mxu0
  %2327 = vmatprep.mubr.f32.mxu0 0.0
  %2328 = vmatmul.mubr.f32.gmra.mrb[0].mxu0 %v2212
  %v2329 = vpop.f32.mrb[0].mxu0
  %v2330 = vadd.f32 0.0, %v2329
  %v2331 = vpop.f32.mrb[0].mxu0
  %2332 = vmatprep.mubr.f32.mxu0 0.0
  %2333 = vmatmul.mubr.f32.gmra.mrb[0].mxu0 %v2215
  %v2334 = vpop.f32.mrb[0].mxu0
  %v2335 = vadd.f32 0.0, %v2334
  %v2336 = vpop.f32.mrb[0].mxu0
  %2337 = vmatprep.mubr.f32.mxu0 0.0
  %2338 = vmatmul.mubr.f32.gmra.mrb[0].mxu0 %v2218
  %v2339 = vpop.f32.mrb[0].mxu0
  %v2340 = vadd.f32 0.0, %v2339
  %v2341 = vpop.f32.mrb[0].mxu0
  %2342 = vmatprep.mubr.f32.mxu0 0.0
  %2343 = vmatmul.mubr.f32.gmra.mrb[0].mxu0 %v2221
  %v2344 = vpop.f32.mrb[0].mxu0
  %v2345 = vadd.f32 0.0, %v2344
  %v2346 = vpop.f32.mrb[0].mxu0
  %2347 = vmatprep.mubr.f32.mxu0 0.0
  %2348 = vmatmul.mubr.f32.gmra.mrb[0].mxu0 %v2224
  %v2349 = vpop.f32.mrb[0].mxu0
  %v2350 = vadd.f32 0.0, %v2349
  %v2351 = vpop.f32.mrb[0].mxu0
  %2352 = vmatprep.mubr.f32.mxu0 0.0
  %2353 = vmatmul.mubr.f32.gmra.mrb[0].mxu0 %v2227
  %v2354 = vpop.f32.mrb[0].mxu0
  %v2355 = vadd.f32 0.0, %v2354
  %v2356 = vpop.f32.mrb[0].mxu0
  %2357 = vmatprep.mubr.f32.mxu0 0.0
  %2358 = vmatmul.mubr.f32.gmra.mrb[0].mxu0 %v2230
  %v2359 = vpop.f32.mrb[0].mxu0
  %v2360 = vadd.f32 0.0, %v2359
  %v2361 = vpop.f32.mrb[0].mxu0
  %2362 = vmatprep.mubr.f32.mxu0 0.0
  %2363 = vmatmul.mubr.f32.gmra.mrb[0].mxu0 %v2233
  %v2364 = vpop.f32.mrb[0].mxu0
  %v2365 = vadd.f32 0.0, %v2364
  %v2366 = vpop.f32.mrb[0].mxu0
  %2367 = vmatprep.mubr.f32.mxu0 0.0
  %2368 = vmatmul.mubr.f32.gmra.mrb[0].mxu0 %v2236
  %v2369 = vpop.f32.mrb[0].mxu0
  %v2370 = vadd.f32 0.0, %v2369
  %v2371 = vpop.f32.mrb[0].mxu0
  %2372 = vmatprep.mubr.f32.mxu0 0.0
  %2373 = vmatmul.mubr.f32.gmra.mrb[0].mxu0 %v2239
  %v2374 = vpop.f32.mrb[0].mxu0
  %v2375 = vadd.f32 0.0, %v2374
  %v2376 = vpop.f32.mrb[0].mxu0
  %2377 = vmatprep.mubr.f32.mxu0 0.0
  %2378 = vmatmul.mubr.f32.gmra.mrb[0].mxu0 %v2242
  %v2379 = vpop.f32.mrb[0].mxu0
  %v2380 = vadd.f32 0.0, %v2379
  %v2381 = vpop.f32.mrb[0].mxu0
  %2382 = vmatprep.mubr.f32.mxu0 0.0
  %2383 = vmatmul.mubr.f32.gmra.mrb[0].mxu0 %v2245
  %v2384 = vpop.f32.mrb[0].mxu0
  %v2385 = vadd.f32 0.0, %v2384
  %v2386 = vpop.f32.mrb[0].mxu0
  %2387 = vmatprep.mubr.f32.mxu0 0.0
  %2388 = vmatmul.mubr.f32.gmra.mrb[0].mxu0 %v2248
  %v2389 = vpop.f32.mrb[0].mxu0
  %v2390 = vadd.f32 0.0, %v2389
  %v2391 = vpop.f32.mrb[0].mxu0
  %2392 = vmatprep.mubr.f32.mxu0 0.0
  %2393 = vmatmul.mubr.f32.gmra.mrb[0].mxu0 %v2251
  %v2394 = vpop.f32.mrb[0].mxu0
  %v2395 = vadd.f32 0.0, %v2394
  %v2396 = vpop.f32.mrb[0].mxu0
  %2397 = vdwg.mxu0
  %v2398 = vadd.f32 %v2169, %v2320
  %v2399 = vadd.f32 %v2170, %v2325
  %v2400 = vadd.f32 %v2171, %v2330
  %v2401 = vadd.f32 %v2172, %v2335
  %v2402 = vadd.f32 %v2173, %v2340
  %v2403 = vadd.f32 %v2174, %v2345
  %v2404 = vadd.f32 %v2175, %v2350
  %v2405 = vadd.f32 %v2176, %v2355
  %v2406 = vadd.f32 %v2177, %v2360
  %v2407 = vadd.f32 %v2178, %v2365
  %v2408 = vadd.f32 %v2179, %v2370
  %v2409 = vadd.f32 %v2180, %v2375
  %v2410 = vadd.f32 %v2181, %v2380
  %v2411 = vadd.f32 %v2182, %v2385
  %v2412 = vadd.f32 %v2183, %v2390
  %v2413 = vadd.f32 %v2184, %v2395
  %v2414 = vld [vmem:[%s5] sm:$0x1]
  %v2416 = vlaneseq
  %v2417 = vshrl.u32 %v2416, 7
  %v2418 = vsub.s32 0, %v2417
  %v2419 = vrot.slane %v2414, %v2418
  %v2421 = vmul.f32 %v2398, %v2419
  %v2422 = vmul.f32 %v2399, %v2419
  %v2423 = vmul.f32 %v2400, %v2419
  %v2424 = vmul.f32 %v2401, %v2419
  %v2425 = vmul.f32 %v2402, %v2419
  %v2426 = vmul.f32 %v2403, %v2419
  %v2427 = vmul.f32 %v2404, %v2419
  %v2428 = vmul.f32 %v2405, %v2419
  %v2429 = vmul.f32 %v2406, %v2419
  %v2430 = vmul.f32 %v2407, %v2419
  %v2431 = vmul.f32 %v2408, %v2419
  %v2432 = vmul.f32 %v2409, %v2419
  %v2433 = vmul.f32 %v2410, %v2419
  %v2434 = vmul.f32 %v2411, %v2419
  %v2435 = vmul.f32 %v2412, %v2419
  %v2436 = vmul.f32 %v2413, %v2419
  %v2437 = vld [vmem:[%s6] sm:$0x1]
  %v2439 = vlaneseq
  %v2440 = vshrl.u32 %v2439, 7
  %v2441 = vsub.s32 0, %v2440
  %v2442 = vrot.slane %v2437, %v2441
  %v2444 = vadd.f32 %v2421, %v2442
  %v2445 = vadd.f32 %v2422, %v2442
  %v2446 = vadd.f32 %v2423, %v2442
  %v2447 = vadd.f32 %v2424, %v2442
  %v2448 = vadd.f32 %v2425, %v2442
  %v2449 = vadd.f32 %v2426, %v2442
  %v2450 = vadd.f32 %v2427, %v2442
  %v2451 = vadd.f32 %v2428, %v2442
  %v2452 = vadd.f32 %v2429, %v2442
  %v2453 = vadd.f32 %v2430, %v2442
  %v2454 = vadd.f32 %v2431, %v2442
  %v2455 = vadd.f32 %v2432, %v2442
  %v2456 = vadd.f32 %v2433, %v2442
  %v2457 = vadd.f32 %v2434, %v2442
  %v2458 = vadd.f32 %v2435, %v2442
  %v2459 = vadd.f32 %v2436, %v2442
  %v2460 = vmax.f32 %v2444, 0.0
  %v2461 = vmax.f32 %v2445, 0.0
  %v2462 = vmax.f32 %v2446, 0.0
  %v2463 = vmax.f32 %v2447, 0.0
  %v2464 = vmax.f32 %v2448, 0.0
  %v2465 = vmax.f32 %v2449, 0.0
  %v2466 = vmax.f32 %v2450, 0.0
  %v2467 = vmax.f32 %v2451, 0.0
  %v2468 = vmax.f32 %v2452, 0.0
  %v2469 = vmax.f32 %v2453, 0.0
  %v2470 = vmax.f32 %v2454, 0.0
  %v2471 = vmax.f32 %v2455, 0.0
  %v2472 = vmax.f32 %v2456, 0.0
  %v2473 = vmax.f32 %v2457, 0.0
  %v2474 = vmax.f32 %v2458, 0.0
  %v2475 = vmax.f32 %v2459, 0.0
  %v2476 = vld [vmem:[%s7] sm:$0xff]
  %v2477 = vld [vmem:[%s7 + $0x8] sm:$0xff]
  %v2478 = vld [vmem:[%s7 + $0x10] sm:$0xff]
  %v2479 = vld [vmem:[%s7 + $0x18] sm:$0xff]
  %v2480 = vld [vmem:[%s7 + $0x20] sm:$0xff]
  %v2481 = vld [vmem:[%s7 + $0x28] sm:$0xff]
  %v2482 = vld [vmem:[%s7 + $0x30] sm:$0xff]
  %v2483 = vld [vmem:[%s7 + $0x38] sm:$0xff]
  %vm2484 = vcmask 523264
  %v2486 = vsel %vm2484, %v2460, 0
  %v2489 = vsel %vm2484, %v2461, 0
  %v2492 = vsel %vm2484, %v2462, 0
  %v2495 = vsel %vm2484, %v2463, 0
  %v2498 = vsel %vm2484, %v2464, 0
  %v2501 = vsel %vm2484, %v2465, 0
  %v2504 = vsel %vm2484, %v2466, 0
  %v2507 = vsel %vm2484, %v2467, 0
  %v2510 = vsel %vm2484, %v2468, 0
  %v2513 = vsel %vm2484, %v2469, 0
  %v2516 = vsel %vm2484, %v2470, 0
  %v2519 = vsel %vm2484, %v2471, 0
  %v2522 = vsel %vm2484, %v2472, 0
  %v2525 = vsel %vm2484, %v2473, 0
  %v2528 = vsel %vm2484, %v2474, 0
  %v2531 = vsel %vm2484, %v2475, 0
  %2533 = vmatprep.subr.mxu0 0.0
  %2534 = vmatpush1.msra.mxu0 %v2476
  %2535 = vmatprep.subr.mxu0 0.0
  %2536 = vmatpush1.msra.mxu0 %v2477
  %2537 = vmatprep.subr.mxu0 0.0
  %2538 = vmatpush1.msra.mxu0 %v2478
  %2539 = vmatprep.subr.mxu0 0.0
  %2540 = vmatpush1.msra.mxu0 %v2479
  %2541 = vmatprep.subr.mxu0 0.0
  %2542 = vmatpush1.msra.mxu0 %v2480
  %2543 = vmatprep.subr.mxu0 0.0
  %2544 = vmatpush1.msra.mxu0 %v2481
  %2545 = vmatprep.subr.mxu0 0.0
  %2546 = vmatpush1.msra.mxu0 %v2482
  %2547 = vmatprep.subr.mxu0 0.0
  %2548 = vmatpush1.msra.mxu0 %v2483
  %2549 = vmatprep.subr.mxu0 0.0
  %2550 = vmatpush1.msra.mxu0 0.0
  %2551 = vmatprep.subr.mxu0 0.0
  %2552 = vmatpush1.msra.mxu0 0.0
  %2553 = vmatprep.subr.mxu0 0.0
  %2554 = vmatpush1.msra.mxu0 0.0
  %2555 = vmatprep.subr.mxu0 0.0
  %2556 = vmatpush1.msra.mxu0 0.0
  %2557 = vmatprep.subr.mxu0 0.0
  %2558 = vmatpush1.msra.mxu0 0.0
  %2559 = vmatprep.subr.mxu0 0.0
  %2560 = vmatpush1.msra.mxu0 0.0
  %2561 = vmatprep.subr.mxu0 0.0
  %2562 = vmatpush1.msra.mxu0 0.0
  %2563 = vmatprep.subr.mxu0 0.0
  %2564 = vmatpush1.msra.mxu0 0.0
  %2565 = vmatprep.subr.mxu0 0.0
  %2566 = vmatpush1.msra.mxu0 0.0
  %2567 = vmatprep.subr.mxu0 0.0
  %2568 = vmatpush1.msra.mxu0 0.0
  %2569 = vmatprep.subr.mxu0 0.0
  %2570 = vmatpush1.msra.mxu0 0.0
  %2571 = vmatprep.subr.mxu0 0.0
  %2572 = vmatpush1.msra.mxu0 0.0
  %2573 = vmatprep.subr.mxu0 0.0
  %2574 = vmatpush1.msra.mxu0 0.0
  %2575 = vmatprep.subr.mxu0 0.0
  %2576 = vmatpush1.msra.mxu0 0.0
  %2577 = vmatprep.subr.mxu0 0.0
  %2578 = vmatpush1.msra.mxu0 0.0
  %2579 = vmatprep.subr.mxu0 0.0
  %2580 = vmatpush1.msra.mxu0 0.0
  %2581 = vmatprep.subr.mxu0 0.0
  %2582 = vmatpush1.msra.mxu0 0.0
  %2583 = vmatprep.subr.mxu0 0.0
  %2584 = vmatpush1.msra.mxu0 0.0
  %2585 = vmatprep.subr.mxu0 0.0
  %2586 = vmatpush1.msra.mxu0 0.0
  %2587 = vmatprep.subr.mxu0 0.0
  %2588 = vmatpush1.msra.mxu0 0.0
  %2589 = vmatprep.subr.mxu0 0.0
  %2590 = vmatpush1.msra.mxu0 0.0
  %2591 = vmatprep.subr.mxu0 0.0
  %2592 = vmatpush1.msra.mxu0 0.0
  %2593 = vmatprep.subr.mxu0 0.0
  %2594 = vmatpush1.msra.mxu0 0.0
  %2595 = vmatprep.subr.mxu0 0.0
  %2596 = vmatpush1.msra.mxu0 0.0
  %2597 = vmatprep.mubr.f32.mxu0 0.0
  %2598 = vmatmul.mubr.f32.gmra.mrb[0].mxu0 %v2486
  %v2599 = vpop.f32.mrb[0].mxu0
  %v2600 = vadd.f32 0.0, %v2599
  %v2601 = vpop.f32.mrb[0].mxu0
  %2602 = vmatprep.mubr.f32.mxu0 0.0
  %2603 = vmatmul.mubr.f32.gmra.mrb[0].mxu0 %v2489
  %v2604 = vpop.f32.mrb[0].mxu0
  %v2605 = vadd.f32 0.0, %v2604
  %v2606 = vpop.f32.mrb[0].mxu0
  %2607 = vmatprep.mubr.f32.mxu0 0.0
  %2608 = vmatmul.mubr.f32.gmra.mrb[0].mxu0 %v2492
  %v2609 = vpop.f32.mrb[0].mxu0
  %v2610 = vadd.f32 0.0, %v2609
  %v2611 = vpop.f32.mrb[0].mxu0
  %2612 = vmatprep.mubr.f32.mxu0 0.0
  %2613 = vmatmul.mubr.f32.gmra.mrb[0].mxu0 %v2495
  %v2614 = vpop.f32.mrb[0].mxu0
  %v2615 = vadd.f32 0.0, %v2614
  %v2616 = vpop.f32.mrb[0].mxu0
  %2617 = vmatprep.mubr.f32.mxu0 0.0
  %2618 = vmatmul.mubr.f32.gmra.mrb[0].mxu0 %v2498
  %v2619 = vpop.f32.mrb[0].mxu0
  %v2620 = vadd.f32 0.0, %v2619
  %v2621 = vpop.f32.mrb[0].mxu0
  %2622 = vmatprep.mubr.f32.mxu0 0.0
  %2623 = vmatmul.mubr.f32.gmra.mrb[0].mxu0 %v2501
  %v2624 = vpop.f32.mrb[0].mxu0
  %v2625 = vadd.f32 0.0, %v2624
  %v2626 = vpop.f32.mrb[0].mxu0
  %2627 = vmatprep.mubr.f32.mxu0 0.0
  %2628 = vmatmul.mubr.f32.gmra.mrb[0].mxu0 %v2504
  %v2629 = vpop.f32.mrb[0].mxu0
  %v2630 = vadd.f32 0.0, %v2629
  %v2631 = vpop.f32.mrb[0].mxu0
  %2632 = vmatprep.mubr.f32.mxu0 0.0
  %2633 = vmatmul.mubr.f32.gmra.mrb[0].mxu0 %v2507
  %v2634 = vpop.f32.mrb[0].mxu0
  %v2635 = vadd.f32 0.0, %v2634
  %v2636 = vpop.f32.mrb[0].mxu0
  %2637 = vmatprep.mubr.f32.mxu0 0.0
  %2638 = vmatmul.mubr.f32.gmra.mrb[0].mxu0 %v2510
  %v2639 = vpop.f32.mrb[0].mxu0
  %v2640 = vadd.f32 0.0, %v2639
  %v2641 = vpop.f32.mrb[0].mxu0
  %2642 = vmatprep.mubr.f32.mxu0 0.0
  %2643 = vmatmul.mubr.f32.gmra.mrb[0].mxu0 %v2513
  %v2644 = vpop.f32.mrb[0].mxu0
  %v2645 = vadd.f32 0.0, %v2644
  %v2646 = vpop.f32.mrb[0].mxu0
  %2647 = vmatprep.mubr.f32.mxu0 0.0
  %2648 = vmatmul.mubr.f32.gmra.mrb[0].mxu0 %v2516
  %v2649 = vpop.f32.mrb[0].mxu0
  %v2650 = vadd.f32 0.0, %v2649
  %v2651 = vpop.f32.mrb[0].mxu0
  %2652 = vmatprep.mubr.f32.mxu0 0.0
  %2653 = vmatmul.mubr.f32.gmra.mrb[0].mxu0 %v2519
  %v2654 = vpop.f32.mrb[0].mxu0
  %v2655 = vadd.f32 0.0, %v2654
  %v2656 = vpop.f32.mrb[0].mxu0
  %2657 = vmatprep.mubr.f32.mxu0 0.0
  %2658 = vmatmul.mubr.f32.gmra.mrb[0].mxu0 %v2522
  %v2659 = vpop.f32.mrb[0].mxu0
  %v2660 = vadd.f32 0.0, %v2659
  %v2661 = vpop.f32.mrb[0].mxu0
  %2662 = vmatprep.mubr.f32.mxu0 0.0
  %2663 = vmatmul.mubr.f32.gmra.mrb[0].mxu0 %v2525
  %v2664 = vpop.f32.mrb[0].mxu0
  %v2665 = vadd.f32 0.0, %v2664
  %v2666 = vpop.f32.mrb[0].mxu0
  %2667 = vmatprep.mubr.f32.mxu0 0.0
  %2668 = vmatmul.mubr.f32.gmra.mrb[0].mxu0 %v2528
  %v2669 = vpop.f32.mrb[0].mxu0
  %v2670 = vadd.f32 0.0, %v2669
  %v2671 = vpop.f32.mrb[0].mxu0
  %2672 = vmatprep.mubr.f32.mxu0 0.0
  %2673 = vmatmul.mubr.f32.gmra.mrb[0].mxu0 %v2531
  %v2674 = vpop.f32.mrb[0].mxu0
  %v2675 = vadd.f32 0.0, %v2674
  %v2676 = vpop.f32.mrb[0].mxu0
  %2677 = vdwg.mxu0
  %v2678 = vld [vmem:[%s8] sm:$0x1]
  %v2680 = vlaneseq
  %v2681 = vshrl.u32 %v2680, 7
  %v2682 = vsub.s32 0, %v2681
  %v2683 = vrot.slane %v2678, %v2682
  %v2685 = vmul.f32 %v2600, %v2683
  %v2686 = vmul.f32 %v2605, %v2683
  %v2687 = vmul.f32 %v2610, %v2683
  %v2688 = vmul.f32 %v2615, %v2683
  %v2689 = vmul.f32 %v2620, %v2683
  %v2690 = vmul.f32 %v2625, %v2683
  %v2691 = vmul.f32 %v2630, %v2683
  %v2692 = vmul.f32 %v2635, %v2683
  %v2693 = vmul.f32 %v2640, %v2683
  %v2694 = vmul.f32 %v2645, %v2683
  %v2695 = vmul.f32 %v2650, %v2683
  %v2696 = vmul.f32 %v2655, %v2683
  %v2697 = vmul.f32 %v2660, %v2683
  %v2698 = vmul.f32 %v2665, %v2683
  %v2699 = vmul.f32 %v2670, %v2683
  %v2700 = vmul.f32 %v2675, %v2683
  %v2701 = vld [vmem:[%s9] sm:$0x1]
  %v2703 = vlaneseq
  %v2704 = vshrl.u32 %v2703, 7
  %v2705 = vsub.s32 0, %v2704
  %v2706 = vrot.slane %v2701, %v2705
  %v2708 = vadd.f32 %v2685, %v2706
  %v2709 = vadd.f32 %v2686, %v2706
  %v2710 = vadd.f32 %v2687, %v2706
  %v2711 = vadd.f32 %v2688, %v2706
  %v2712 = vadd.f32 %v2689, %v2706
  %v2713 = vadd.f32 %v2690, %v2706
  %v2714 = vadd.f32 %v2691, %v2706
  %v2715 = vadd.f32 %v2692, %v2706
  %v2716 = vadd.f32 %v2693, %v2706
  %v2717 = vadd.f32 %v2694, %v2706
  %v2718 = vadd.f32 %v2695, %v2706
  %v2719 = vadd.f32 %v2696, %v2706
  %v2720 = vadd.f32 %v2697, %v2706
  %v2721 = vadd.f32 %v2698, %v2706
  %v2722 = vadd.f32 %v2699, %v2706
  %v2723 = vadd.f32 %v2700, %v2706
  %v2724 = vmax.f32 %v2708, 0.0
  %v2725 = vmax.f32 %v2709, 0.0
  %v2726 = vmax.f32 %v2710, 0.0
  %v2727 = vmax.f32 %v2711, 0.0
  %v2728 = vmax.f32 %v2712, 0.0
  %v2729 = vmax.f32 %v2713, 0.0
  %v2730 = vmax.f32 %v2714, 0.0
  %v2731 = vmax.f32 %v2715, 0.0
  %v2732 = vmax.f32 %v2716, 0.0
  %v2733 = vmax.f32 %v2717, 0.0
  %v2734 = vmax.f32 %v2718, 0.0
  %v2735 = vmax.f32 %v2719, 0.0
  %v2736 = vmax.f32 %v2720, 0.0
  %v2737 = vmax.f32 %v2721, 0.0
  %v2738 = vmax.f32 %v2722, 0.0
  %v2739 = vmax.f32 %v2723, 0.0
  %v2740 = vld [vmem:[%s13] sm:$0x3]
  %v2741 = vld [vmem:[%s12] sm:$0xff]
  %vm2742 = vcmask 64512
  %v2744 = vsel %vm2742, %v2724, 0
  %v2747 = vsel %vm2742, %v2725, 0
  %v2750 = vsel %vm2742, %v2726, 0
  %v2753 = vsel %vm2742, %v2727, 0
  %v2756 = vsel %vm2742, %v2728, 0
  %v2759 = vsel %vm2742, %v2729, 0
  %v2762 = vsel %vm2742, %v2730, 0
  %v2765 = vsel %vm2742, %v2731, 0
  %v2768 = vsel %vm2742, %v2732, 0
  %v2771 = vsel %vm2742, %v2733, 0
  %v2774 = vsel %vm2742, %v2734, 0
  %v2777 = vsel %vm2742, %v2735, 0
  %v2780 = vsel %vm2742, %v2736, 0
  %v2783 = vsel %vm2742, %v2737, 0
  %v2786 = vsel %vm2742, %v2738, 0
  %v2789 = vsel %vm2742, %v2739, 0
  %2791 = vmatprep.subr.mxu0 0.0
  %2792 = vmatpush1.msra.mxu0 %v2741
  %2793 = vmatprep.subr.mxu0 0.0
  %2794 = vmatpush1.msra.mxu0 0.0
  %2795 = vmatprep.subr.mxu0 0.0
  %2796 = vmatpush1.msra.mxu0 0.0
  %2797 = vmatprep.subr.mxu0 0.0
  %2798 = vmatpush1.msra.mxu0 0.0
  %2799 = vmatprep.subr.mxu0 0.0
  %2800 = vmatpush1.msra.mxu0 0.0
  %2801 = vmatprep.subr.mxu0 0.0
  %2802 = vmatpush1.msra.mxu0 0.0
  %2803 = vmatprep.subr.mxu0 0.0
  %2804 = vmatpush1.msra.mxu0 0.0
  %2805 = vmatprep.subr.mxu0 0.0
  %2806 = vmatpush1.msra.mxu0 0.0
  %2807 = vmatprep.subr.mxu0 0.0
  %2808 = vmatpush1.msra.mxu0 0.0
  %2809 = vmatprep.subr.mxu0 0.0
  %2810 = vmatpush1.msra.mxu0 0.0
  %2811 = vmatprep.subr.mxu0 0.0
  %2812 = vmatpush1.msra.mxu0 0.0
  %2813 = vmatprep.subr.mxu0 0.0
  %2814 = vmatpush1.msra.mxu0 0.0
  %2815 = vmatprep.subr.mxu0 0.0
  %2816 = vmatpush1.msra.mxu0 0.0
  %2817 = vmatprep.subr.mxu0 0.0
  %2818 = vmatpush1.msra.mxu0 0.0
  %2819 = vmatprep.subr.mxu0 0.0
  %2820 = vmatpush1.msra.mxu0 0.0
  %2821 = vmatprep.subr.mxu0 0.0
  %2822 = vmatpush1.msra.mxu0 0.0
  %2823 = vmatprep.subr.mxu0 0.0
  %2824 = vmatpush1.msra.mxu0 0.0
  %2825 = vmatprep.subr.mxu0 0.0
  %2826 = vmatpush1.msra.mxu0 0.0
  %2827 = vmatprep.subr.mxu0 0.0
  %2828 = vmatpush1.msra.mxu0 0.0
  %2829 = vmatprep.subr.mxu0 0.0
  %2830 = vmatpush1.msra.mxu0 0.0
  %2831 = vmatprep.subr.mxu0 0.0
  %2832 = vmatpush1.msra.mxu0 0.0
  %2833 = vmatprep.subr.mxu0 0.0
  %2834 = vmatpush1.msra.mxu0 0.0
  %2835 = vmatprep.subr.mxu0 0.0
  %2836 = vmatpush1.msra.mxu0 0.0
  %2837 = vmatprep.subr.mxu0 0.0
  %2838 = vmatpush1.msra.mxu0 0.0
  %2839 = vmatprep.subr.mxu0 0.0
  %2840 = vmatpush1.msra.mxu0 0.0
  %2841 = vmatprep.subr.mxu0 0.0
  %2842 = vmatpush1.msra.mxu0 0.0
  %2843 = vmatprep.subr.mxu0 0.0
  %2844 = vmatpush1.msra.mxu0 0.0
  %2845 = vmatprep.subr.mxu0 0.0
  %2846 = vmatpush1.msra.mxu0 0.0
  %2847 = vmatprep.subr.mxu0 0.0
  %2848 = vmatpush1.msra.mxu0 0.0
  %2849 = vmatprep.subr.mxu0 0.0
  %2850 = vmatpush1.msra.mxu0 0.0
  %2851 = vmatprep.subr.mxu0 0.0
  %2852 = vmatpush1.msra.mxu0 0.0
  %2853 = vmatprep.subr.mxu0 0.0
  %2854 = vmatpush1.msra.mxu0 0.0
  %2855 = vmatprep.mubr.f32.mxu0 0.0
  %2856 = vmatmul.mubr.f32.gmra.mrb[0].mxu0 %v2744
  %v2857 = vpop.f32.mrb[0].mxu0
  %v2858 = vadd.f32 0.0, %v2857
  %v2859 = vpop.f32.mrb[0].mxu0
  %2860 = vmatprep.mubr.f32.mxu0 0.0
  %2861 = vmatmul.mubr.f32.gmra.mrb[0].mxu0 %v2747
  %v2862 = vpop.f32.mrb[0].mxu0
  %v2863 = vadd.f32 0.0, %v2862
  %v2864 = vpop.f32.mrb[0].mxu0
  %2865 = vmatprep.mubr.f32.mxu0 0.0
  %2866 = vmatmul.mubr.f32.gmra.mrb[0].mxu0 %v2750
  %v2867 = vpop.f32.mrb[0].mxu0
  %v2868 = vadd.f32 0.0, %v2867
  %v2869 = vpop.f32.mrb[0].mxu0
  %2870 = vmatprep.mubr.f32.mxu0 0.0
  %2871 = vmatmul.mubr.f32.gmra.mrb[0].mxu0 %v2753
  %v2872 = vpop.f32.mrb[0].mxu0
  %v2873 = vadd.f32 0.0, %v2872
  %v2874 = vpop.f32.mrb[0].mxu0
  %2875 = vmatprep.mubr.f32.mxu0 0.0
  %2876 = vmatmul.mubr.f32.gmra.mrb[0].mxu0 %v2756
  %v2877 = vpop.f32.mrb[0].mxu0
  %v2878 = vadd.f32 0.0, %v2877
  %v2879 = vpop.f32.mrb[0].mxu0
  %2880 = vmatprep.mubr.f32.mxu0 0.0
  %2881 = vmatmul.mubr.f32.gmra.mrb[0].mxu0 %v2759
  %v2882 = vpop.f32.mrb[0].mxu0
  %v2883 = vadd.f32 0.0, %v2882
  %v2884 = vpop.f32.mrb[0].mxu0
  %2885 = vmatprep.mubr.f32.mxu0 0.0
  %2886 = vmatmul.mubr.f32.gmra.mrb[0].mxu0 %v2762
  %v2887 = vpop.f32.mrb[0].mxu0
  %v2888 = vadd.f32 0.0, %v2887
  %v2889 = vpop.f32.mrb[0].mxu0
  %2890 = vmatprep.mubr.f32.mxu0 0.0
  %2891 = vmatmul.mubr.f32.gmra.mrb[0].mxu0 %v2765
  %v2892 = vpop.f32.mrb[0].mxu0
  %v2893 = vadd.f32 0.0, %v2892
  %v2894 = vpop.f32.mrb[0].mxu0
  %2895 = vmatprep.mubr.f32.mxu0 0.0
  %2896 = vmatmul.mubr.f32.gmra.mrb[0].mxu0 %v2768
  %v2897 = vpop.f32.mrb[0].mxu0
  %v2898 = vadd.f32 0.0, %v2897
  %v2899 = vpop.f32.mrb[0].mxu0
  %2900 = vmatprep.mubr.f32.mxu0 0.0
  %2901 = vmatmul.mubr.f32.gmra.mrb[0].mxu0 %v2771
  %v2902 = vpop.f32.mrb[0].mxu0
  %v2903 = vadd.f32 0.0, %v2902
  %v2904 = vpop.f32.mrb[0].mxu0
  %2905 = vmatprep.mubr.f32.mxu0 0.0
  %2906 = vmatmul.mubr.f32.gmra.mrb[0].mxu0 %v2774
  %v2907 = vpop.f32.mrb[0].mxu0
  %v2908 = vadd.f32 0.0, %v2907
  %v2909 = vpop.f32.mrb[0].mxu0
  %2910 = vmatprep.mubr.f32.mxu0 0.0
  %2911 = vmatmul.mubr.f32.gmra.mrb[0].mxu0 %v2777
  %v2912 = vpop.f32.mrb[0].mxu0
  %v2913 = vadd.f32 0.0, %v2912
  %v2914 = vpop.f32.mrb[0].mxu0
  %2915 = vmatprep.mubr.f32.mxu0 0.0
  %2916 = vmatmul.mubr.f32.gmra.mrb[0].mxu0 %v2780
  %v2917 = vpop.f32.mrb[0].mxu0
  %v2918 = vadd.f32 0.0, %v2917
  %v2919 = vpop.f32.mrb[0].mxu0
  %2920 = vmatprep.mubr.f32.mxu0 0.0
  %2921 = vmatmul.mubr.f32.gmra.mrb[0].mxu0 %v2783
  %v2922 = vpop.f32.mrb[0].mxu0
  %v2923 = vadd.f32 0.0, %v2922
  %v2924 = vpop.f32.mrb[0].mxu0
  %2925 = vmatprep.mubr.f32.mxu0 0.0
  %2926 = vmatmul.mubr.f32.gmra.mrb[0].mxu0 %v2786
  %v2927 = vpop.f32.mrb[0].mxu0
  %v2928 = vadd.f32 0.0, %v2927
  %v2929 = vpop.f32.mrb[0].mxu0
  %2930 = vmatprep.mubr.f32.mxu0 0.0
  %2931 = vmatmul.mubr.f32.gmra.mrb[0].mxu0 %v2789
  %v2932 = vpop.f32.mrb[0].mxu0
  %v2933 = vadd.f32 0.0, %v2932
  %v2934 = vpop.f32.mrb[0].mxu0
  %2935 = vdwg.mxu0
  %v2936 = vlaneseq
  %v2937 = vand.u32 %v2936, 127
  %v2938 = vlaneseq
  %v2939 = vshrl.u32 %v2938, 7
  %v2940 = vadd.s32 %v2939, 8
  %v2941 = vadd.s32 %v2939, 16
  %v2942 = vadd.s32 %v2939, 24
  %v2943 = vadd.s32 %v2939, 32
  %v2944 = vadd.s32 %v2939, 40
  %v2945 = vadd.s32 %v2939, 48
  %v2946 = vadd.s32 %v2939, 56
  %v2947 = vmul.u32 %v2939, 8
  %v2948 = vmul.u32 %v2940, 8
  %v2949 = vmul.u32 %v2941, 8
  %v2950 = vmul.u32 %v2942, 8
  %v2951 = vmul.u32 %v2943, 8
  %v2952 = vmul.u32 %v2944, 8
  %v2953 = vmul.u32 %v2945, 8
  %v2954 = vmul.u32 %v2946, 8
  %vm2955 = vcmp.ge.s32.totalorder %v2937, %v2947
  %vm2956 = vcmp.ge.s32.totalorder %v2937, %v2948
  %vm2957 = vcmp.ge.s32.totalorder %v2937, %v2949
  %vm2958 = vcmp.ge.s32.totalorder %v2937, %v2950
  %vm2959 = vcmp.ge.s32.totalorder %v2937, %v2951
  %vm2960 = vcmp.ge.s32.totalorder %v2937, %v2952
  %vm2961 = vcmp.ge.s32.totalorder %v2937, %v2953
  %vm2962 = vcmp.ge.s32.totalorder %v2937, %v2954
  %v2963 = vadd.s32 %v2947, 8
  %v2964 = vadd.s32 %v2948, 8
  %v2965 = vadd.s32 %v2949, 8
  %v2966 = vadd.s32 %v2950, 8
  %v2967 = vadd.s32 %v2951, 8
  %v2968 = vadd.s32 %v2952, 8
  %v2969 = vadd.s32 %v2953, 8
  %v2970 = vadd.s32 %v2954, 8
  %vm2971 = vcmp.lt.s32.totalorder %v2937, %v2963
  %vm2972 = vcmp.lt.s32.totalorder %v2937, %v2964
  %vm2973 = vcmp.lt.s32.totalorder %v2937, %v2965
  %vm2974 = vcmp.lt.s32.totalorder %v2937, %v2966
  %vm2975 = vcmp.lt.s32.totalorder %v2937, %v2967
  %vm2976 = vcmp.lt.s32.totalorder %v2937, %v2968
  %vm2977 = vcmp.lt.s32.totalorder %v2937, %v2969
  %vm2978 = vcmp.lt.s32.totalorder %v2937, %v2970
  %vm2979 = vmand %vm2955, %vm2971
  %vm2980 = vmand %vm2956, %vm2972
  %vm2981 = vmand %vm2957, %vm2973
  %vm2982 = vmand %vm2958, %vm2974
  %vm2983 = vmand %vm2959, %vm2975
  %vm2984 = vmand %vm2960, %vm2976
  %vm2985 = vmand %vm2961, %vm2977
  %vm2986 = vmand %vm2962, %vm2978
  %v2987 = vsel %vm2979, %v2858, 0.0
  %v2988 = vsel %vm2980, %v2863, 0.0
  %v2989 = vsel %vm2981, %v2868, 0.0
  %v2990 = vsel %vm2982, %v2873, 0.0
  %v2991 = vsel %vm2983, %v2878, 0.0
  %v2992 = vsel %vm2984, %v2883, 0.0
  %v2993 = vsel %vm2985, %v2888, 0.0
  %v2994 = vsel %vm2986, %v2893, 0.0
  %v2995 = vsel %vm2979, %v2898, 0.0
  %v2996 = vsel %vm2980, %v2903, 0.0
  %v2997 = vsel %vm2981, %v2908, 0.0
  %v2998 = vsel %vm2982, %v2913, 0.0
  %v2999 = vsel %vm2983, %v2918, 0.0
  %v3000 = vsel %vm2984, %v2923, 0.0
  %v3001 = vsel %vm2985, %v2928, 0.0
  %v3002 = vsel %vm2986, %v2933, 0.0
  %3003 = vmatprep.subr.mxu0 0.0
  %3004 = vmatpush1.msra.mxu0 %v2987
  %3005 = vmatprep.subr.mxu0 0.0
  %3006 = vmatpush1.msra.mxu0 %v2988
  %3007 = vmatprep.subr.mxu0 0.0
  %3008 = vmatpush1.msra.mxu0 %v2989
  %3009 = vmatprep.subr.mxu0 0.0
  %3010 = vmatpush1.msra.mxu0 %v2990
  %3011 = vmatprep.subr.mxu0 0.0
  %3012 = vmatpush1.msra.mxu0 %v2991
  %3013 = vmatprep.subr.mxu0 0.0
  %3014 = vmatpush1.msra.mxu0 %v2992
  %3015 = vmatprep.subr.mxu0 0.0
  %3016 = vmatpush1.msra.mxu0 %v2993
  %3017 = vmatprep.subr.mxu0 0.0
  %3018 = vmatpush1.msra.mxu0 %v2994
  %3019 = vmatprep.subr.mxu0 0.0
  %3020 = vmatpush1.msra.mxu0 %v2995
  %3021 = vmatprep.subr.mxu0 0.0
  %3022 = vmatpush1.msra.mxu0 %v2996
  %3023 = vmatprep.subr.mxu0 0.0
  %3024 = vmatpush1.msra.mxu0 %v2997
  %3025 = vmatprep.subr.mxu0 0.0
  %3026 = vmatpush1.msra.mxu0 %v2998
  %3027 = vmatprep.subr.mxu0 0.0
  %3028 = vmatpush1.msra.mxu0 %v2999
  %3029 = vmatprep.subr.mxu0 0.0
  %3030 = vmatpush1.msra.mxu0 %v3000
  %3031 = vmatprep.subr.mxu0 0.0
  %3032 = vmatpush1.msra.mxu0 %v3001
  %3033 = vmatprep.subr.mxu0 0.0
  %3034 = vmatpush1.msra.mxu0 %v3002
  %3035 = vmatprep.subr.mxu0 0.0
  %3036 = vmatpush1.msra.mxu0 0.0
  %3037 = vmatprep.subr.mxu0 0.0
  %3038 = vmatpush1.msra.mxu0 0.0
  %3039 = vmatprep.subr.mxu0 0.0
  %3040 = vmatpush1.msra.mxu0 0.0
  %3041 = vmatprep.subr.mxu0 0.0
  %3042 = vmatpush1.msra.mxu0 0.0
  %3043 = vmatprep.subr.mxu0 0.0
  %3044 = vmatpush1.msra.mxu0 0.0
  %3045 = vmatprep.subr.mxu0 0.0
  %3046 = vmatpush1.msra.mxu0 0.0
  %3047 = vmatprep.subr.mxu0 0.0
  %3048 = vmatpush1.msra.mxu0 0.0
  %3049 = vmatprep.subr.mxu0 0.0
  %3050 = vmatpush1.msra.mxu0 0.0
  %3051 = vmatprep.subr.mxu0 0.0
  %3052 = vmatpush1.msra.mxu0 0.0
  %3053 = vmatprep.subr.mxu0 0.0
  %3054 = vmatpush1.msra.mxu0 0.0
  %3055 = vmatprep.subr.mxu0 0.0
  %3056 = vmatpush1.msra.mxu0 0.0
  %3057 = vmatprep.subr.mxu0 0.0
  %3058 = vmatpush1.msra.mxu0 0.0
  %3059 = vmatprep.subr.mxu0 0.0
  %3060 = vmatpush1.msra.mxu0 0.0
  %3061 = vmatprep.subr.mxu0 0.0
  %3062 = vmatpush1.msra.mxu0 0.0
  %3063 = vmatprep.subr.mxu0 0.0
  %3064 = vmatpush1.msra.mxu0 0.0
  %3065 = vmatprep.subr.mxu0 0.0
  %3066 = vmatpush1.msra.mxu0 0.0
  %3067 = vmatprep.mubr.f32.mxu0 0.0
  %3068 = vmatmul.mubr.f32.gmra.mrb[0].mxu0 %v2740
  %v3069 = vpop.f32.mrb[0].mxu0
  %v3070 = vadd.f32 0.0, %v3069
  %v3071 = vpop.f32.mrb[0].mxu0
  %3072 = vdwg.mxu0
  %v3073 = vld [vmem:[%s10] sm:$0xff]
  %v3074 = vld [vmem:[%s10 + $0x8] sm:$0xff]
  %v3075 = vld [vmem:[%s10 + $0x10] sm:$0xff]
  %v3076 = vld [vmem:[%s10 + $0x18] sm:$0xff]
  %v3077 = vld [vmem:[%s10 + $0x20] sm:$0xff]
  %v3078 = vld [vmem:[%s10 + $0x28] sm:$0xff]
  %v3079 = vld [vmem:[%s10 + $0x30] sm:$0xff]
  %v3080 = vld [vmem:[%s10 + $0x38] sm:$0xff]
  %v3081 = vld [vmem:[%s10 + $0x40] sm:$0xff]
  %v3082 = vld [vmem:[%s10 + $0x48] sm:$0xff]
  %v3083 = vld [vmem:[%s10 + $0x50] sm:$0xff]
  %v3084 = vld [vmem:[%s10 + $0x58] sm:$0xff]
  %v3085 = vld [vmem:[%s10 + $0x60] sm:$0xff]
  %v3086 = vld [vmem:[%s10 + $0x68] sm:$0xff]
  %v3087 = vld [vmem:[%s10 + $0x70] sm:$0xff]
  %v3088 = vld [vmem:[%s10 + $0x78] sm:$0xff]
  %v3089 = vld [vmem:[%s12 + $0x8] sm:$0xff]
  %3090 = vmatprep.subr.mxu0 0.0
  %3091 = vmatpush1.msra.mxu0 %v3089
  %3092 = vmatprep.subr.mxu0 0.0
  %3093 = vmatpush1.msra.mxu0 0.0
  %3094 = vmatprep.subr.mxu0 0.0
  %3095 = vmatpush1.msra.mxu0 0.0
  %3096 = vmatprep.subr.mxu0 0.0
  %3097 = vmatpush1.msra.mxu0 0.0
  %3098 = vmatprep.subr.mxu0 0.0
  %3099 = vmatpush1.msra.mxu0 0.0
  %3100 = vmatprep.subr.mxu0 0.0
  %3101 = vmatpush1.msra.mxu0 0.0
  %3102 = vmatprep.subr.mxu0 0.0
  %3103 = vmatpush1.msra.mxu0 0.0
  %3104 = vmatprep.subr.mxu0 0.0
  %3105 = vmatpush1.msra.mxu0 0.0
  %3106 = vmatprep.subr.mxu0 0.0
  %3107 = vmatpush1.msra.mxu0 0.0
  %3108 = vmatprep.subr.mxu0 0.0
  %3109 = vmatpush1.msra.mxu0 0.0
  %3110 = vmatprep.subr.mxu0 0.0
  %3111 = vmatpush1.msra.mxu0 0.0
  %3112 = vmatprep.subr.mxu0 0.0
  %3113 = vmatpush1.msra.mxu0 0.0
  %3114 = vmatprep.subr.mxu0 0.0
  %3115 = vmatpush1.msra.mxu0 0.0
  %3116 = vmatprep.subr.mxu0 0.0
  %3117 = vmatpush1.msra.mxu0 0.0
  %3118 = vmatprep.subr.mxu0 0.0
  %3119 = vmatpush1.msra.mxu0 0.0
  %3120 = vmatprep.subr.mxu0 0.0
  %3121 = vmatpush1.msra.mxu0 0.0
  %3122 = vmatprep.subr.mxu0 0.0
  %3123 = vmatpush1.msra.mxu0 0.0
  %3124 = vmatprep.subr.mxu0 0.0
  %3125 = vmatpush1.msra.mxu0 0.0
  %3126 = vmatprep.subr.mxu0 0.0
  %3127 = vmatpush1.msra.mxu0 0.0
  %3128 = vmatprep.subr.mxu0 0.0
  %3129 = vmatpush1.msra.mxu0 0.0
  %3130 = vmatprep.subr.mxu0 0.0
  %3131 = vmatpush1.msra.mxu0 0.0
  %3132 = vmatprep.subr.mxu0 0.0
  %3133 = vmatpush1.msra.mxu0 0.0
  %3134 = vmatprep.subr.mxu0 0.0
  %3135 = vmatpush1.msra.mxu0 0.0
  %3136 = vmatprep.subr.mxu0 0.0
  %3137 = vmatpush1.msra.mxu0 0.0
  %3138 = vmatprep.subr.mxu0 0.0
  %3139 = vmatpush1.msra.mxu0 0.0
  %3140 = vmatprep.subr.mxu0 0.0
  %3141 = vmatpush1.msra.mxu0 0.0
  %3142 = vmatprep.subr.mxu0 0.0
  %3143 = vmatpush1.msra.mxu0 0.0
  %3144 = vmatprep.subr.mxu0 0.0
  %3145 = vmatpush1.msra.mxu0 0.0
  %3146 = vmatprep.subr.mxu0 0.0
  %3147 = vmatpush1.msra.mxu0 0.0
  %3148 = vmatprep.subr.mxu0 0.0
  %3149 = vmatpush1.msra.mxu0 0.0
  %3150 = vmatprep.subr.mxu0 0.0
  %3151 = vmatpush1.msra.mxu0 0.0
  %3152 = vmatprep.subr.mxu0 0.0
  %3153 = vmatpush1.msra.mxu0 0.0
  %3154 = vmatprep.mubr.f32.mxu0 0.0
  %3155 = vmatmul.mubr.f32.gmra.mrb[0].mxu0 %v2744
  %v3156 = vpop.f32.mrb[0].mxu0
  %v3157 = vadd.f32 0.0, %v3156
  %v3158 = vpop.f32.mrb[0].mxu0
  %3159 = vmatprep.mubr.f32.mxu0 0.0
  %3160 = vmatmul.mubr.f32.gmra.mrb[0].mxu0 %v2747
  %v3161 = vpop.f32.mrb[0].mxu0
  %v3162 = vadd.f32 0.0, %v3161
  %v3163 = vpop.f32.mrb[0].mxu0
  %3164 = vmatprep.mubr.f32.mxu0 0.0
  %3165 = vmatmul.mubr.f32.gmra.mrb[0].mxu0 %v2750
  %v3166 = vpop.f32.mrb[0].mxu0
  %v3167 = vadd.f32 0.0, %v3166
  %v3168 = vpop.f32.mrb[0].mxu0
  %3169 = vmatprep.mubr.f32.mxu0 0.0
  %3170 = vmatmul.mubr.f32.gmra.mrb[0].mxu0 %v2753
  %v3171 = vpop.f32.mrb[0].mxu0
  %v3172 = vadd.f32 0.0, %v3171
  %v3173 = vpop.f32.mrb[0].mxu0
  %3174 = vmatprep.mubr.f32.mxu0 0.0
  %3175 = vmatmul.mubr.f32.gmra.mrb[0].mxu0 %v2756
  %v3176 = vpop.f32.mrb[0].mxu0
  %v3177 = vadd.f32 0.0, %v3176
  %v3178 = vpop.f32.mrb[0].mxu0
  %3179 = vmatprep.mubr.f32.mxu0 0.0
  %3180 = vmatmul.mubr.f32.gmra.mrb[0].mxu0 %v2759
  %v3181 = vpop.f32.mrb[0].mxu0
  %v3182 = vadd.f32 0.0, %v3181
  %v3183 = vpop.f32.mrb[0].mxu0
  %3184 = vmatprep.mubr.f32.mxu0 0.0
  %3185 = vmatmul.mubr.f32.gmra.mrb[0].mxu0 %v2762
  %v3186 = vpop.f32.mrb[0].mxu0
  %v3187 = vadd.f32 0.0, %v3186
  %v3188 = vpop.f32.mrb[0].mxu0
  %3189 = vmatprep.mubr.f32.mxu0 0.0
  %3190 = vmatmul.mubr.f32.gmra.mrb[0].mxu0 %v2765
  %v3191 = vpop.f32.mrb[0].mxu0
  %v3192 = vadd.f32 0.0, %v3191
  %v3193 = vpop.f32.mrb[0].mxu0
  %3194 = vmatprep.mubr.f32.mxu0 0.0
  %3195 = vmatmul.mubr.f32.gmra.mrb[0].mxu0 %v2768
  %v3196 = vpop.f32.mrb[0].mxu0
  %v3197 = vadd.f32 0.0, %v3196
  %v3198 = vpop.f32.mrb[0].mxu0
  %3199 = vmatprep.mubr.f32.mxu0 0.0
  %3200 = vmatmul.mubr.f32.gmra.mrb[0].mxu0 %v2771
  %v3201 = vpop.f32.mrb[0].mxu0
  %v3202 = vadd.f32 0.0, %v3201
  %v3203 = vpop.f32.mrb[0].mxu0
  %3204 = vmatprep.mubr.f32.mxu0 0.0
  %3205 = vmatmul.mubr.f32.gmra.mrb[0].mxu0 %v2774
  %v3206 = vpop.f32.mrb[0].mxu0
  %v3207 = vadd.f32 0.0, %v3206
  %v3208 = vpop.f32.mrb[0].mxu0
  %3209 = vmatprep.mubr.f32.mxu0 0.0
  %3210 = vmatmul.mubr.f32.gmra.mrb[0].mxu0 %v2777
  %v3211 = vpop.f32.mrb[0].mxu0
  %v3212 = vadd.f32 0.0, %v3211
  %v3213 = vpop.f32.mrb[0].mxu0
  %3214 = vmatprep.mubr.f32.mxu0 0.0
  %3215 = vmatmul.mubr.f32.gmra.mrb[0].mxu0 %v2780
  %v3216 = vpop.f32.mrb[0].mxu0
  %v3217 = vadd.f32 0.0, %v3216
  %v3218 = vpop.f32.mrb[0].mxu0
  %3219 = vmatprep.mubr.f32.mxu0 0.0
  %3220 = vmatmul.mubr.f32.gmra.mrb[0].mxu0 %v2783
  %v3221 = vpop.f32.mrb[0].mxu0
  %v3222 = vadd.f32 0.0, %v3221
  %v3223 = vpop.f32.mrb[0].mxu0
  %3224 = vmatprep.mubr.f32.mxu0 0.0
  %3225 = vmatmul.mubr.f32.gmra.mrb[0].mxu0 %v2786
  %v3226 = vpop.f32.mrb[0].mxu0
  %v3227 = vadd.f32 0.0, %v3226
  %v3228 = vpop.f32.mrb[0].mxu0
  %3229 = vmatprep.mubr.f32.mxu0 0.0
  %3230 = vmatmul.mubr.f32.gmra.mrb[0].mxu0 %v2789
  %v3231 = vpop.f32.mrb[0].mxu0
  %v3232 = vadd.f32 0.0, %v3231
  %v3233 = vpop.f32.mrb[0].mxu0
  %3234 = vdwg.mxu0
  %v3235 = vadd.s32 %v2937, 128
  %vm3236 = vcmp.ge.s32.totalorder %v3235, %v2947
  %vm3237 = vcmp.ge.s32.totalorder %v3235, %v2948
  %vm3238 = vcmp.ge.s32.totalorder %v3235, %v2949
  %vm3239 = vcmp.ge.s32.totalorder %v3235, %v2950
  %vm3240 = vcmp.ge.s32.totalorder %v3235, %v2951
  %vm3241 = vcmp.ge.s32.totalorder %v3235, %v2952
  %vm3242 = vcmp.ge.s32.totalorder %v3235, %v2953
  %vm3243 = vcmp.ge.s32.totalorder %v3235, %v2954
  %vm3244 = vcmp.lt.s32.totalorder %v3235, %v2963
  %vm3245 = vcmp.lt.s32.totalorder %v3235, %v2964
  %vm3246 = vcmp.lt.s32.totalorder %v3235, %v2965
  %vm3247 = vcmp.lt.s32.totalorder %v3235, %v2966
  %vm3248 = vcmp.lt.s32.totalorder %v3235, %v2967
  %vm3249 = vcmp.lt.s32.totalorder %v3235, %v2968
  %vm3250 = vcmp.lt.s32.totalorder %v3235, %v2969
  %vm3251 = vcmp.lt.s32.totalorder %v3235, %v2970
  %vm3252 = vmand %vm3236, %vm3244
  %vm3253 = vmand %vm3237, %vm3245
  %vm3254 = vmand %vm3238, %vm3246
  %vm3255 = vmand %vm3239, %vm3247
  %vm3256 = vmand %vm3240, %vm3248
  %vm3257 = vmand %vm3241, %vm3249
  %vm3258 = vmand %vm3242, %vm3250
  %vm3259 = vmand %vm3243, %vm3251
  %v3260 = vsel %vm3252, %v3157, 0.0
  %v3261 = vsel %vm3253, %v3162, 0.0
  %v3262 = vsel %vm3254, %v3167, 0.0
  %v3263 = vsel %vm3255, %v3172, 0.0
  %v3264 = vsel %vm3256, %v3177, 0.0
  %v3265 = vsel %vm3257, %v3182, 0.0
  %v3266 = vsel %vm3258, %v3187, 0.0
  %v3267 = vsel %vm3259, %v3192, 0.0
  %v3268 = vsel %vm3252, %v3197, 0.0
  %v3269 = vsel %vm3253, %v3202, 0.0
  %v3270 = vsel %vm3254, %v3207, 0.0
  %v3271 = vsel %vm3255, %v3212, 0.0
  %v3272 = vsel %vm3256, %v3217, 0.0
  %v3273 = vsel %vm3257, %v3222, 0.0
  %v3274 = vsel %vm3258, %v3227, 0.0
  %v3275 = vsel %vm3259, %v3232, 0.0
  %3276 = vmatprep.subr.mxu0 0.0
  %3277 = vmatpush1.msra.mxu0 %v3260
  %3278 = vmatprep.subr.mxu0 0.0
  %3279 = vmatpush1.msra.mxu0 %v3261
  %3280 = vmatprep.subr.mxu0 0.0
  %3281 = vmatpush1.msra.mxu0 %v3262
  %3282 = vmatprep.subr.mxu0 0.0
  %3283 = vmatpush1.msra.mxu0 %v3263
  %3284 = vmatprep.subr.mxu0 0.0
  %3285 = vmatpush1.msra.mxu0 %v3264
  %3286 = vmatprep.subr.mxu0 0.0
  %3287 = vmatpush1.msra.mxu0 %v3265
  %3288 = vmatprep.subr.mxu0 0.0
  %3289 = vmatpush1.msra.mxu0 %v3266
  %3290 = vmatprep.subr.mxu0 0.0
  %3291 = vmatpush1.msra.mxu0 %v3267
  %3292 = vmatprep.subr.mxu0 0.0
  %3293 = vmatpush1.msra.mxu0 %v3268
  %3294 = vmatprep.subr.mxu0 0.0
  %3295 = vmatpush1.msra.mxu0 %v3269
  %3296 = vmatprep.subr.mxu0 0.0
  %3297 = vmatpush1.msra.mxu0 %v3270
  %3298 = vmatprep.subr.mxu0 0.0
  %3299 = vmatpush1.msra.mxu0 %v3271
  %3300 = vmatprep.subr.mxu0 0.0
  %3301 = vmatpush1.msra.mxu0 %v3272
  %3302 = vmatprep.subr.mxu0 0.0
  %3303 = vmatpush1.msra.mxu0 %v3273
  %3304 = vmatprep.subr.mxu0 0.0
  %3305 = vmatpush1.msra.mxu0 %v3274
  %3306 = vmatprep.subr.mxu0 0.0
  %3307 = vmatpush1.msra.mxu0 %v3275
  %3308 = vmatprep.subr.mxu0 0.0
  %3309 = vmatpush1.msra.mxu0 0.0
  %3310 = vmatprep.subr.mxu0 0.0
  %3311 = vmatpush1.msra.mxu0 0.0
  %3312 = vmatprep.subr.mxu0 0.0
  %3313 = vmatpush1.msra.mxu0 0.0
  %3314 = vmatprep.subr.mxu0 0.0
  %3315 = vmatpush1.msra.mxu0 0.0
  %3316 = vmatprep.subr.mxu0 0.0
  %3317 = vmatpush1.msra.mxu0 0.0
  %3318 = vmatprep.subr.mxu0 0.0
  %3319 = vmatpush1.msra.mxu0 0.0
  %3320 = vmatprep.subr.mxu0 0.0
  %3321 = vmatpush1.msra.mxu0 0.0
  %3322 = vmatprep.subr.mxu0 0.0
  %3323 = vmatpush1.msra.mxu0 0.0
  %3324 = vmatprep.subr.mxu0 0.0
  %3325 = vmatpush1.msra.mxu0 0.0
  %3326 = vmatprep.subr.mxu0 0.0
  %3327 = vmatpush1.msra.mxu0 0.0
  %3328 = vmatprep.subr.mxu0 0.0
  %3329 = vmatpush1.msra.mxu0 0.0
  %3330 = vmatprep.subr.mxu0 0.0
  %3331 = vmatpush1.msra.mxu0 0.0
  %3332 = vmatprep.subr.mxu0 0.0
  %3333 = vmatpush1.msra.mxu0 0.0
  %3334 = vmatprep.subr.mxu0 0.0
  %3335 = vmatpush1.msra.mxu0 0.0
  %3336 = vmatprep.subr.mxu0 0.0
  %3337 = vmatpush1.msra.mxu0 0.0
  %3338 = vmatprep.subr.mxu0 0.0
  %3339 = vmatpush1.msra.mxu0 0.0
  %3340 = vmatprep.mubr.f32.mxu0 0.0
  %3341 = vmatmul.mubr.f32.gmra.mrb[0].mxu0 %v2740
  %v3342 = vpop.f32.mrb[0].mxu0
  %v3343 = vadd.f32 0.0, %v3342
  %v3344 = vpop.f32.mrb[0].mxu0
  %3345 = vdwg.mxu0
  %v3346 = vld [vmem:[%s10 + $0x80] sm:$0xff]
  %v3347 = vld [vmem:[%s10 + $0x88] sm:$0xff]
  %v3348 = vld [vmem:[%s10 + $0x90] sm:$0xff]
  %v3349 = vld [vmem:[%s10 + $0x98] sm:$0xff]
  %v3350 = vld [vmem:[%s10 + $0xa0] sm:$0xff]
  %v3351 = vld [vmem:[%s10 + $0xa8] sm:$0xff]
  %v3352 = vld [vmem:[%s10 + $0xb0] sm:$0xff]
  %v3353 = vld [vmem:[%s10 + $0xb8] sm:$0xff]
  %v3354 = vld [vmem:[%s10 + $0xc0] sm:$0xff]
  %v3355 = vld [vmem:[%s10 + $0xc8] sm:$0xff]
  %v3356 = vld [vmem:[%s10 + $0xd0] sm:$0xff]
  %v3357 = vld [vmem:[%s10 + $0xd8] sm:$0xff]
  %v3358 = vld [vmem:[%s10 + $0xe0] sm:$0xff]
  %v3359 = vld [vmem:[%s10 + $0xe8] sm:$0xff]
  %v3360 = vld [vmem:[%s10 + $0xf0] sm:$0xff]
  %v3361 = vld [vmem:[%s10 + $0xf8] sm:$0xff]
  %3362 = vmatprep.subr.mxu0 0.0
  %3363 = vmatpush1.msra.mxu0 %v3346
  %3364 = vmatprep.subr.mxu0 0.0
  %3365 = vmatpush1.msra.mxu0 %v3347
  %3366 = vmatprep.subr.mxu0 0.0
  %3367 = vmatpush1.msra.mxu0 %v3348
  %3368 = vmatprep.subr.mxu0 0.0
  %3369 = vmatpush1.msra.mxu0 %v3349
  %3370 = vmatprep.subr.mxu0 0.0
  %3371 = vmatpush1.msra.mxu0 %v3350
  %3372 = vmatprep.subr.mxu0 0.0
  %3373 = vmatpush1.msra.mxu0 %v3351
  %3374 = vmatprep.subr.mxu0 0.0
  %3375 = vmatpush1.msra.mxu0 %v3352
  %3376 = vmatprep.subr.mxu0 0.0
  %3377 = vmatpush1.msra.mxu0 %v3353
  %3378 = vmatprep.subr.mxu0 0.0
  %3379 = vmatpush1.msra.mxu0 %v3354
  %3380 = vmatprep.subr.mxu0 0.0
  %3381 = vmatpush1.msra.mxu0 %v3355
  %3382 = vmatprep.subr.mxu0 0.0
  %3383 = vmatpush1.msra.mxu0 %v3356
  %3384 = vmatprep.subr.mxu0 0.0
  %3385 = vmatpush1.msra.mxu0 %v3357
  %3386 = vmatprep.subr.mxu0 0.0
  %3387 = vmatpush1.msra.mxu0 %v3358
  %3388 = vmatprep.subr.mxu0 0.0
  %3389 = vmatpush1.msra.mxu0 %v3359
  %3390 = vmatprep.subr.mxu0 0.0
  %3391 = vmatpush1.msra.mxu0 %v3360
  %3392 = vmatprep.subr.mxu0 0.0
  %3393 = vmatpush1.msra.mxu0 %v3361
  %3394 = vmatprep.subr.mxu0 0.0
  %3395 = vmatpush1.msra.mxu0 0.0
  %3396 = vmatprep.subr.mxu0 0.0
  %3397 = vmatpush1.msra.mxu0 0.0
  %3398 = vmatprep.subr.mxu0 0.0
  %3399 = vmatpush1.msra.mxu0 0.0
  %3400 = vmatprep.subr.mxu0 0.0
  %3401 = vmatpush1.msra.mxu0 0.0
  %3402 = vmatprep.subr.mxu0 0.0
  %3403 = vmatpush1.msra.mxu0 0.0
  %3404 = vmatprep.subr.mxu0 0.0
  %3405 = vmatpush1.msra.mxu0 0.0
  %3406 = vmatprep.subr.mxu0 0.0
  %3407 = vmatpush1.msra.mxu0 0.0
  %3408 = vmatprep.subr.mxu0 0.0
  %3409 = vmatpush1.msra.mxu0 0.0
  %3410 = vmatprep.subr.mxu0 0.0
  %3411 = vmatpush1.msra.mxu0 0.0
  %3412 = vmatprep.subr.mxu0 0.0
  %3413 = vmatpush1.msra.mxu0 0.0
  %3414 = vmatprep.subr.mxu0 0.0
  %3415 = vmatpush1.msra.mxu0 0.0
  %3416 = vmatprep.subr.mxu0 0.0
  %3417 = vmatpush1.msra.mxu0 0.0
  %3418 = vmatprep.subr.mxu0 0.0
  %3419 = vmatpush1.msra.mxu0 0.0
  %3420 = vmatprep.subr.mxu0 0.0
  %3421 = vmatpush1.msra.mxu0 0.0
  %3422 = vmatprep.subr.mxu0 0.0
  %3423 = vmatpush1.msra.mxu0 0.0
  %3424 = vmatprep.subr.mxu0 0.0
  %3425 = vmatpush1.msra.mxu0 0.0
  %3426 = vmatprep.mubr.f32.mxu0 0.0
  %3427 = vmatmul.mubr.f32.gmra.mrb[0].mxu0 %v3343
  %v3428 = vpop.f32.mrb[0].mxu0
  %v3429 = vadd.f32 0.0, %v3428
  %v3430 = vpop.f32.mrb[0].mxu0
  %3431 = vdwg.mxu0
  %3432 = vmatprep.subr.mxu0 0.0
  %3433 = vmatpush1.msra.mxu0 %v3073
  %3434 = vmatprep.subr.mxu0 0.0
  %3435 = vmatpush1.msra.mxu0 %v3074
  %3436 = vmatprep.subr.mxu0 0.0
  %3437 = vmatpush1.msra.mxu0 %v3075
  %3438 = vmatprep.subr.mxu0 0.0
  %3439 = vmatpush1.msra.mxu0 %v3076
  %3440 = vmatprep.subr.mxu0 0.0
  %3441 = vmatpush1.msra.mxu0 %v3077
  %3442 = vmatprep.subr.mxu0 0.0
  %3443 = vmatpush1.msra.mxu0 %v3078
  %3444 = vmatprep.subr.mxu0 0.0
  %3445 = vmatpush1.msra.mxu0 %v3079
  %3446 = vmatprep.subr.mxu0 0.0
  %3447 = vmatpush1.msra.mxu0 %v3080
  %3448 = vmatprep.subr.mxu0 0.0
  %3449 = vmatpush1.msra.mxu0 %v3081
  %3450 = vmatprep.subr.mxu0 0.0
  %3451 = vmatpush1.msra.mxu0 %v3082
  %3452 = vmatprep.subr.mxu0 0.0
  %3453 = vmatpush1.msra.mxu0 %v3083
  %3454 = vmatprep.subr.mxu0 0.0
  %3455 = vmatpush1.msra.mxu0 %v3084
  %3456 = vmatprep.subr.mxu0 0.0
  %3457 = vmatpush1.msra.mxu0 %v3085
  %3458 = vmatprep.subr.mxu0 0.0
  %3459 = vmatpush1.msra.mxu0 %v3086
  %3460 = vmatprep.subr.mxu0 0.0
  %3461 = vmatpush1.msra.mxu0 %v3087
  %3462 = vmatprep.subr.mxu0 0.0
  %3463 = vmatpush1.msra.mxu0 %v3088
  %3464 = vmatprep.subr.mxu0 0.0
  %3465 = vmatpush1.msra.mxu0 0.0
  %3466 = vmatprep.subr.mxu0 0.0
  %3467 = vmatpush1.msra.mxu0 0.0
  %3468 = vmatprep.subr.mxu0 0.0
  %3469 = vmatpush1.msra.mxu0 0.0
  %3470 = vmatprep.subr.mxu0 0.0
  %3471 = vmatpush1.msra.mxu0 0.0
  %3472 = vmatprep.subr.mxu0 0.0
  %3473 = vmatpush1.msra.mxu0 0.0
  %3474 = vmatprep.subr.mxu0 0.0
  %3475 = vmatpush1.msra.mxu0 0.0
  %3476 = vmatprep.subr.mxu0 0.0
  %3477 = vmatpush1.msra.mxu0 0.0
  %3478 = vmatprep.subr.mxu0 0.0
  %3479 = vmatpush1.msra.mxu0 0.0
  %3480 = vmatprep.subr.mxu0 0.0
  %3481 = vmatpush1.msra.mxu0 0.0
  %3482 = vmatprep.subr.mxu0 0.0
  %3483 = vmatpush1.msra.mxu0 0.0
  %3484 = vmatprep.subr.mxu0 0.0
  %3485 = vmatpush1.msra.mxu0 0.0
  %3486 = vmatprep.subr.mxu0 0.0
  %3487 = vmatpush1.msra.mxu0 0.0
  %3488 = vmatprep.subr.mxu0 0.0
  %3489 = vmatpush1.msra.mxu0 0.0
  %3490 = vmatprep.subr.mxu0 0.0
  %3491 = vmatpush1.msra.mxu0 0.0
  %3492 = vmatprep.subr.mxu0 0.0
  %3493 = vmatpush1.msra.mxu0 0.0
  %3494 = vmatprep.subr.mxu0 0.0
  %3495 = vmatpush1.msra.mxu0 0.0
  %3496 = vmatprep.mubr.f32.mxu0 0.0
  %3497 = vmatmul.mubr.f32.gmra.mrb[0].mxu0 %v3070
  %v3498 = vpop.f32.mrb[0].mxu0
  %v3499 = vadd.f32 %v3429, %v3498
  %v3500 = vpop.f32.mrb[0].mxu0
  %3501 = vdwg.mxu0
  %v3502 = vld [vmem:[%s12 + $0x10] sm:$0xff]
  %3503 = vmatprep.subr.mxu0 0.0
  %3504 = vmatpush1.msra.mxu0 %v3502
  %3505 = vmatprep.subr.mxu0 0.0
  %3506 = vmatpush1.msra.mxu0 0.0
  %3507 = vmatprep.subr.mxu0 0.0
  %3508 = vmatpush1.msra.mxu0 0.0
  %3509 = vmatprep.subr.mxu0 0.0
  %3510 = vmatpush1.msra.mxu0 0.0
  %3511 = vmatprep.subr.mxu0 0.0
  %3512 = vmatpush1.msra.mxu0 0.0
  %3513 = vmatprep.subr.mxu0 0.0
  %3514 = vmatpush1.msra.mxu0 0.0
  %3515 = vmatprep.subr.mxu0 0.0
  %3516 = vmatpush1.msra.mxu0 0.0
  %3517 = vmatprep.subr.mxu0 0.0
  %3518 = vmatpush1.msra.mxu0 0.0
  %3519 = vmatprep.subr.mxu0 0.0
  %3520 = vmatpush1.msra.mxu0 0.0
  %3521 = vmatprep.subr.mxu0 0.0
  %3522 = vmatpush1.msra.mxu0 0.0
  %3523 = vmatprep.subr.mxu0 0.0
  %3524 = vmatpush1.msra.mxu0 0.0
  %3525 = vmatprep.subr.mxu0 0.0
  %3526 = vmatpush1.msra.mxu0 0.0
  %3527 = vmatprep.subr.mxu0 0.0
  %3528 = vmatpush1.msra.mxu0 0.0
  %3529 = vmatprep.subr.mxu0 0.0
  %3530 = vmatpush1.msra.mxu0 0.0
  %3531 = vmatprep.subr.mxu0 0.0
  %3532 = vmatpush1.msra.mxu0 0.0
  %3533 = vmatprep.subr.mxu0 0.0
  %3534 = vmatpush1.msra.mxu0 0.0
  %3535 = vmatprep.subr.mxu0 0.0
  %3536 = vmatpush1.msra.mxu0 0.0
  %3537 = vmatprep.subr.mxu0 0.0
  %3538 = vmatpush1.msra.mxu0 0.0
  %3539 = vmatprep.subr.mxu0 0.0
  %3540 = vmatpush1.msra.mxu0 0.0
  %3541 = vmatprep.subr.mxu0 0.0
  %3542 = vmatpush1.msra.mxu0 0.0
  %3543 = vmatprep.subr.mxu0 0.0
  %3544 = vmatpush1.msra.mxu0 0.0
  %3545 = vmatprep.subr.mxu0 0.0
  %3546 = vmatpush1.msra.mxu0 0.0
  %3547 = vmatprep.subr.mxu0 0.0
  %3548 = vmatpush1.msra.mxu0 0.0
  %3549 = vmatprep.subr.mxu0 0.0
  %3550 = vmatpush1.msra.mxu0 0.0
  %3551 = vmatprep.subr.mxu0 0.0
  %3552 = vmatpush1.msra.mxu0 0.0
  %3553 = vmatprep.subr.mxu0 0.0
  %3554 = vmatpush1.msra.mxu0 0.0
  %3555 = vmatprep.subr.mxu0 0.0
  %3556 = vmatpush1.msra.mxu0 0.0
  %3557 = vmatprep.subr.mxu0 0.0
  %3558 = vmatpush1.msra.mxu0 0.0
  %3559 = vmatprep.subr.mxu0 0.0
  %3560 = vmatpush1.msra.mxu0 0.0
  %3561 = vmatprep.subr.mxu0 0.0
  %3562 = vmatpush1.msra.mxu0 0.0
  %3563 = vmatprep.subr.mxu0 0.0
  %3564 = vmatpush1.msra.mxu0 0.0
  %3565 = vmatprep.subr.mxu0 0.0
  %3566 = vmatpush1.msra.mxu0 0.0
  %3567 = vmatprep.mubr.f32.mxu0 0.0
  %3568 = vmatmul.mubr.f32.gmra.mrb[0].mxu0 %v2744
  %v3569 = vpop.f32.mrb[0].mxu0
  %v3570 = vadd.f32 0.0, %v3569
  %v3571 = vpop.f32.mrb[0].mxu0
  %3572 = vmatprep.mubr.f32.mxu0 0.0
  %3573 = vmatmul.mubr.f32.gmra.mrb[0].mxu0 %v2747
  %v3574 = vpop.f32.mrb[0].mxu0
  %v3575 = vadd.f32 0.0, %v3574
  %v3576 = vpop.f32.mrb[0].mxu0
  %3577 = vmatprep.mubr.f32.mxu0 0.0
  %3578 = vmatmul.mubr.f32.gmra.mrb[0].mxu0 %v2750
  %v3579 = vpop.f32.mrb[0].mxu0
  %v3580 = vadd.f32 0.0, %v3579
  %v3581 = vpop.f32.mrb[0].mxu0
  %3582 = vmatprep.mubr.f32.mxu0 0.0
  %3583 = vmatmul.mubr.f32.gmra.mrb[0].mxu0 %v2753
  %v3584 = vpop.f32.mrb[0].mxu0
  %v3585 = vadd.f32 0.0, %v3584
  %v3586 = vpop.f32.mrb[0].mxu0
  %3587 = vmatprep.mubr.f32.mxu0 0.0
  %3588 = vmatmul.mubr.f32.gmra.mrb[0].mxu0 %v2756
  %v3589 = vpop.f32.mrb[0].mxu0
  %v3590 = vadd.f32 0.0, %v3589
  %v3591 = vpop.f32.mrb[0].mxu0
  %3592 = vmatprep.mubr.f32.mxu0 0.0
  %3593 = vmatmul.mubr.f32.gmra.mrb[0].mxu0 %v2759
  %v3594 = vpop.f32.mrb[0].mxu0
  %v3595 = vadd.f32 0.0, %v3594
  %v3596 = vpop.f32.mrb[0].mxu0
  %3597 = vmatprep.mubr.f32.mxu0 0.0
  %3598 = vmatmul.mubr.f32.gmra.mrb[0].mxu0 %v2762
  %v3599 = vpop.f32.mrb[0].mxu0
  %v3600 = vadd.f32 0.0, %v3599
  %v3601 = vpop.f32.mrb[0].mxu0
  %3602 = vmatprep.mubr.f32.mxu0 0.0
  %3603 = vmatmul.mubr.f32.gmra.mrb[0].mxu0 %v2765
  %v3604 = vpop.f32.mrb[0].mxu0
  %v3605 = vadd.f32 0.0, %v3604
  %v3606 = vpop.f32.mrb[0].mxu0
  %3607 = vmatprep.mubr.f32.mxu0 0.0
  %3608 = vmatmul.mubr.f32.gmra.mrb[0].mxu0 %v2768
  %v3609 = vpop.f32.mrb[0].mxu0
  %v3610 = vadd.f32 0.0, %v3609
  %v3611 = vpop.f32.mrb[0].mxu0
  %3612 = vmatprep.mubr.f32.mxu0 0.0
  %3613 = vmatmul.mubr.f32.gmra.mrb[0].mxu0 %v2771
  %v3614 = vpop.f32.mrb[0].mxu0
  %v3615 = vadd.f32 0.0, %v3614
  %v3616 = vpop.f32.mrb[0].mxu0
  %3617 = vmatprep.mubr.f32.mxu0 0.0
  %3618 = vmatmul.mubr.f32.gmra.mrb[0].mxu0 %v2774
  %v3619 = vpop.f32.mrb[0].mxu0
  %v3620 = vadd.f32 0.0, %v3619
  %v3621 = vpop.f32.mrb[0].mxu0
  %3622 = vmatprep.mubr.f32.mxu0 0.0
  %3623 = vmatmul.mubr.f32.gmra.mrb[0].mxu0 %v2777
  %v3624 = vpop.f32.mrb[0].mxu0
  %v3625 = vadd.f32 0.0, %v3624
  %v3626 = vpop.f32.mrb[0].mxu0
  %3627 = vmatprep.mubr.f32.mxu0 0.0
  %3628 = vmatmul.mubr.f32.gmra.mrb[0].mxu0 %v2780
  %v3629 = vpop.f32.mrb[0].mxu0
  %v3630 = vadd.f32 0.0, %v3629
  %v3631 = vpop.f32.mrb[0].mxu0
  %3632 = vmatprep.mubr.f32.mxu0 0.0
  %3633 = vmatmul.mubr.f32.gmra.mrb[0].mxu0 %v2783
  %v3634 = vpop.f32.mrb[0].mxu0
  %v3635 = vadd.f32 0.0, %v3634
  %v3636 = vpop.f32.mrb[0].mxu0
  %3637 = vmatprep.mubr.f32.mxu0 0.0
  %3638 = vmatmul.mubr.f32.gmra.mrb[0].mxu0 %v2786
  %v3639 = vpop.f32.mrb[0].mxu0
  %v3640 = vadd.f32 0.0, %v3639
  %v3641 = vpop.f32.mrb[0].mxu0
  %3642 = vmatprep.mubr.f32.mxu0 0.0
  %3643 = vmatmul.mubr.f32.gmra.mrb[0].mxu0 %v2789
  %v3644 = vpop.f32.mrb[0].mxu0
  %v3645 = vadd.f32 0.0, %v3644
  %v3646 = vpop.f32.mrb[0].mxu0
  %3647 = vdwg.mxu0
  %v3648 = vadd.s32 %v2937, 256
  %vm3649 = vcmp.ge.s32.totalorder %v3648, %v2947
  %vm3650 = vcmp.ge.s32.totalorder %v3648, %v2948
  %vm3651 = vcmp.ge.s32.totalorder %v3648, %v2949
  %vm3652 = vcmp.ge.s32.totalorder %v3648, %v2950
  %vm3653 = vcmp.ge.s32.totalorder %v3648, %v2951
  %vm3654 = vcmp.ge.s32.totalorder %v3648, %v2952
  %vm3655 = vcmp.ge.s32.totalorder %v3648, %v2953
  %vm3656 = vcmp.ge.s32.totalorder %v3648, %v2954
  %vm3657 = vcmp.lt.s32.totalorder %v3648, %v2963
  %vm3658 = vcmp.lt.s32.totalorder %v3648, %v2964
  %vm3659 = vcmp.lt.s32.totalorder %v3648, %v2965
  %vm3660 = vcmp.lt.s32.totalorder %v3648, %v2966
  %vm3661 = vcmp.lt.s32.totalorder %v3648, %v2967
  %vm3662 = vcmp.lt.s32.totalorder %v3648, %v2968
  %vm3663 = vcmp.lt.s32.totalorder %v3648, %v2969
  %vm3664 = vcmp.lt.s32.totalorder %v3648, %v2970
  %vm3665 = vmand %vm3649, %vm3657
  %vm3666 = vmand %vm3650, %vm3658
  %vm3667 = vmand %vm3651, %vm3659
  %vm3668 = vmand %vm3652, %vm3660
  %vm3669 = vmand %vm3653, %vm3661
  %vm3670 = vmand %vm3654, %vm3662
  %vm3671 = vmand %vm3655, %vm3663
  %vm3672 = vmand %vm3656, %vm3664
  %v3673 = vsel %vm3665, %v3570, 0.0
  %v3674 = vsel %vm3666, %v3575, 0.0
  %v3675 = vsel %vm3667, %v3580, 0.0
  %v3676 = vsel %vm3668, %v3585, 0.0
  %v3677 = vsel %vm3669, %v3590, 0.0
  %v3678 = vsel %vm3670, %v3595, 0.0
  %v3679 = vsel %vm3671, %v3600, 0.0
  %v3680 = vsel %vm3672, %v3605, 0.0
  %v3681 = vsel %vm3665, %v3610, 0.0
  %v3682 = vsel %vm3666, %v3615, 0.0
  %v3683 = vsel %vm3667, %v3620, 0.0
  %v3684 = vsel %vm3668, %v3625, 0.0
  %v3685 = vsel %vm3669, %v3630, 0.0
  %v3686 = vsel %vm3670, %v3635, 0.0
  %v3687 = vsel %vm3671, %v3640, 0.0
  %v3688 = vsel %vm3672, %v3645, 0.0
  %3689 = vmatprep.subr.mxu0 0.0
  %3690 = vmatpush1.msra.mxu0 %v3673
  %3691 = vmatprep.subr.mxu0 0.0
  %3692 = vmatpush1.msra.mxu0 %v3674
  %3693 = vmatprep.subr.mxu0 0.0
  %3694 = vmatpush1.msra.mxu0 %v3675
  %3695 = vmatprep.subr.mxu0 0.0
  %3696 = vmatpush1.msra.mxu0 %v3676
  %3697 = vmatprep.subr.mxu0 0.0
  %3698 = vmatpush1.msra.mxu0 %v3677
  %3699 = vmatprep.subr.mxu0 0.0
  %3700 = vmatpush1.msra.mxu0 %v3678
  %3701 = vmatprep.subr.mxu0 0.0
  %3702 = vmatpush1.msra.mxu0 %v3679
  %3703 = vmatprep.subr.mxu0 0.0
  %3704 = vmatpush1.msra.mxu0 %v3680
  %3705 = vmatprep.subr.mxu0 0.0
  %3706 = vmatpush1.msra.mxu0 %v3681
  %3707 = vmatprep.subr.mxu0 0.0
  %3708 = vmatpush1.msra.mxu0 %v3682
  %3709 = vmatprep.subr.mxu0 0.0
  %3710 = vmatpush1.msra.mxu0 %v3683
  %3711 = vmatprep.subr.mxu0 0.0
  %3712 = vmatpush1.msra.mxu0 %v3684
  %3713 = vmatprep.subr.mxu0 0.0
  %3714 = vmatpush1.msra.mxu0 %v3685
  %3715 = vmatprep.subr.mxu0 0.0
  %3716 = vmatpush1.msra.mxu0 %v3686
  %3717 = vmatprep.subr.mxu0 0.0
  %3718 = vmatpush1.msra.mxu0 %v3687
  %3719 = vmatprep.subr.mxu0 0.0
  %3720 = vmatpush1.msra.mxu0 %v3688
  %3721 = vmatprep.subr.mxu0 0.0
  %3722 = vmatpush1.msra.mxu0 0.0
  %3723 = vmatprep.subr.mxu0 0.0
  %3724 = vmatpush1.msra.mxu0 0.0
  %3725 = vmatprep.subr.mxu0 0.0
  %3726 = vmatpush1.msra.mxu0 0.0
  %3727 = vmatprep.subr.mxu0 0.0
  %3728 = vmatpush1.msra.mxu0 0.0
  %3729 = vmatprep.subr.mxu0 0.0
  %3730 = vmatpush1.msra.mxu0 0.0
  %3731 = vmatprep.subr.mxu0 0.0
  %3732 = vmatpush1.msra.mxu0 0.0
  %3733 = vmatprep.subr.mxu0 0.0
  %3734 = vmatpush1.msra.mxu0 0.0
  %3735 = vmatprep.subr.mxu0 0.0
  %3736 = vmatpush1.msra.mxu0 0.0
  %3737 = vmatprep.subr.mxu0 0.0
  %3738 = vmatpush1.msra.mxu0 0.0
  %3739 = vmatprep.subr.mxu0 0.0
  %3740 = vmatpush1.msra.mxu0 0.0
  %3741 = vmatprep.subr.mxu0 0.0
  %3742 = vmatpush1.msra.mxu0 0.0
  %3743 = vmatprep.subr.mxu0 0.0
  %3744 = vmatpush1.msra.mxu0 0.0
  %3745 = vmatprep.subr.mxu0 0.0
  %3746 = vmatpush1.msra.mxu0 0.0
  %3747 = vmatprep.subr.mxu0 0.0
  %3748 = vmatpush1.msra.mxu0 0.0
  %3749 = vmatprep.subr.mxu0 0.0
  %3750 = vmatpush1.msra.mxu0 0.0
  %3751 = vmatprep.subr.mxu0 0.0
  %3752 = vmatpush1.msra.mxu0 0.0
  %3753 = vmatprep.mubr.f32.mxu0 0.0
  %3754 = vmatmul.mubr.f32.gmra.mrb[0].mxu0 %v2740
  %v3755 = vpop.f32.mrb[0].mxu0
  %v3756 = vadd.f32 0.0, %v3755
  %v3757 = vpop.f32.mrb[0].mxu0
  %3758 = vdwg.mxu0
  %v3759 = vld [vmem:[%s10 + $0x100] sm:$0xff]
  %v3760 = vld [vmem:[%s10 + $0x108] sm:$0xff]
  %v3761 = vld [vmem:[%s10 + $0x110] sm:$0xff]
  %v3762 = vld [vmem:[%s10 + $0x118] sm:$0xff]
  %v3763 = vld [vmem:[%s10 + $0x120] sm:$0xff]
  %v3764 = vld [vmem:[%s10 + $0x128] sm:$0xff]
  %v3765 = vld [vmem:[%s10 + $0x130] sm:$0xff]
  %v3766 = vld [vmem:[%s10 + $0x138] sm:$0xff]
  %v3767 = vld [vmem:[%s10 + $0x140] sm:$0xff]
  %v3768 = vld [vmem:[%s10 + $0x148] sm:$0xff]
  %v3769 = vld [vmem:[%s10 + $0x150] sm:$0xff]
  %v3770 = vld [vmem:[%s10 + $0x158] sm:$0xff]
  %v3771 = vld [vmem:[%s10 + $0x160] sm:$0xff]
  %v3772 = vld [vmem:[%s10 + $0x168] sm:$0xff]
  %v3773 = vld [vmem:[%s10 + $0x170] sm:$0xff]
  %v3774 = vld [vmem:[%s10 + $0x178] sm:$0xff]
  %3775 = vmatprep.subr.mxu0 0.0
  %3776 = vmatpush1.msra.mxu0 %v3759
  %3777 = vmatprep.subr.mxu0 0.0
  %3778 = vmatpush1.msra.mxu0 %v3760
  %3779 = vmatprep.subr.mxu0 0.0
  %3780 = vmatpush1.msra.mxu0 %v3761
  %3781 = vmatprep.subr.mxu0 0.0
  %3782 = vmatpush1.msra.mxu0 %v3762
  %3783 = vmatprep.subr.mxu0 0.0
  %3784 = vmatpush1.msra.mxu0 %v3763
  %3785 = vmatprep.subr.mxu0 0.0
  %3786 = vmatpush1.msra.mxu0 %v3764
  %3787 = vmatprep.subr.mxu0 0.0
  %3788 = vmatpush1.msra.mxu0 %v3765
  %3789 = vmatprep.subr.mxu0 0.0
  %3790 = vmatpush1.msra.mxu0 %v3766
  %3791 = vmatprep.subr.mxu0 0.0
  %3792 = vmatpush1.msra.mxu0 %v3767
  %3793 = vmatprep.subr.mxu0 0.0
  %3794 = vmatpush1.msra.mxu0 %v3768
  %3795 = vmatprep.subr.mxu0 0.0
  %3796 = vmatpush1.msra.mxu0 %v3769
  %3797 = vmatprep.subr.mxu0 0.0
  %3798 = vmatpush1.msra.mxu0 %v3770
  %3799 = vmatprep.subr.mxu0 0.0
  %3800 = vmatpush1.msra.mxu0 %v3771
  %3801 = vmatprep.subr.mxu0 0.0
  %3802 = vmatpush1.msra.mxu0 %v3772
  %3803 = vmatprep.subr.mxu0 0.0
  %3804 = vmatpush1.msra.mxu0 %v3773
  %3805 = vmatprep.subr.mxu0 0.0
  %3806 = vmatpush1.msra.mxu0 %v3774
  %3807 = vmatprep.subr.mxu0 0.0
  %3808 = vmatpush1.msra.mxu0 0.0
  %3809 = vmatprep.subr.mxu0 0.0
  %3810 = vmatpush1.msra.mxu0 0.0
  %3811 = vmatprep.subr.mxu0 0.0
  %3812 = vmatpush1.msra.mxu0 0.0
  %3813 = vmatprep.subr.mxu0 0.0
  %3814 = vmatpush1.msra.mxu0 0.0
  %3815 = vmatprep.subr.mxu0 0.0
  %3816 = vmatpush1.msra.mxu0 0.0
  %3817 = vmatprep.subr.mxu0 0.0
  %3818 = vmatpush1.msra.mxu0 0.0
  %3819 = vmatprep.subr.mxu0 0.0
  %3820 = vmatpush1.msra.mxu0 0.0
  %3821 = vmatprep.subr.mxu0 0.0
  %3822 = vmatpush1.msra.mxu0 0.0
  %3823 = vmatprep.subr.mxu0 0.0
  %3824 = vmatpush1.msra.mxu0 0.0
  %3825 = vmatprep.subr.mxu0 0.0
  %3826 = vmatpush1.msra.mxu0 0.0
  %3827 = vmatprep.subr.mxu0 0.0
  %3828 = vmatpush1.msra.mxu0 0.0
  %3829 = vmatprep.subr.mxu0 0.0
  %3830 = vmatpush1.msra.mxu0 0.0
  %3831 = vmatprep.subr.mxu0 0.0
  %3832 = vmatpush1.msra.mxu0 0.0
  %3833 = vmatprep.subr.mxu0 0.0
  %3834 = vmatpush1.msra.mxu0 0.0
  %3835 = vmatprep.subr.mxu0 0.0
  %3836 = vmatpush1.msra.mxu0 0.0
  %3837 = vmatprep.subr.mxu0 0.0
  %3838 = vmatpush1.msra.mxu0 0.0
  %3839 = vmatprep.mubr.f32.mxu0 0.0
  %3840 = vmatmul.mubr.f32.gmra.mrb[0].mxu0 %v3756
  %v3841 = vpop.f32.mrb[0].mxu0
  %v3842 = vadd.f32 0.0, %v3841
  %v3843 = vpop.f32.mrb[0].mxu0
  %3844 = vdwg.mxu0
  %v3845 = vadd.f32 %v3499, %v3842
  %v3846 = vld [vmem:[%s12 + $0x18] sm:$0xff]
  %3847 = vmatprep.subr.mxu0 0.0
  %3848 = vmatpush1.msra.mxu0 %v3846
  %3849 = vmatprep.subr.mxu0 0.0
  %3850 = vmatpush1.msra.mxu0 0.0
  %3851 = vmatprep.subr.mxu0 0.0
  %3852 = vmatpush1.msra.mxu0 0.0
  %3853 = vmatprep.subr.mxu0 0.0
  %3854 = vmatpush1.msra.mxu0 0.0
  %3855 = vmatprep.subr.mxu0 0.0
  %3856 = vmatpush1.msra.mxu0 0.0
  %3857 = vmatprep.subr.mxu0 0.0
  %3858 = vmatpush1.msra.mxu0 0.0
  %3859 = vmatprep.subr.mxu0 0.0
  %3860 = vmatpush1.msra.mxu0 0.0
  %3861 = vmatprep.subr.mxu0 0.0
  %3862 = vmatpush1.msra.mxu0 0.0
  %3863 = vmatprep.subr.mxu0 0.0
  %3864 = vmatpush1.msra.mxu0 0.0
  %3865 = vmatprep.subr.mxu0 0.0
  %3866 = vmatpush1.msra.mxu0 0.0
  %3867 = vmatprep.subr.mxu0 0.0
  %3868 = vmatpush1.msra.mxu0 0.0
  %3869 = vmatprep.subr.mxu0 0.0
  %3870 = vmatpush1.msra.mxu0 0.0
  %3871 = vmatprep.subr.mxu0 0.0
  %3872 = vmatpush1.msra.mxu0 0.0
  %3873 = vmatprep.subr.mxu0 0.0
  %3874 = vmatpush1.msra.mxu0 0.0
  %3875 = vmatprep.subr.mxu0 0.0
  %3876 = vmatpush1.msra.mxu0 0.0
  %3877 = vmatprep.subr.mxu0 0.0
  %3878 = vmatpush1.msra.mxu0 0.0
  %3879 = vmatprep.subr.mxu0 0.0
  %3880 = vmatpush1.msra.mxu0 0.0
  %3881 = vmatprep.subr.mxu0 0.0
  %3882 = vmatpush1.msra.mxu0 0.0
  %3883 = vmatprep.subr.mxu0 0.0
  %3884 = vmatpush1.msra.mxu0 0.0
  %3885 = vmatprep.subr.mxu0 0.0
  %3886 = vmatpush1.msra.mxu0 0.0
  %3887 = vmatprep.subr.mxu0 0.0
  %3888 = vmatpush1.msra.mxu0 0.0
  %3889 = vmatprep.subr.mxu0 0.0
  %3890 = vmatpush1.msra.mxu0 0.0
  %3891 = vmatprep.subr.mxu0 0.0
  %3892 = vmatpush1.msra.mxu0 0.0
  %3893 = vmatprep.subr.mxu0 0.0
  %3894 = vmatpush1.msra.mxu0 0.0
  %3895 = vmatprep.subr.mxu0 0.0
  %3896 = vmatpush1.msra.mxu0 0.0
  %3897 = vmatprep.subr.mxu0 0.0
  %3898 = vmatpush1.msra.mxu0 0.0
  %3899 = vmatprep.subr.mxu0 0.0
  %3900 = vmatpush1.msra.mxu0 0.0
  %3901 = vmatprep.subr.mxu0 0.0
  %3902 = vmatpush1.msra.mxu0 0.0
  %3903 = vmatprep.subr.mxu0 0.0
  %3904 = vmatpush1.msra.mxu0 0.0
  %3905 = vmatprep.subr.mxu0 0.0
  %3906 = vmatpush1.msra.mxu0 0.0
  %3907 = vmatprep.subr.mxu0 0.0
  %3908 = vmatpush1.msra.mxu0 0.0
  %3909 = vmatprep.subr.mxu0 0.0
  %3910 = vmatpush1.msra.mxu0 0.0
  %3911 = vmatprep.mubr.f32.mxu0 0.0
  %3912 = vmatmul.mubr.f32.gmra.mrb[0].mxu0 %v2744
  %v3913 = vpop.f32.mrb[0].mxu0
  %v3914 = vadd.f32 0.0, %v3913
  %v3915 = vpop.f32.mrb[0].mxu0
  %3916 = vmatprep.mubr.f32.mxu0 0.0
  %3917 = vmatmul.mubr.f32.gmra.mrb[0].mxu0 %v2747
  %v3918 = vpop.f32.mrb[0].mxu0
  %v3919 = vadd.f32 0.0, %v3918
  %v3920 = vpop.f32.mrb[0].mxu0
  %3921 = vmatprep.mubr.f32.mxu0 0.0
  %3922 = vmatmul.mubr.f32.gmra.mrb[0].mxu0 %v2750
  %v3923 = vpop.f32.mrb[0].mxu0
  %v3924 = vadd.f32 0.0, %v3923
  %v3925 = vpop.f32.mrb[0].mxu0
  %3926 = vmatprep.mubr.f32.mxu0 0.0
  %3927 = vmatmul.mubr.f32.gmra.mrb[0].mxu0 %v2753
  %v3928 = vpop.f32.mrb[0].mxu0
  %v3929 = vadd.f32 0.0, %v3928
  %v3930 = vpop.f32.mrb[0].mxu0
  %3931 = vmatprep.mubr.f32.mxu0 0.0
  %3932 = vmatmul.mubr.f32.gmra.mrb[0].mxu0 %v2756
  %v3933 = vpop.f32.mrb[0].mxu0
  %v3934 = vadd.f32 0.0, %v3933
  %v3935 = vpop.f32.mrb[0].mxu0
  %3936 = vmatprep.mubr.f32.mxu0 0.0
  %3937 = vmatmul.mubr.f32.gmra.mrb[0].mxu0 %v2759
  %v3938 = vpop.f32.mrb[0].mxu0
  %v3939 = vadd.f32 0.0, %v3938
  %v3940 = vpop.f32.mrb[0].mxu0
  %3941 = vmatprep.mubr.f32.mxu0 0.0
  %3942 = vmatmul.mubr.f32.gmra.mrb[0].mxu0 %v2762
  %v3943 = vpop.f32.mrb[0].mxu0
  %v3944 = vadd.f32 0.0, %v3943
  %v3945 = vpop.f32.mrb[0].mxu0
  %3946 = vmatprep.mubr.f32.mxu0 0.0
  %3947 = vmatmul.mubr.f32.gmra.mrb[0].mxu0 %v2765
  %v3948 = vpop.f32.mrb[0].mxu0
  %v3949 = vadd.f32 0.0, %v3948
  %v3950 = vpop.f32.mrb[0].mxu0
  %3951 = vmatprep.mubr.f32.mxu0 0.0
  %3952 = vmatmul.mubr.f32.gmra.mrb[0].mxu0 %v2768
  %v3953 = vpop.f32.mrb[0].mxu0
  %v3954 = vadd.f32 0.0, %v3953
  %v3955 = vpop.f32.mrb[0].mxu0
  %3956 = vmatprep.mubr.f32.mxu0 0.0
  %3957 = vmatmul.mubr.f32.gmra.mrb[0].mxu0 %v2771
  %v3958 = vpop.f32.mrb[0].mxu0
  %v3959 = vadd.f32 0.0, %v3958
  %v3960 = vpop.f32.mrb[0].mxu0
  %3961 = vmatprep.mubr.f32.mxu0 0.0
  %3962 = vmatmul.mubr.f32.gmra.mrb[0].mxu0 %v2774
  %v3963 = vpop.f32.mrb[0].mxu0
  %v3964 = vadd.f32 0.0, %v3963
  %v3965 = vpop.f32.mrb[0].mxu0
  %3966 = vmatprep.mubr.f32.mxu0 0.0
  %3967 = vmatmul.mubr.f32.gmra.mrb[0].mxu0 %v2777
  %v3968 = vpop.f32.mrb[0].mxu0
  %v3969 = vadd.f32 0.0, %v3968
  %v3970 = vpop.f32.mrb[0].mxu0
  %3971 = vmatprep.mubr.f32.mxu0 0.0
  %3972 = vmatmul.mubr.f32.gmra.mrb[0].mxu0 %v2780
  %v3973 = vpop.f32.mrb[0].mxu0
  %v3974 = vadd.f32 0.0, %v3973
  %v3975 = vpop.f32.mrb[0].mxu0
  %3976 = vmatprep.mubr.f32.mxu0 0.0
  %3977 = vmatmul.mubr.f32.gmra.mrb[0].mxu0 %v2783
  %v3978 = vpop.f32.mrb[0].mxu0
  %v3979 = vadd.f32 0.0, %v3978
  %v3980 = vpop.f32.mrb[0].mxu0
  %3981 = vmatprep.mubr.f32.mxu0 0.0
  %3982 = vmatmul.mubr.f32.gmra.mrb[0].mxu0 %v2786
  %v3983 = vpop.f32.mrb[0].mxu0
  %v3984 = vadd.f32 0.0, %v3983
  %v3985 = vpop.f32.mrb[0].mxu0
  %3986 = vmatprep.mubr.f32.mxu0 0.0
  %3987 = vmatmul.mubr.f32.gmra.mrb[0].mxu0 %v2789
  %v3988 = vpop.f32.mrb[0].mxu0
  %v3989 = vadd.f32 0.0, %v3988
  %v3990 = vpop.f32.mrb[0].mxu0
  %3991 = vdwg.mxu0
  %v3992 = vadd.s32 %v2937, 384
  %vm3993 = vcmp.ge.s32.totalorder %v3992, %v2947
  %vm3994 = vcmp.ge.s32.totalorder %v3992, %v2948
  %vm3995 = vcmp.ge.s32.totalorder %v3992, %v2949
  %vm3996 = vcmp.ge.s32.totalorder %v3992, %v2950
  %vm3997 = vcmp.ge.s32.totalorder %v3992, %v2951
  %vm3998 = vcmp.ge.s32.totalorder %v3992, %v2952
  %vm3999 = vcmp.ge.s32.totalorder %v3992, %v2953
  %vm4000 = vcmp.ge.s32.totalorder %v3992, %v2954
  %vm4001 = vcmp.lt.s32.totalorder %v3992, %v2963
  %vm4002 = vcmp.lt.s32.totalorder %v3992, %v2964
  %vm4003 = vcmp.lt.s32.totalorder %v3992, %v2965
  %vm4004 = vcmp.lt.s32.totalorder %v3992, %v2966
  %vm4005 = vcmp.lt.s32.totalorder %v3992, %v2967
  %vm4006 = vcmp.lt.s32.totalorder %v3992, %v2968
  %vm4007 = vcmp.lt.s32.totalorder %v3992, %v2969
  %vm4008 = vcmp.lt.s32.totalorder %v3992, %v2970
  %vm4009 = vmand %vm3993, %vm4001
  %vm4010 = vmand %vm3994, %vm4002
  %vm4011 = vmand %vm3995, %vm4003
  %vm4012 = vmand %vm3996, %vm4004
  %vm4013 = vmand %vm3997, %vm4005
  %vm4014 = vmand %vm3998, %vm4006
  %vm4015 = vmand %vm3999, %vm4007
  %vm4016 = vmand %vm4000, %vm4008
  %v4017 = vsel %vm4009, %v3914, 0.0
  %v4018 = vsel %vm4010, %v3919, 0.0
  %v4019 = vsel %vm4011, %v3924, 0.0
  %v4020 = vsel %vm4012, %v3929, 0.0
  %v4021 = vsel %vm4013, %v3934, 0.0
  %v4022 = vsel %vm4014, %v3939, 0.0
  %v4023 = vsel %vm4015, %v3944, 0.0
  %v4024 = vsel %vm4016, %v3949, 0.0
  %v4025 = vsel %vm4009, %v3954, 0.0
  %v4026 = vsel %vm4010, %v3959, 0.0
  %v4027 = vsel %vm4011, %v3964, 0.0
  %v4028 = vsel %vm4012, %v3969, 0.0
  %v4029 = vsel %vm4013, %v3974, 0.0
  %v4030 = vsel %vm4014, %v3979, 0.0
  %v4031 = vsel %vm4015, %v3984, 0.0
  %v4032 = vsel %vm4016, %v3989, 0.0
  %4033 = vmatprep.subr.mxu0 0.0
  %4034 = vmatpush1.msra.mxu0 %v4017
  %4035 = vmatprep.subr.mxu0 0.0
  %4036 = vmatpush1.msra.mxu0 %v4018
  %4037 = vmatprep.subr.mxu0 0.0
  %4038 = vmatpush1.msra.mxu0 %v4019
  %4039 = vmatprep.subr.mxu0 0.0
  %4040 = vmatpush1.msra.mxu0 %v4020
  %4041 = vmatprep.subr.mxu0 0.0
  %4042 = vmatpush1.msra.mxu0 %v4021
  %4043 = vmatprep.subr.mxu0 0.0
  %4044 = vmatpush1.msra.mxu0 %v4022
  %4045 = vmatprep.subr.mxu0 0.0
  %4046 = vmatpush1.msra.mxu0 %v4023
  %4047 = vmatprep.subr.mxu0 0.0
  %4048 = vmatpush1.msra.mxu0 %v4024
  %4049 = vmatprep.subr.mxu0 0.0
  %4050 = vmatpush1.msra.mxu0 %v4025
  %4051 = vmatprep.subr.mxu0 0.0
  %4052 = vmatpush1.msra.mxu0 %v4026
  %4053 = vmatprep.subr.mxu0 0.0
  %4054 = vmatpush1.msra.mxu0 %v4027
  %4055 = vmatprep.subr.mxu0 0.0
  %4056 = vmatpush1.msra.mxu0 %v4028
  %4057 = vmatprep.subr.mxu0 0.0
  %4058 = vmatpush1.msra.mxu0 %v4029
  %4059 = vmatprep.subr.mxu0 0.0
  %4060 = vmatpush1.msra.mxu0 %v4030
  %4061 = vmatprep.subr.mxu0 0.0
  %4062 = vmatpush1.msra.mxu0 %v4031
  %4063 = vmatprep.subr.mxu0 0.0
  %4064 = vmatpush1.msra.mxu0 %v4032
  %4065 = vmatprep.subr.mxu0 0.0
  %4066 = vmatpush1.msra.mxu0 0.0
  %4067 = vmatprep.subr.mxu0 0.0
  %4068 = vmatpush1.msra.mxu0 0.0
  %4069 = vmatprep.subr.mxu0 0.0
  %4070 = vmatpush1.msra.mxu0 0.0
  %4071 = vmatprep.subr.mxu0 0.0
  %4072 = vmatpush1.msra.mxu0 0.0
  %4073 = vmatprep.subr.mxu0 0.0
  %4074 = vmatpush1.msra.mxu0 0.0
  %4075 = vmatprep.subr.mxu0 0.0
  %4076 = vmatpush1.msra.mxu0 0.0
  %4077 = vmatprep.subr.mxu0 0.0
  %4078 = vmatpush1.msra.mxu0 0.0
  %4079 = vmatprep.subr.mxu0 0.0
  %4080 = vmatpush1.msra.mxu0 0.0
  %4081 = vmatprep.subr.mxu0 0.0
  %4082 = vmatpush1.msra.mxu0 0.0
  %4083 = vmatprep.subr.mxu0 0.0
  %4084 = vmatpush1.msra.mxu0 0.0
  %4085 = vmatprep.subr.mxu0 0.0
  %4086 = vmatpush1.msra.mxu0 0.0
  %4087 = vmatprep.subr.mxu0 0.0
  %4088 = vmatpush1.msra.mxu0 0.0
  %4089 = vmatprep.subr.mxu0 0.0
  %4090 = vmatpush1.msra.mxu0 0.0
  %4091 = vmatprep.subr.mxu0 0.0
  %4092 = vmatpush1.msra.mxu0 0.0
  %4093 = vmatprep.subr.mxu0 0.0
  %4094 = vmatpush1.msra.mxu0 0.0
  %4095 = vmatprep.subr.mxu0 0.0
  %4096 = vmatpush1.msra.mxu0 0.0
  %4097 = vmatprep.mubr.f32.mxu0 0.0
  %4098 = vmatmul.mubr.f32.gmra.mrb[0].mxu0 %v2740
  %v4099 = vpop.f32.mrb[0].mxu0
  %v4100 = vadd.f32 0.0, %v4099
  %v4101 = vpop.f32.mrb[0].mxu0
  %4102 = vdwg.mxu0
  %v4103 = vld [vmem:[%s10 + $0x180] sm:$0xff]
  %v4104 = vld [vmem:[%s10 + $0x188] sm:$0xff]
  %v4105 = vld [vmem:[%s10 + $0x190] sm:$0xff]
  %v4106 = vld [vmem:[%s10 + $0x198] sm:$0xff]
  %v4107 = vld [vmem:[%s10 + $0x1a0] sm:$0xff]
  %v4108 = vld [vmem:[%s10 + $0x1a8] sm:$0xff]
  %v4109 = vld [vmem:[%s10 + $0x1b0] sm:$0xff]
  %v4110 = vld [vmem:[%s10 + $0x1b8] sm:$0xff]
  %v4111 = vld [vmem:[%s10 + $0x1c0] sm:$0xff]
  %v4112 = vld [vmem:[%s10 + $0x1c8] sm:$0xff]
  %v4113 = vld [vmem:[%s10 + $0x1d0] sm:$0xff]
  %v4114 = vld [vmem:[%s10 + $0x1d8] sm:$0xff]
  %v4115 = vld [vmem:[%s10 + $0x1e0] sm:$0xff]
  %v4116 = vld [vmem:[%s10 + $0x1e8] sm:$0xff]
  %v4117 = vld [vmem:[%s10 + $0x1f0] sm:$0xff]
  %v4118 = vld [vmem:[%s10 + $0x1f8] sm:$0xff]
  %4119 = vmatprep.subr.mxu0 0.0
  %4120 = vmatpush1.msra.mxu0 %v4103
  %4121 = vmatprep.subr.mxu0 0.0
  %4122 = vmatpush1.msra.mxu0 %v4104
  %4123 = vmatprep.subr.mxu0 0.0
  %4124 = vmatpush1.msra.mxu0 %v4105
  %4125 = vmatprep.subr.mxu0 0.0
  %4126 = vmatpush1.msra.mxu0 %v4106
  %4127 = vmatprep.subr.mxu0 0.0
  %4128 = vmatpush1.msra.mxu0 %v4107
  %4129 = vmatprep.subr.mxu0 0.0
  %4130 = vmatpush1.msra.mxu0 %v4108
  %4131 = vmatprep.subr.mxu0 0.0
  %4132 = vmatpush1.msra.mxu0 %v4109
  %4133 = vmatprep.subr.mxu0 0.0
  %4134 = vmatpush1.msra.mxu0 %v4110
  %4135 = vmatprep.subr.mxu0 0.0
  %4136 = vmatpush1.msra.mxu0 %v4111
  %4137 = vmatprep.subr.mxu0 0.0
  %4138 = vmatpush1.msra.mxu0 %v4112
  %4139 = vmatprep.subr.mxu0 0.0
  %4140 = vmatpush1.msra.mxu0 %v4113
  %4141 = vmatprep.subr.mxu0 0.0
  %4142 = vmatpush1.msra.mxu0 %v4114
  %4143 = vmatprep.subr.mxu0 0.0
  %4144 = vmatpush1.msra.mxu0 %v4115
  %4145 = vmatprep.subr.mxu0 0.0
  %4146 = vmatpush1.msra.mxu0 %v4116
  %4147 = vmatprep.subr.mxu0 0.0
  %4148 = vmatpush1.msra.mxu0 %v4117
  %4149 = vmatprep.subr.mxu0 0.0
  %4150 = vmatpush1.msra.mxu0 %v4118
  %4151 = vmatprep.subr.mxu0 0.0
  %4152 = vmatpush1.msra.mxu0 0.0
  %4153 = vmatprep.subr.mxu0 0.0
  %4154 = vmatpush1.msra.mxu0 0.0
  %4155 = vmatprep.subr.mxu0 0.0
  %4156 = vmatpush1.msra.mxu0 0.0
  %4157 = vmatprep.subr.mxu0 0.0
  %4158 = vmatpush1.msra.mxu0 0.0
  %4159 = vmatprep.subr.mxu0 0.0
  %4160 = vmatpush1.msra.mxu0 0.0
  %4161 = vmatprep.subr.mxu0 0.0
  %4162 = vmatpush1.msra.mxu0 0.0
  %4163 = vmatprep.subr.mxu0 0.0
  %4164 = vmatpush1.msra.mxu0 0.0
  %4165 = vmatprep.subr.mxu0 0.0
  %4166 = vmatpush1.msra.mxu0 0.0
  %4167 = vmatprep.subr.mxu0 0.0
  %4168 = vmatpush1.msra.mxu0 0.0
  %4169 = vmatprep.subr.mxu0 0.0
  %4170 = vmatpush1.msra.mxu0 0.0
  %4171 = vmatprep.subr.mxu0 0.0
  %4172 = vmatpush1.msra.mxu0 0.0
  %4173 = vmatprep.subr.mxu0 0.0
  %4174 = vmatpush1.msra.mxu0 0.0
  %4175 = vmatprep.subr.mxu0 0.0
  %4176 = vmatpush1.msra.mxu0 0.0
  %4177 = vmatprep.subr.mxu0 0.0
  %4178 = vmatpush1.msra.mxu0 0.0
  %4179 = vmatprep.subr.mxu0 0.0
  %4180 = vmatpush1.msra.mxu0 0.0
  %4181 = vmatprep.subr.mxu0 0.0
  %4182 = vmatpush1.msra.mxu0 0.0
  %4183 = vmatprep.mubr.f32.mxu0 0.0
  %4184 = vmatmul.mubr.f32.gmra.mrb[0].mxu0 %v4100
  %v4185 = vpop.f32.mrb[0].mxu0
  %v4186 = vadd.f32 0.0, %v4185
  %v4187 = vpop.f32.mrb[0].mxu0
  %4188 = vdwg.mxu0
  %v4189 = vadd.f32 %v3845, %v4186
  %v4190 = vld [vmem:[%s11] sm:$0x1]
  %v4192 = vlaneseq
  %v4193 = vshrl.u32 %v4192, 7
  %v4194 = vsub.s32 0, %v4193
  %v4195 = vrot.slane %v4190, %v4194
  %v4197 = vadd.f32 %v4189, %v4195
  %vm4198 = vcmask 517120
  %v4199 = vsel %vm4198, %v4197, -inf
  %4200 = vmax.xlane.f32.xlu0 %v4199
  %v4201 = vpop.xlane.xlu0 %4200
  %v4202 = vsub.f32 %v4197, %v4201
  %v4203 = vmul.f32 %v4202, 1.442695
  %v4204 = vpow.pop %v4203
  %v4205 = vsel %vm4198, %v4204, 0.0
  %4206 = vadd.xlane.f32.xlu0 %v4205
  %v4207 = vpop.xlane.xlu0 %4206
  %v4208 = vlog2.pop %v4207
  %v4209 = vmul.f32 %v4208, 0.6931472
  %v4210 = vadd.f32 %v4201, %v4209
  %v4211 = vsub.f32 %v4197, %v4210
  %4213 = vrot.lane.b32.xlu0 %v4211, 64
  %v4214 = vpop.permute.xlu0 %4213
  %v4216 = vsel %vm2484, %v4197, %v4214
  %4217 = vst [vmem:[%s14] sm:$0x3] %v4216
  // Predicated region
  $region58: #{forward.1} parent=0 // pred_check
    _
  $region59: #{forward.1} parent=0 // pred_check_branch
    %4219 = sbr.rel (0) target = $region61
  $region60: #{forward.1} parent=0 // pred_region
    _
  $region61: #{forward.1} parent=0 // pred_fallthru
    _
  // Predicated region
  $region62: #{forward.1} parent=0 // pred_check
    _
  $region63: #{forward.1} parent=0 // pred_check_branch
    %4221 = sbr.rel (0) target = $region65
  $region64: #{forward.1} parent=0 // pred_region
    _
  $region65: #{forward.1} parent=0 // pred_fallthru
    _

</llo_original>
